<compile_context>
chip_gen: v6e
topology: v6e:2x2x1
jax: 0.10.0
libtpu: 0.0.40
codegen_flags: <defaults>
</compile_context>

<pallas_src>
import functools

import jax
import jax.numpy as jnp
from jax import lax
from jax.experimental import pallas as pl
from jax.experimental.pallas import tpu as pltpu

BN_EPS = 1e-5


def active_taps(K, mask_type="B"):
    """Spatial taps where the PixelCNN mask is 1 (matches the PyTorch mask)."""
    U, V = K // 2, K // 2
    taps = []
    for ky in range(K):
        for kx in range(K):
            if ky < U or (ky == U and kx < V + (mask_type == "B")):
                taps.append((ky, kx))
    return tuple(taps)


def make_mask_b(C_out, C_in, K):
    """Type-'B' PixelCNN mask in OIHW layout (reference check only)."""
    U, V = K // 2, K // 2
    mask = jnp.zeros((C_out, C_in, K, K), jnp.float32)
    mask = mask.at[:, :, :U, :].set(1.0)
    mask = mask.at[:, :, U, :V + 1].set(1.0)
    return mask


@functools.lru_cache(maxsize=1)
def _vmem_capacity_bytes():
    try:
        return int(pltpu.get_tpu_info().vmem_capacity_bytes)
    except Exception:  # pragma: no cover - conservative fallback
        return 128 * 1024 * 1024


def _banded_tap_weights(w_oihw, W, P, taps):
    """Per output-row tap ky: (W*C, W*C) block-banded matrix.

    A_ky[(w_out + kx - P)*C + ci, w_out*C + co] = weight[co, ci, ky, kx] for the
    active (masked-in) kx taps; out-of-range w_in is simply omitted, which IS
    the zero padding along W.  Selecting only active taps IS the 'B' mask.
    """
    C_out, C_in, K, _ = w_oihw.shape
    w_hwio = jnp.transpose(w_oihw, (2, 3, 1, 0))            # (K, K, C_in, C_out)
    mats = []
    for ky in range(P + 1):
        a = jnp.zeros((W * C_in, W * C_out), w_oihw.dtype)
        for kx in range(K):
            if (ky, kx) in taps:
                band = jnp.eye(W, k=P - kx, dtype=w_oihw.dtype)  # w_in = w_out + kx - P
                a = a + jnp.kron(band, w_hwio[ky, kx])
        mats.append(a)
    return jnp.stack(mats, axis=0)                           # (P+1, W*C, W*C)


def _row_shift_matrices(N, H, P):
    """(P+1, N*H, N*H) 0/1 matrices: per-image shift-down by s=P-ky rows, zero top."""
    NH = N * H
    ii = jnp.arange(NH)[:, None]
    jj = jnp.arange(NH)[None, :]
    mats = []
    for ky in range(P + 1):
        s = P - ky
        mats.append(jnp.where((ii - jj == s) & (ii % H >= s), 1.0, 0.0))
    return jnp.stack(mats, axis=0).astype(jnp.float32)


def _resblock_kernel(N, H, P, x_ref, shift_ref, a1_ref, a2_ref, tile_ref,
                     tile_t_ref, gamma_ref, beta_ref, o_ref):
    """Whole residual block, fully lane-dense (N*H rows, W*C lanes), one call.

    x_ref     : (N*H, W*C) f32  lane-dense input (also the residual)
    shift_ref : (P+1, N*H, N*H) per-image row-shift matrices (compute dtype)
    a1_ref    : (P+1, W*C, W*C) conv1 banded per-ky weights (compute dtype)
    a2_ref    : (P+1, W*C, W*C) conv2 banded per-ky weights (compute dtype)
    tile_ref  : (W*C, C) f32    channel-reduction matrix (lane group -> channel)
    tile_t_ref: (C, W*C) f32    channel-broadcast matrix (channel -> lane group)
    gamma_ref : (1, C) f32      BN scale
    beta_ref  : (1, C) f32      BN shift
    o_ref     : (N*H, W*C) f32  lane-dense output
    """
    NH, WC = x_ref.shape
    C = tile_ref.shape[1]
    M = NH * (WC // C)                      # number of BN samples = N*H*W
    f32 = jnp.float32
    cdt = a1_ref.dtype                      # matmul storage dtype (f32 or bf16)

    x_f32 = x_ref[...]                      # residual path stays f32
    x_c = x_f32.astype(cdt)

    def masked_conv(v, a_ref):
        # sum over active output-row taps ky: per-image row shift (MXU matmul
        # with a 0/1 matrix) then the block-banded lane matmul (MXU, f32 acc).
        acc = jnp.zeros((NH, WC), f32)
        for ky in range(P + 1):
            s = P - ky
            v_s = v if s == 0 else jnp.dot(shift_ref[ky], v)
            acc = acc + jnp.dot(v_s, a_ref[ky], preferred_element_type=f32)
        return acc

    # ---- masked conv #1 ----
    y1 = masked_conv(x_c, a1_ref)                                        # (NH, WC) f32

    # ---- BatchNorm2d (training-mode batch stats, biased var) + ReLU ----
    # Two-pass centered statistics; all reductions / broadcasts on the MXU.
    inv_m = 1.0 / M
    ones8 = jnp.ones((8, NH), f32)
    mean_c = jnp.dot(jnp.dot(ones8, y1, preferred_element_type=f32),
                     tile_ref[...], preferred_element_type=f32)[0:1] * inv_m   # (1, C)
    mean_wc = jnp.dot(mean_c, tile_t_ref[...], preferred_element_type=f32)     # (1, WC)
    centered = y1 - mean_wc
    var_c = jnp.dot(jnp.dot(ones8, centered * centered, preferred_element_type=f32),
                    tile_ref[...], preferred_element_type=f32)[0:1] * inv_m    # (1, C)
    scale_c = gamma_ref[...] * lax.rsqrt(var_c + BN_EPS)                       # (1, C)
    scale_wc = jnp.dot(scale_c, tile_t_ref[...], preferred_element_type=f32)   # (1, WC)
    beta_wc = jnp.dot(beta_ref[...], tile_t_ref[...], preferred_element_type=f32)
    h = jnp.maximum(centered * scale_wc + beta_wc, 0.0)                        # BN + ReLU

    # ---- masked conv #2 ----
    y2 = masked_conv(h.astype(cdt), a2_ref)

    # ---- residual add + ReLU, unmasked lane-dense store ----
    o_ref[...] = jnp.maximum(y2 + x_f32, 0.0).astype(o_ref.dtype)


@functools.partial(jax.jit, static_argnames=("compute_dtype",))
def pixelcnn_resblock(x_nchw, w1_oihw, w2_oihw, gamma, beta,
                      *, compute_dtype=jnp.float32):
    """x_nchw: (N, C, H, W) f32.  Weights in OIHW (PyTorch layout), bias-free."""
    N, C, H, W = x_nchw.shape
    K = w1_oihw.shape[-1]
    P = (K - 1) // 2
    taps = active_taps(K, "B")
    # Mask 'B' never reads rows below the current one; the row-shift / banded
    # construction (and absence of bottom padding) depends on this invariant.
    assert taps and all(ky <= P for ky, _ in taps), "unexpected mask-'B' tap set"

    NH, WC = N * H, W * C

    # Layout glue only: NCHW -> lane-dense (N*H, W*C).  No HBM padding.
    x_ld = jnp.transpose(x_nchw, (0, 2, 3, 1)).reshape(NH, WC).astype(jnp.float32)

    tap_set = set(taps)
    a1 = _banded_tap_weights(w1_oihw, W, P, tap_set).astype(compute_dtype)
    a2 = _banded_tap_weights(w2_oihw, W, P, tap_set).astype(compute_dtype)
    shift_mats = _row_shift_matrices(N, H, P).astype(compute_dtype)

    eye_c = jnp.eye(C, dtype=jnp.float32)
    tile = jnp.tile(eye_c, (W, 1))          # (W*C, C): per-channel reduce on MXU
    tile_t = tile.T                         # (C, W*C): per-channel broadcast on MXU

    # VMEM budget: size from the shapes, cap with headroom below physical VMEM
    # (~48 MiB on v7x's 64 MiB, ~96 MiB on v5e/v6e's 128 MiB).
    cbytes = jnp.dtype(compute_dtype).itemsize
    est = (4 * NH * WC * 4                              # x, y1/h/y2-style f32 temporaries, out
           + cbytes * (2 * (P + 1) * WC * WC            # banded conv weights
                       + (P + 1) * NH * NH              # row-shift matrices
                       + NH * WC)                       # compute-dtype activations
           + 4 * (2 * WC * C + 8 * C + 8 * WC))
    cap = int(0.75 * _vmem_capacity_bytes())
    vmem_limit = int(min(max(4 * est, 32 * 1024 * 1024), cap))

    flops = (2 * 2 * (P + 1) * NH * WC * WC             # two banded convs
             + 2 * 2 * P * NH * NH * WC                 # row-shift matmuls
             + 2 * (2 * 8 * NH * WC + 2 * 8 * WC * C + 3 * C * WC))   # BN reductions/broadcasts
    bytes_accessed = (4 * NH * WC * 2
                      + cbytes * (2 * (P + 1) * WC * WC + (P + 1) * NH * NH)
                      + 4 * (2 * WC * C + 2 * C))

    out_ld = pl.pallas_call(
        functools.partial(_resblock_kernel, N, H, P),
        out_shape=jax.ShapeDtypeStruct((NH, WC), jnp.float32),
        in_specs=[pl.BlockSpec(memory_space=pltpu.MemorySpace.VMEM)] * 8,
        out_specs=pl.BlockSpec(memory_space=pltpu.MemorySpace.VMEM),
        compiler_params=pltpu.CompilerParams(vmem_limit_bytes=vmem_limit),
        cost_estimate=pl.CostEstimate(flops=int(flops), transcendentals=int(C),
                                      bytes_accessed=int(bytes_accessed)),
    )(x_ld, shift_mats, a1, a2, tile, tile_t,
      gamma.reshape(1, C).astype(jnp.float32),
      beta.reshape(1, C).astype(jnp.float32))

    # Layout glue back to NCHW (pure metadata reshape + transpose in XLA).
    return jnp.transpose(out_ld.reshape(N, H, W, C), (0, 3, 1, 2))


def _reference(x_nchw, w1_oihw, w2_oihw, gamma, beta):
    """Plain-JAX reference of the same forward pass (sanity check)."""
    C = x_nchw.shape[1]
    K = w1_oihw.shape[-1]
    mask = make_mask_b(C, C, K)
    dn = ("NCHW", "OIHW", "NCHW")
    y = lax.conv_general_dilated(x_nchw, w1_oihw * mask, (1, 1), "SAME",
                                 dimension_numbers=dn)
    mean = y.mean(axis=(0, 2, 3), keepdims=True)
    var = ((y - mean) ** 2).mean(axis=(0, 2, 3), keepdims=True)
    y = (y - mean) / jnp.sqrt(var + BN_EPS)
    y = y * gamma.reshape(1, C, 1, 1) + beta.reshape(1, C, 1, 1)
    y = jnp.maximum(y, 0.0)
    y = lax.conv_general_dilated(y, w2_oihw * mask, (1, 1), "SAME",
                                 dimension_numbers=dn)
    return jnp.maximum(y + x_nchw, 0.0)


if __name__ == "__main__":
    # small shapes consistent with the module: num_filters channels, odd kernel
    N, C, H, W, K = 2, 32, 16, 16, 3

    key = jax.random.PRNGKey(0)
    kx_, k1, k2 = jax.random.split(key, 3)
    x = jax.random.normal(kx_, (N, C, H, W), jnp.float32)
    # deterministic synthetic weights (PyTorch OIHW layout, bias-free convs)
    w1 = jax.random.normal(k1, (C, C, K, K), jnp.float32) * 0.05
    w2 = jax.random.normal(k2, (C, C, K, K), jnp.float32) * 0.05
    gamma = jnp.ones((C,), jnp.float32)    # BatchNorm2d default init
    beta = jnp.zeros((C,), jnp.float32)

    ref = jax.block_until_ready(_reference(x, w1, w2, gamma, beta))

    # f32 path (tight check)
    out = jax.block_until_ready(pixelcnn_resblock(x, w1, w2, gamma, beta))
    assert out.shape == (N, C, H, W)
    err = float(jnp.max(jnp.abs(out - ref)))
    assert err < 2e-3, f"f32 max abs err {err}"

    # bf16 storage / MXU-native path (f32 accumulation, f32 BN + residual)
    out_bf16 = jax.block_until_ready(
        pixelcnn_resblock(x, w1, w2, gamma, beta, compute_dtype=jnp.bfloat16))
    err_bf16 = float(jnp.max(jnp.abs(out_bf16 - ref)))
    assert err_bf16 < 1e-1, f"bf16 max abs err {err_bf16}"

    print("KERNEL_OK")
</pallas_src>

<mosaic_0001>
module attributes {stable_mosaic.version = 11 : i64} {
  func.func @_resblock_kernel(%arg0: memref<32x512xf32, #tpu.memory_space<vmem>>, %arg1: memref<2x32x32xf32, #tpu.memory_space<vmem>>, %arg2: memref<2x512x512xf32, #tpu.memory_space<vmem>>, %arg3: memref<2x512x512xf32, #tpu.memory_space<vmem>>, %arg4: memref<512x32xf32, #tpu.memory_space<vmem>>, %arg5: memref<32x512xf32, #tpu.memory_space<vmem>>, %arg6: memref<1x32xf32, #tpu.memory_space<vmem>>, %arg7: memref<1x32xf32, #tpu.memory_space<vmem>>, %arg8: memref<32x512xf32, #tpu.memory_space<vmem>>) attributes {dimension_semantics = [], scalar_prefetch = 0 : i64, scratch_operands = 0 : i64, tpu.core_type = #tpu.core_type<tc>} {
    %c0 = arith.constant 0 : index
    %c0_0 = arith.constant 0 : index
    %0 = vector.load %arg0[%c0, %c0_0] : memref<32x512xf32, #tpu.memory_space<vmem>>, vector<32x512xf32>
    %cst = arith.constant 0.000000e+00 : f32
    %1 = vector.broadcast %cst : f32 to vector<32x512xf32>
    %c0_1 = arith.constant 0 : index
    %c0_2 = arith.constant 0 : index
    %c0_3 = arith.constant 0 : index
    %2 = vector.load %arg1[%c0_1, %c0_2, %c0_3] : memref<2x32x32xf32, #tpu.memory_space<vmem>>, vector<1x32x32xf32>
    %3 = vector.shape_cast %2 : vector<1x32x32xf32> to vector<32x32xf32>
    %cst_4 = arith.constant dense<0.000000e+00> : vector<32x512xf32>
    %4 = tpu.matmul %3, %0, %cst_4 {dimension_numbers = #tpu.dot_dimension_numbers<[1], [0], [0], [1], [0, 0, 1, 1], [], []>} : vector<32x32xf32>, vector<32x512xf32>, vector<32x512xf32> -> vector<32x512xf32>
    %c0_5 = arith.constant 0 : index
    %c0_6 = arith.constant 0 : index
    %c0_7 = arith.constant 0 : index
    %5 = vector.load %arg2[%c0_5, %c0_6, %c0_7] : memref<2x512x512xf32, #tpu.memory_space<vmem>>, vector<1x512x512xf32>
    %6 = vector.shape_cast %5 : vector<1x512x512xf32> to vector<512x512xf32>
    %cst_8 = arith.constant dense<0.000000e+00> : vector<32x512xf32>
    %7 = tpu.matmul %4, %6, %cst_8 {dimension_numbers = #tpu.dot_dimension_numbers<[1], [0], [0], [1], [0, 0, 1, 1], [], []>} : vector<32x512xf32>, vector<512x512xf32>, vector<32x512xf32> -> vector<32x512xf32>
    %8 = arith.addf %1, %7 : vector<32x512xf32>
    %c1 = arith.constant 1 : index
    %c0_9 = arith.constant 0 : index
    %c0_10 = arith.constant 0 : index
    %9 = vector.load %arg2[%c1, %c0_9, %c0_10] : memref<2x512x512xf32, #tpu.memory_space<vmem>>, vector<1x512x512xf32>
    %10 = vector.shape_cast %9 : vector<1x512x512xf32> to vector<512x512xf32>
    %cst_11 = arith.constant dense<0.000000e+00> : vector<32x512xf32>
    %11 = tpu.matmul %0, %10, %cst_11 {dimension_numbers = #tpu.dot_dimension_numbers<[1], [0], [0], [1], [0, 0, 1, 1], [], []>} : vector<32x512xf32>, vector<512x512xf32>, vector<32x512xf32> -> vector<32x512xf32>
    %12 = arith.addf %8, %11 : vector<32x512xf32>
    %cst_12 = arith.constant 1.000000e+00 : f32
    %13 = vector.broadcast %cst_12 : f32 to vector<8x32xf32>
    %cst_13 = arith.constant dense<0.000000e+00> : vector<8x512xf32>
    %14 = tpu.matmul %13, %12, %cst_13 {dimension_numbers = #tpu.dot_dimension_numbers<[1], [0], [0], [1], [0, 0, 1, 1], [], []>} : vector<8x32xf32>, vector<32x512xf32>, vector<8x512xf32> -> vector<8x512xf32>
    %c0_14 = arith.constant 0 : index
    %c0_15 = arith.constant 0 : index
    %15 = vector.load %arg4[%c0_14, %c0_15] : memref<512x32xf32, #tpu.memory_space<vmem>>, vector<512x32xf32>
    %cst_16 = arith.constant dense<0.000000e+00> : vector<8x32xf32>
    %16 = tpu.matmul %14, %15, %cst_16 {dimension_numbers = #tpu.dot_dimension_numbers<[1], [0], [0], [1], [0, 0, 1, 1], [], []>} : vector<8x512xf32>, vector<512x32xf32>, vector<8x32xf32> -> vector<8x32xf32>
    %17 = vector.extract_strided_slice %16 {offsets = [0, 0], sizes = [1, 32], strides = [1, 1]} : vector<8x32xf32> to vector<1x32xf32>
    %cst_17 = arith.constant 0.001953125 : f32
    %18 = vector.broadcast %cst_17 : f32 to vector<1x32xf32>
    %19 = arith.mulf %17, %18 : vector<1x32xf32>
    %c0_18 = arith.constant 0 : index
    %c0_19 = arith.constant 0 : index
    %20 = vector.load %arg5[%c0_18, %c0_19] : memref<32x512xf32, #tpu.memory_space<vmem>>, vector<32x512xf32>
    %cst_20 = arith.constant dense<0.000000e+00> : vector<1x512xf32>
    %21 = tpu.matmul %19, %20, %cst_20 {dimension_numbers = #tpu.dot_dimension_numbers<[1], [0], [0], [1], [0, 0, 1, 1], [], []>} : vector<1x32xf32>, vector<32x512xf32>, vector<1x512xf32> -> vector<1x512xf32>
    %22 = vector.broadcast %21 : vector<1x512xf32> to vector<32x512xf32>
    %23 = arith.subf %12, %22 : vector<32x512xf32>
    %24 = arith.mulf %23, %23 : vector<32x512xf32>
    %cst_21 = arith.constant dense<0.000000e+00> : vector<8x512xf32>
    %25 = tpu.matmul %13, %24, %cst_21 {dimension_numbers = #tpu.dot_dimension_numbers<[1], [0], [0], [1], [0, 0, 1, 1], [], []>} : vector<8x32xf32>, vector<32x512xf32>, vector<8x512xf32> -> vector<8x512xf32>
    %c0_22 = arith.constant 0 : index
    %c0_23 = arith.constant 0 : index
    %26 = vector.load %arg4[%c0_22, %c0_23] : memref<512x32xf32, #tpu.memory_space<vmem>>, vector<512x32xf32>
    %cst_24 = arith.constant dense<0.000000e+00> : vector<8x32xf32>
    %27 = tpu.matmul %25, %26, %cst_24 {dimension_numbers = #tpu.dot_dimension_numbers<[1], [0], [0], [1], [0, 0, 1, 1], [], []>} : vector<8x512xf32>, vector<512x32xf32>, vector<8x32xf32> -> vector<8x32xf32>
    %28 = vector.extract_strided_slice %27 {offsets = [0, 0], sizes = [1, 32], strides = [1, 1]} : vector<8x32xf32> to vector<1x32xf32>
    %cst_25 = arith.constant 0.001953125 : f32
    %29 = vector.broadcast %cst_25 : f32 to vector<1x32xf32>
    %30 = arith.mulf %28, %29 : vector<1x32xf32>
    %c0_26 = arith.constant 0 : index
    %c0_27 = arith.constant 0 : index
    %31 = vector.load %arg6[%c0_26, %c0_27] : memref<1x32xf32, #tpu.memory_space<vmem>>, vector<1x32xf32>
    %cst_28 = arith.constant 9.99999974E-6 : f32
    %32 = vector.broadcast %cst_28 : f32 to vector<1x32xf32>
    %33 = arith.addf %30, %32 : vector<1x32xf32>
    %34 = math.rsqrt %33 : vector<1x32xf32>
    %35 = arith.mulf %31, %34 : vector<1x32xf32>
    %c0_29 = arith.constant 0 : index
    %c0_30 = arith.constant 0 : index
    %36 = vector.load %arg5[%c0_29, %c0_30] : memref<32x512xf32, #tpu.memory_space<vmem>>, vector<32x512xf32>
    %cst_31 = arith.constant dense<0.000000e+00> : vector<1x512xf32>
    %37 = tpu.matmul %35, %36, %cst_31 {dimension_numbers = #tpu.dot_dimension_numbers<[1], [0], [0], [1], [0, 0, 1, 1], [], []>} : vector<1x32xf32>, vector<32x512xf32>, vector<1x512xf32> -> vector<1x512xf32>
    %c0_32 = arith.constant 0 : index
    %c0_33 = arith.constant 0 : index
    %38 = vector.load %arg7[%c0_32, %c0_33] : memref<1x32xf32, #tpu.memory_space<vmem>>, vector<1x32xf32>
    %c0_34 = arith.constant 0 : index
    %c0_35 = arith.constant 0 : index
    %39 = vector.load %arg5[%c0_34, %c0_35] : memref<32x512xf32, #tpu.memory_space<vmem>>, vector<32x512xf32>
    %cst_36 = arith.constant dense<0.000000e+00> : vector<1x512xf32>
    %40 = tpu.matmul %38, %39, %cst_36 {dimension_numbers = #tpu.dot_dimension_numbers<[1], [0], [0], [1], [0, 0, 1, 1], [], []>} : vector<1x32xf32>, vector<32x512xf32>, vector<1x512xf32> -> vector<1x512xf32>
    %41 = vector.broadcast %37 : vector<1x512xf32> to vector<32x512xf32>
    %42 = arith.mulf %23, %41 : vector<32x512xf32>
    %43 = vector.broadcast %40 : vector<1x512xf32> to vector<32x512xf32>
    %44 = arith.addf %42, %43 : vector<32x512xf32>
    %cst_37 = arith.constant 0.000000e+00 : f32
    %45 = vector.broadcast %cst_37 : f32 to vector<32x512xf32>
    %46 = arith.maximumf %44, %45 : vector<32x512xf32>
    %cst_38 = arith.constant 0.000000e+00 : f32
    %47 = vector.broadcast %cst_38 : f32 to vector<32x512xf32>
    %c0_39 = arith.constant 0 : index
    %c0_40 = arith.constant 0 : index
    %c0_41 = arith.constant 0 : index
    %48 = vector.load %arg1[%c0_39, %c0_40, %c0_41] : memref<2x32x32xf32, #tpu.memory_space<vmem>>, vector<1x32x32xf32>
    %49 = vector.shape_cast %48 : vector<1x32x32xf32> to vector<32x32xf32>
    %cst_42 = arith.constant dense<0.000000e+00> : vector<32x512xf32>
    %50 = tpu.matmul %49, %46, %cst_42 {dimension_numbers = #tpu.dot_dimension_numbers<[1], [0], [0], [1], [0, 0, 1, 1], [], []>} : vector<32x32xf32>, vector<32x512xf32>, vector<32x512xf32> -> vector<32x512xf32>
    %c0_43 = arith.constant 0 : index
    %c0_44 = arith.constant 0 : index
    %c0_45 = arith.constant 0 : index
    %51 = vector.load %arg3[%c0_43, %c0_44, %c0_45] : memref<2x512x512xf32, #tpu.memory_space<vmem>>, vector<1x512x512xf32>
    %52 = vector.shape_cast %51 : vector<1x512x512xf32> to vector<512x512xf32>
    %cst_46 = arith.constant dense<0.000000e+00> : vector<32x512xf32>
    %53 = tpu.matmul %50, %52, %cst_46 {dimension_numbers = #tpu.dot_dimension_numbers<[1], [0], [0], [1], [0, 0, 1, 1], [], []>} : vector<32x512xf32>, vector<512x512xf32>, vector<32x512xf32> -> vector<32x512xf32>
    %54 = arith.addf %47, %53 : vector<32x512xf32>
    %c1_47 = arith.constant 1 : index
    %c0_48 = arith.constant 0 : index
    %c0_49 = arith.constant 0 : index
    %55 = vector.load %arg3[%c1_47, %c0_48, %c0_49] : memref<2x512x512xf32, #tpu.memory_space<vmem>>, vector<1x512x512xf32>
    %56 = vector.shape_cast %55 : vector<1x512x512xf32> to vector<512x512xf32>
    %cst_50 = arith.constant dense<0.000000e+00> : vector<32x512xf32>
    %57 = tpu.matmul %46, %56, %cst_50 {dimension_numbers = #tpu.dot_dimension_numbers<[1], [0], [0], [1], [0, 0, 1, 1], [], []>} : vector<32x512xf32>, vector<512x512xf32>, vector<32x512xf32> -> vector<32x512xf32>
    %58 = arith.addf %54, %57 : vector<32x512xf32>
    %59 = arith.addf %58, %0 : vector<32x512xf32>
    %cst_51 = arith.constant 0.000000e+00 : f32
    %60 = vector.broadcast %cst_51 : f32 to vector<32x512xf32>
    %61 = arith.maximumf %59, %60 : vector<32x512xf32>
    %c0_52 = arith.constant 0 : index
    %c0_53 = arith.constant 0 : index
    %62 = vector.load %arg8[%c0_52, %c0_53] : memref<32x512xf32, #tpu.memory_space<vmem>>, vector<32x512xf32>
    tpu.vector_store %arg8[%c0_52, %c0_53], %61 {strides = array<i32>} : memref<32x512xf32, #tpu.memory_space<vmem>>, vector<32x512xf32>,
    return
  }
}

</mosaic_0001>

<llo_original>
// kernel: tile.9
$region0: #{tile.9}
  %s0 = inlined_call_operand.vmem [shape: f32[16,32,32], index: 0, kind: input, shape index: {}]
  %s1 = inlined_call_operand.vmem [shape: f32[512,32], index: 1, kind: output, shape index: {}]
  %v2 = vld [vmem:[%s0] ss:$4 sm:$0xff]
  %vm3 = vcmask 261120
  %4 = vst.msk [vmem:[%s1] ss:$8 sm:$0xf] %vm3, %v2
  %s5 = scalar_lea.vmem %s1, 4294967265
  %6 = vst.msk [vmem:[%s5] ss:$8 sm:$0xf0] %vm3, %v2
  %s7 = scalar_lea.vmem %s0, 32
  %v8 = vld [vmem:[%s7] ss:$4 sm:$0xff]
  %vm9 = vcmask 261120
  %s10 = scalar_lea.vmem %s1, 2
  %11 = vst.msk [vmem:[%s10] ss:$8 sm:$0xf] %vm9, %v8
  %s12 = scalar_lea.vmem %s1, 4294967267
  %13 = vst.msk [vmem:[%s12] ss:$8 sm:$0xf0] %vm9, %v8
  %s14 = scalar_lea.vmem %s0, 64
  %v15 = vld [vmem:[%s14] ss:$4 sm:$0xff]
  %vm16 = vcmask 261120
  %s17 = scalar_lea.vmem %s1, 4
  %18 = vst.msk [vmem:[%s17] ss:$8 sm:$0xf] %vm16, %v15
  %s19 = scalar_lea.vmem %s1, 4294967269
  %20 = vst.msk [vmem:[%s19] ss:$8 sm:$0xf0] %vm16, %v15
  %s21 = scalar_lea.vmem %s0, 96
  %v22 = vld [vmem:[%s21] ss:$4 sm:$0xff]
  %vm23 = vcmask 261120
  %s24 = scalar_lea.vmem %s1, 6
  %25 = vst.msk [vmem:[%s24] ss:$8 sm:$0xf] %vm23, %v22
  %s26 = scalar_lea.vmem %s1, 4294967271
  %27 = vst.msk [vmem:[%s26] ss:$8 sm:$0xf0] %vm23, %v22
  %s28 = scalar_lea.vmem %s0, 128
  %v29 = vld [vmem:[%s28] ss:$4 sm:$0xff]
  %vm30 = vcmask 261120
  %s31 = scalar_lea.vmem %s1, 32
  %32 = vst.msk [vmem:[%s31] ss:$8 sm:$0xf] %vm30, %v29
  %s33 = scalar_lea.vmem %s1, 1
  %34 = vst.msk [vmem:[%s33] ss:$8 sm:$0xf0] %vm30, %v29
  %s35 = scalar_lea.vmem %s0, 160
  %v36 = vld [vmem:[%s35] ss:$4 sm:$0xff]
  %vm37 = vcmask 261120
  %s38 = scalar_lea.vmem %s1, 34
  %39 = vst.msk [vmem:[%s38] ss:$8 sm:$0xf] %vm37, %v36
  %s40 = scalar_lea.vmem %s1, 3
  %41 = vst.msk [vmem:[%s40] ss:$8 sm:$0xf0] %vm37, %v36
  %s42 = scalar_lea.vmem %s0, 192
  %v43 = vld [vmem:[%s42] ss:$4 sm:$0xff]
  %vm44 = vcmask 261120
  %s45 = scalar_lea.vmem %s1, 36
  %46 = vst.msk [vmem:[%s45] ss:$8 sm:$0xf] %vm44, %v43
  %s47 = scalar_lea.vmem %s1, 5
  %48 = vst.msk [vmem:[%s47] ss:$8 sm:$0xf0] %vm44, %v43
  %s49 = scalar_lea.vmem %s0, 224
  %v50 = vld [vmem:[%s49] ss:$4 sm:$0xff]
  %vm51 = vcmask 261120
  %s52 = scalar_lea.vmem %s1, 38
  %53 = vst.msk [vmem:[%s52] ss:$8 sm:$0xf] %vm51, %v50
  %s54 = scalar_lea.vmem %s1, 7
  %55 = vst.msk [vmem:[%s54] ss:$8 sm:$0xf0] %vm51, %v50
  %s56 = scalar_lea.vmem %s0, 256
  %v57 = vld [vmem:[%s56] ss:$4 sm:$0xff]
  %vm58 = vcmask 261120
  %s59 = scalar_lea.vmem %s1, 64
  %60 = vst.msk [vmem:[%s59] ss:$8 sm:$0xf] %vm58, %v57
  %s61 = scalar_lea.vmem %s1, 33
  %62 = vst.msk [vmem:[%s61] ss:$8 sm:$0xf0] %vm58, %v57
  %s63 = scalar_lea.vmem %s0, 288
  %v64 = vld [vmem:[%s63] ss:$4 sm:$0xff]
  %vm65 = vcmask 261120
  %s66 = scalar_lea.vmem %s1, 66
  %67 = vst.msk [vmem:[%s66] ss:$8 sm:$0xf] %vm65, %v64
  %s68 = scalar_lea.vmem %s1, 35
  %69 = vst.msk [vmem:[%s68] ss:$8 sm:$0xf0] %vm65, %v64
  %s70 = scalar_lea.vmem %s0, 320
  %v71 = vld [vmem:[%s70] ss:$4 sm:$0xff]
  %vm72 = vcmask 261120
  %s73 = scalar_lea.vmem %s1, 68
  %74 = vst.msk [vmem:[%s73] ss:$8 sm:$0xf] %vm72, %v71
  %s75 = scalar_lea.vmem %s1, 37
  %76 = vst.msk [vmem:[%s75] ss:$8 sm:$0xf0] %vm72, %v71
  %s77 = scalar_lea.vmem %s0, 352
  %v78 = vld [vmem:[%s77] ss:$4 sm:$0xff]
  %vm79 = vcmask 261120
  %s80 = scalar_lea.vmem %s1, 70
  %81 = vst.msk [vmem:[%s80] ss:$8 sm:$0xf] %vm79, %v78
  %s82 = scalar_lea.vmem %s1, 39
  %83 = vst.msk [vmem:[%s82] ss:$8 sm:$0xf0] %vm79, %v78
  %s84 = scalar_lea.vmem %s0, 384
  %v85 = vld [vmem:[%s84] ss:$4 sm:$0xff]
  %vm86 = vcmask 261120
  %s87 = scalar_lea.vmem %s1, 96
  %88 = vst.msk [vmem:[%s87] ss:$8 sm:$0xf] %vm86, %v85
  %s89 = scalar_lea.vmem %s1, 65
  %90 = vst.msk [vmem:[%s89] ss:$8 sm:$0xf0] %vm86, %v85
  %s91 = scalar_lea.vmem %s0, 416
  %v92 = vld [vmem:[%s91] ss:$4 sm:$0xff]
  %vm93 = vcmask 261120
  %s94 = scalar_lea.vmem %s1, 98
  %95 = vst.msk [vmem:[%s94] ss:$8 sm:$0xf] %vm93, %v92
  %s96 = scalar_lea.vmem %s1, 67
  %97 = vst.msk [vmem:[%s96] ss:$8 sm:$0xf0] %vm93, %v92
  %s98 = scalar_lea.vmem %s0, 448
  %v99 = vld [vmem:[%s98] ss:$4 sm:$0xff]
  %vm100 = vcmask 261120
  %s101 = scalar_lea.vmem %s1, 100
  %102 = vst.msk [vmem:[%s101] ss:$8 sm:$0xf] %vm100, %v99
  %s103 = scalar_lea.vmem %s1, 69
  %104 = vst.msk [vmem:[%s103] ss:$8 sm:$0xf0] %vm100, %v99
  %s105 = scalar_lea.vmem %s0, 480
  %v106 = vld [vmem:[%s105] ss:$4 sm:$0xff]
  %vm107 = vcmask 261120
  %s108 = scalar_lea.vmem %s1, 102
  %109 = vst.msk [vmem:[%s108] ss:$8 sm:$0xf] %vm107, %v106
  %s110 = scalar_lea.vmem %s1, 71
  %111 = vst.msk [vmem:[%s110] ss:$8 sm:$0xf0] %vm107, %v106
  %s112 = scalar_lea.vmem %s0, 3
  %s113 = smov 3
  %v114 = vld [vmem:[%s112] ss:$16 sm:%s113]
  %s115 = scalar_lea.vmem %s0, 3
  %s116 = smov 12
  %v117 = vld [vmem:[%s115] ss:$16 sm:%s116]
  %vm118 = vcmask 1043458
  %v119 = vsel %vm118, %v117, %v114
  %s120 = scalar_lea.vmem %s0, 3
  %s121 = smov 48
  %v122 = vld [vmem:[%s120] ss:$16 sm:%s121]
  %vm123 = vcmask 1045508
  %v124 = vsel %vm123, %v122, %v119
  %s125 = scalar_lea.vmem %s0, 3
  %s126 = smov 192
  %v127 = vld [vmem:[%s125] ss:$16 sm:%s126]
  %vm128 = vcmask 1047558
  %v129 = vsel %vm128, %v127, %v124
  %130 = vrot.lane.b32.xlu0 %v129, 96
  %v131 = vpop.permute.xlu0 %130
  %vm132 = vcmask 1048320
  %133 = vst.msk [vmem:[%s1] sm:$0xff] %vm132, %v131
  %s134 = scalar_lea.vmem %s0, 131
  %s135 = smov 3
  %v136 = vld [vmem:[%s134] ss:$16 sm:%s135]
  %s137 = scalar_lea.vmem %s0, 131
  %s138 = smov 12
  %v139 = vld [vmem:[%s137] ss:$16 sm:%s138]
  %vm140 = vcmask 1043458
  %v141 = vsel %vm140, %v139, %v136
  %s142 = scalar_lea.vmem %s0, 131
  %s143 = smov 48
  %v144 = vld [vmem:[%s142] ss:$16 sm:%s143]
  %vm145 = vcmask 1045508
  %v146 = vsel %vm145, %v144, %v141
  %s147 = scalar_lea.vmem %s0, 131
  %s148 = smov 192
  %v149 = vld [vmem:[%s147] ss:$16 sm:%s148]
  %vm150 = vcmask 1047558
  %v151 = vsel %vm150, %v149, %v146
  %152 = vrot.lane.b32.xlu0 %v151, 96
  %v153 = vpop.permute.xlu0 %152
  %vm154 = vcmask 1048320
  %s155 = scalar_lea.vmem %s1, 32
  %156 = vst.msk [vmem:[%s155] sm:$0xff] %vm154, %v153
  %s157 = scalar_lea.vmem %s0, 259
  %s158 = smov 3
  %v159 = vld [vmem:[%s157] ss:$16 sm:%s158]
  %s160 = scalar_lea.vmem %s0, 259
  %s161 = smov 12
  %v162 = vld [vmem:[%s160] ss:$16 sm:%s161]
  %vm163 = vcmask 1043458
  %v164 = vsel %vm163, %v162, %v159
  %s165 = scalar_lea.vmem %s0, 259
  %s166 = smov 48
  %v167 = vld [vmem:[%s165] ss:$16 sm:%s166]
  %vm168 = vcmask 1045508
  %v169 = vsel %vm168, %v167, %v164
  %s170 = scalar_lea.vmem %s0, 259
  %s171 = smov 192
  %v172 = vld [vmem:[%s170] ss:$16 sm:%s171]
  %vm173 = vcmask 1047558
  %v174 = vsel %vm173, %v172, %v169
  %175 = vrot.lane.b32.xlu0 %v174, 96
  %v176 = vpop.permute.xlu0 %175
  %vm177 = vcmask 1048320
  %s178 = scalar_lea.vmem %s1, 64
  %179 = vst.msk [vmem:[%s178] sm:$0xff] %vm177, %v176
  %s180 = scalar_lea.vmem %s0, 387
  %s181 = smov 3
  %v182 = vld [vmem:[%s180] ss:$16 sm:%s181]
  %s183 = scalar_lea.vmem %s0, 387
  %s184 = smov 12
  %v185 = vld [vmem:[%s183] ss:$16 sm:%s184]
  %vm186 = vcmask 1043458
  %v187 = vsel %vm186, %v185, %v182
  %s188 = scalar_lea.vmem %s0, 387
  %s189 = smov 48
  %v190 = vld [vmem:[%s188] ss:$16 sm:%s189]
  %vm191 = vcmask 1045508
  %v192 = vsel %vm191, %v190, %v187
  %s193 = scalar_lea.vmem %s0, 387
  %s194 = smov 192
  %v195 = vld [vmem:[%s193] ss:$16 sm:%s194]
  %vm196 = vcmask 1047558
  %v197 = vsel %vm196, %v195, %v192
  %198 = vrot.lane.b32.xlu0 %v197, 96
  %v199 = vpop.permute.xlu0 %198
  %vm200 = vcmask 1048320
  %s201 = scalar_lea.vmem %s1, 96
  %202 = vst.msk [vmem:[%s201] sm:$0xff] %vm200, %v199
  %s203 = scalar_lea.vmem %s0, 7
  %s204 = smov 3
  %v205 = vld [vmem:[%s203] ss:$16 sm:%s204]
  %s206 = scalar_lea.vmem %s0, 7
  %s207 = smov 12
  %v208 = vld [vmem:[%s206] ss:$16 sm:%s207]
  %vm209 = vcmask 1043458
  %v210 = vsel %vm209, %v208, %v205
  %s211 = scalar_lea.vmem %s0, 7
  %s212 = smov 48
  %v213 = vld [vmem:[%s211] ss:$16 sm:%s212]
  %vm214 = vcmask 1045508
  %v215 = vsel %vm214, %v213, %v210
  %s216 = scalar_lea.vmem %s0, 7
  %s217 = smov 192
  %v218 = vld [vmem:[%s216] ss:$16 sm:%s217]
  %vm219 = vcmask 1047558
  %v220 = vsel %vm219, %v218, %v215
  %221 = vrot.lane.b32.xlu0 %v220, 96
  %v222 = vpop.permute.xlu0 %221
  %vm223 = vcmask 1048320
  %s224 = scalar_lea.vmem %s1, 8
  %225 = vst.msk [vmem:[%s224] sm:$0xff] %vm223, %v222
  %s226 = scalar_lea.vmem %s0, 135
  %s227 = smov 3
  %v228 = vld [vmem:[%s226] ss:$16 sm:%s227]
  %s229 = scalar_lea.vmem %s0, 135
  %s230 = smov 12
  %v231 = vld [vmem:[%s229] ss:$16 sm:%s230]
  %vm232 = vcmask 1043458
  %v233 = vsel %vm232, %v231, %v228
  %s234 = scalar_lea.vmem %s0, 135
  %s235 = smov 48
  %v236 = vld [vmem:[%s234] ss:$16 sm:%s235]
  %vm237 = vcmask 1045508
  %v238 = vsel %vm237, %v236, %v233
  %s239 = scalar_lea.vmem %s0, 135
  %s240 = smov 192
  %v241 = vld [vmem:[%s239] ss:$16 sm:%s240]
  %vm242 = vcmask 1047558
  %v243 = vsel %vm242, %v241, %v238
  %244 = vrot.lane.b32.xlu0 %v243, 96
  %v245 = vpop.permute.xlu0 %244
  %vm246 = vcmask 1048320
  %s247 = scalar_lea.vmem %s1, 40
  %248 = vst.msk [vmem:[%s247] sm:$0xff] %vm246, %v245
  %s249 = scalar_lea.vmem %s0, 263
  %s250 = smov 3
  %v251 = vld [vmem:[%s249] ss:$16 sm:%s250]
  %s252 = scalar_lea.vmem %s0, 263
  %s253 = smov 12
  %v254 = vld [vmem:[%s252] ss:$16 sm:%s253]
  %vm255 = vcmask 1043458
  %v256 = vsel %vm255, %v254, %v251
  %s257 = scalar_lea.vmem %s0, 263
  %s258 = smov 48
  %v259 = vld [vmem:[%s257] ss:$16 sm:%s258]
  %vm260 = vcmask 1045508
  %v261 = vsel %vm260, %v259, %v256
  %s262 = scalar_lea.vmem %s0, 263
  %s263 = smov 192
  %v264 = vld [vmem:[%s262] ss:$16 sm:%s263]
  %vm265 = vcmask 1047558
  %v266 = vsel %vm265, %v264, %v261
  %267 = vrot.lane.b32.xlu0 %v266, 96
  %v268 = vpop.permute.xlu0 %267
  %vm269 = vcmask 1048320
  %s270 = scalar_lea.vmem %s1, 72
  %271 = vst.msk [vmem:[%s270] sm:$0xff] %vm269, %v268
  %s272 = scalar_lea.vmem %s0, 391
  %s273 = smov 3
  %v274 = vld [vmem:[%s272] ss:$16 sm:%s273]
  %s275 = scalar_lea.vmem %s0, 391
  %s276 = smov 12
  %v277 = vld [vmem:[%s275] ss:$16 sm:%s276]
  %vm278 = vcmask 1043458
  %v279 = vsel %vm278, %v277, %v274
  %s280 = scalar_lea.vmem %s0, 391
  %s281 = smov 48
  %v282 = vld [vmem:[%s280] ss:$16 sm:%s281]
  %vm283 = vcmask 1045508
  %v284 = vsel %vm283, %v282, %v279
  %s285 = scalar_lea.vmem %s0, 391
  %s286 = smov 192
  %v287 = vld [vmem:[%s285] ss:$16 sm:%s286]
  %vm288 = vcmask 1047558
  %v289 = vsel %vm288, %v287, %v284
  %290 = vrot.lane.b32.xlu0 %v289, 96
  %v291 = vpop.permute.xlu0 %290
  %vm292 = vcmask 1048320
  %s293 = scalar_lea.vmem %s1, 104
  %294 = vst.msk [vmem:[%s293] sm:$0xff] %vm292, %v291
  %s295 = scalar_lea.vmem %s0, 11
  %s296 = smov 3
  %v297 = vld [vmem:[%s295] ss:$16 sm:%s296]
  %s298 = scalar_lea.vmem %s0, 11
  %s299 = smov 12
  %v300 = vld [vmem:[%s298] ss:$16 sm:%s299]
  %vm301 = vcmask 1043458
  %v302 = vsel %vm301, %v300, %v297
  %s303 = scalar_lea.vmem %s0, 11
  %s304 = smov 48
  %v305 = vld [vmem:[%s303] ss:$16 sm:%s304]
  %vm306 = vcmask 1045508
  %v307 = vsel %vm306, %v305, %v302
  %s308 = scalar_lea.vmem %s0, 11
  %s309 = smov 192
  %v310 = vld [vmem:[%s308] ss:$16 sm:%s309]
  %vm311 = vcmask 1047558
  %v312 = vsel %vm311, %v310, %v307
  %313 = vrot.lane.b32.xlu0 %v312, 96
  %v314 = vpop.permute.xlu0 %313
  %vm315 = vcmask 1048320
  %s316 = scalar_lea.vmem %s1, 16
  %317 = vst.msk [vmem:[%s316] sm:$0xff] %vm315, %v314
  %s318 = scalar_lea.vmem %s0, 139
  %s319 = smov 3
  %v320 = vld [vmem:[%s318] ss:$16 sm:%s319]
  %s321 = scalar_lea.vmem %s0, 139
  %s322 = smov 12
  %v323 = vld [vmem:[%s321] ss:$16 sm:%s322]
  %vm324 = vcmask 1043458
  %v325 = vsel %vm324, %v323, %v320
  %s326 = scalar_lea.vmem %s0, 139
  %s327 = smov 48
  %v328 = vld [vmem:[%s326] ss:$16 sm:%s327]
  %vm329 = vcmask 1045508
  %v330 = vsel %vm329, %v328, %v325
  %s331 = scalar_lea.vmem %s0, 139
  %s332 = smov 192
  %v333 = vld [vmem:[%s331] ss:$16 sm:%s332]
  %vm334 = vcmask 1047558
  %v335 = vsel %vm334, %v333, %v330
  %336 = vrot.lane.b32.xlu0 %v335, 96
  %v337 = vpop.permute.xlu0 %336
  %vm338 = vcmask 1048320
  %s339 = scalar_lea.vmem %s1, 48
  %340 = vst.msk [vmem:[%s339] sm:$0xff] %vm338, %v337
  %s341 = scalar_lea.vmem %s0, 267
  %s342 = smov 3
  %v343 = vld [vmem:[%s341] ss:$16 sm:%s342]
  %s344 = scalar_lea.vmem %s0, 267
  %s345 = smov 12
  %v346 = vld [vmem:[%s344] ss:$16 sm:%s345]
  %vm347 = vcmask 1043458
  %v348 = vsel %vm347, %v346, %v343
  %s349 = scalar_lea.vmem %s0, 267
  %s350 = smov 48
  %v351 = vld [vmem:[%s349] ss:$16 sm:%s350]
  %vm352 = vcmask 1045508
  %v353 = vsel %vm352, %v351, %v348
  %s354 = scalar_lea.vmem %s0, 267
  %s355 = smov 192
  %v356 = vld [vmem:[%s354] ss:$16 sm:%s355]
  %vm357 = vcmask 1047558
  %v358 = vsel %vm357, %v356, %v353
  %359 = vrot.lane.b32.xlu0 %v358, 96
  %v360 = vpop.permute.xlu0 %359
  %vm361 = vcmask 1048320
  %s362 = scalar_lea.vmem %s1, 80
  %363 = vst.msk [vmem:[%s362] sm:$0xff] %vm361, %v360
  %s364 = scalar_lea.vmem %s0, 395
  %s365 = smov 3
  %v366 = vld [vmem:[%s364] ss:$16 sm:%s365]
  %s367 = scalar_lea.vmem %s0, 395
  %s368 = smov 12
  %v369 = vld [vmem:[%s367] ss:$16 sm:%s368]
  %vm370 = vcmask 1043458
  %v371 = vsel %vm370, %v369, %v366
  %s372 = scalar_lea.vmem %s0, 395
  %s373 = smov 48
  %v374 = vld [vmem:[%s372] ss:$16 sm:%s373]
  %vm375 = vcmask 1045508
  %v376 = vsel %vm375, %v374, %v371
  %s377 = scalar_lea.vmem %s0, 395
  %s378 = smov 192
  %v379 = vld [vmem:[%s377] ss:$16 sm:%s378]
  %vm380 = vcmask 1047558
  %v381 = vsel %vm380, %v379, %v376
  %382 = vrot.lane.b32.xlu0 %v381, 96
  %v383 = vpop.permute.xlu0 %382
  %vm384 = vcmask 1048320
  %s385 = scalar_lea.vmem %s1, 112
  %386 = vst.msk [vmem:[%s385] sm:$0xff] %vm384, %v383
  %s387 = scalar_lea.vmem %s0, 15
  %s388 = smov 3
  %v389 = vld [vmem:[%s387] ss:$16 sm:%s388]
  %s390 = scalar_lea.vmem %s0, 15
  %s391 = smov 12
  %v392 = vld [vmem:[%s390] ss:$16 sm:%s391]
  %vm393 = vcmask 1043458
  %v394 = vsel %vm393, %v392, %v389
  %s395 = scalar_lea.vmem %s0, 15
  %s396 = smov 48
  %v397 = vld [vmem:[%s395] ss:$16 sm:%s396]
  %vm398 = vcmask 1045508
  %v399 = vsel %vm398, %v397, %v394
  %s400 = scalar_lea.vmem %s0, 15
  %s401 = smov 192
  %v402 = vld [vmem:[%s400] ss:$16 sm:%s401]
  %vm403 = vcmask 1047558
  %v404 = vsel %vm403, %v402, %v399
  %405 = vrot.lane.b32.xlu0 %v404, 96
  %v406 = vpop.permute.xlu0 %405
  %vm407 = vcmask 1048320
  %s408 = scalar_lea.vmem %s1, 24
  %409 = vst.msk [vmem:[%s408] sm:$0xff] %vm407, %v406
  %s410 = scalar_lea.vmem %s0, 143
  %s411 = smov 3
  %v412 = vld [vmem:[%s410] ss:$16 sm:%s411]
  %s413 = scalar_lea.vmem %s0, 143
  %s414 = smov 12
  %v415 = vld [vmem:[%s413] ss:$16 sm:%s414]
  %vm416 = vcmask 1043458
  %v417 = vsel %vm416, %v415, %v412
  %s418 = scalar_lea.vmem %s0, 143
  %s419 = smov 48
  %v420 = vld [vmem:[%s418] ss:$16 sm:%s419]
  %vm421 = vcmask 1045508
  %v422 = vsel %vm421, %v420, %v417
  %s423 = scalar_lea.vmem %s0, 143
  %s424 = smov 192
  %v425 = vld [vmem:[%s423] ss:$16 sm:%s424]
  %vm426 = vcmask 1047558
  %v427 = vsel %vm426, %v425, %v422
  %428 = vrot.lane.b32.xlu0 %v427, 96
  %v429 = vpop.permute.xlu0 %428
  %vm430 = vcmask 1048320
  %s431 = scalar_lea.vmem %s1, 56
  %432 = vst.msk [vmem:[%s431] sm:$0xff] %vm430, %v429
  %s433 = scalar_lea.vmem %s0, 271
  %s434 = smov 3
  %v435 = vld [vmem:[%s433] ss:$16 sm:%s434]
  %s436 = scalar_lea.vmem %s0, 271
  %s437 = smov 12
  %v438 = vld [vmem:[%s436] ss:$16 sm:%s437]
  %vm439 = vcmask 1043458
  %v440 = vsel %vm439, %v438, %v435
  %s441 = scalar_lea.vmem %s0, 271
  %s442 = smov 48
  %v443 = vld [vmem:[%s441] ss:$16 sm:%s442]
  %vm444 = vcmask 1045508
  %v445 = vsel %vm444, %v443, %v440
  %s446 = scalar_lea.vmem %s0, 271
  %s447 = smov 192
  %v448 = vld [vmem:[%s446] ss:$16 sm:%s447]
  %vm449 = vcmask 1047558
  %v450 = vsel %vm449, %v448, %v445
  %451 = vrot.lane.b32.xlu0 %v450, 96
  %v452 = vpop.permute.xlu0 %451
  %vm453 = vcmask 1048320
  %s454 = scalar_lea.vmem %s1, 88
  %455 = vst.msk [vmem:[%s454] sm:$0xff] %vm453, %v452
  %s456 = scalar_lea.vmem %s0, 399
  %s457 = smov 3
  %v458 = vld [vmem:[%s456] ss:$16 sm:%s457]
  %s459 = scalar_lea.vmem %s0, 399
  %s460 = smov 12
  %v461 = vld [vmem:[%s459] ss:$16 sm:%s460]
  %vm462 = vcmask 1043458
  %v463 = vsel %vm462, %v461, %v458
  %s464 = scalar_lea.vmem %s0, 399
  %s465 = smov 48
  %v466 = vld [vmem:[%s464] ss:$16 sm:%s465]
  %vm467 = vcmask 1045508
  %v468 = vsel %vm467, %v466, %v463
  %s469 = scalar_lea.vmem %s0, 399
  %s470 = smov 192
  %v471 = vld [vmem:[%s469] ss:$16 sm:%s470]
  %vm472 = vcmask 1047558
  %v473 = vsel %vm472, %v471, %v468
  %474 = vrot.lane.b32.xlu0 %v473, 96
  %v475 = vpop.permute.xlu0 %474
  %vm476 = vcmask 1048320
  %s477 = scalar_lea.vmem %s1, 120
  %478 = vst.msk [vmem:[%s477] sm:$0xff] %vm476, %v475
  %s479 = scalar_lea.vmem %s0, 2
  %s480 = smov 3
  %v481 = vld [vmem:[%s479] ss:$16 sm:%s480]
  %s482 = scalar_lea.vmem %s0, 2
  %s483 = smov 12
  %v484 = vld [vmem:[%s482] ss:$16 sm:%s483]
  %vm485 = vcmask 1043458
  %v486 = vsel %vm485, %v484, %v481
  %s487 = scalar_lea.vmem %s0, 2
  %s488 = smov 48
  %v489 = vld [vmem:[%s487] ss:$16 sm:%s488]
  %vm490 = vcmask 1045508
  %v491 = vsel %vm490, %v489, %v486
  %s492 = scalar_lea.vmem %s0, 2
  %s493 = smov 192
  %v494 = vld [vmem:[%s492] ss:$16 sm:%s493]
  %vm495 = vcmask 1047558
  %v496 = vsel %vm495, %v494, %v491
  %497 = vrot.lane.b32.xlu0 %v496, 64
  %v498 = vpop.permute.xlu0 %497
  %vm499 = vcmask 785920
  %500 = vst.msk [vmem:[%s1] sm:$0xff] %vm499, %v498
  %s501 = scalar_lea.vmem %s0, 130
  %s502 = smov 3
  %v503 = vld [vmem:[%s501] ss:$16 sm:%s502]
  %s504 = scalar_lea.vmem %s0, 130
  %s505 = smov 12
  %v506 = vld [vmem:[%s504] ss:$16 sm:%s505]
  %vm507 = vcmask 1043458
  %v508 = vsel %vm507, %v506, %v503
  %s509 = scalar_lea.vmem %s0, 130
  %s510 = smov 48
  %v511 = vld [vmem:[%s509] ss:$16 sm:%s510]
  %vm512 = vcmask 1045508
  %v513 = vsel %vm512, %v511, %v508
  %s514 = scalar_lea.vmem %s0, 130
  %s515 = smov 192
  %v516 = vld [vmem:[%s514] ss:$16 sm:%s515]
  %vm517 = vcmask 1047558
  %v518 = vsel %vm517, %v516, %v513
  %519 = vrot.lane.b32.xlu0 %v518, 64
  %v520 = vpop.permute.xlu0 %519
  %vm521 = vcmask 785920
  %s522 = scalar_lea.vmem %s1, 32
  %523 = vst.msk [vmem:[%s522] sm:$0xff] %vm521, %v520
  %s524 = scalar_lea.vmem %s0, 258
  %s525 = smov 3
  %v526 = vld [vmem:[%s524] ss:$16 sm:%s525]
  %s527 = scalar_lea.vmem %s0, 258
  %s528 = smov 12
  %v529 = vld [vmem:[%s527] ss:$16 sm:%s528]
  %vm530 = vcmask 1043458
  %v531 = vsel %vm530, %v529, %v526
  %s532 = scalar_lea.vmem %s0, 258
  %s533 = smov 48
  %v534 = vld [vmem:[%s532] ss:$16 sm:%s533]
  %vm535 = vcmask 1045508
  %v536 = vsel %vm535, %v534, %v531
  %s537 = scalar_lea.vmem %s0, 258
  %s538 = smov 192
  %v539 = vld [vmem:[%s537] ss:$16 sm:%s538]
  %vm540 = vcmask 1047558
  %v541 = vsel %vm540, %v539, %v536
  %542 = vrot.lane.b32.xlu0 %v541, 64
  %v543 = vpop.permute.xlu0 %542
  %vm544 = vcmask 785920
  %s545 = scalar_lea.vmem %s1, 64
  %546 = vst.msk [vmem:[%s545] sm:$0xff] %vm544, %v543
  %s547 = scalar_lea.vmem %s0, 386
  %s548 = smov 3
  %v549 = vld [vmem:[%s547] ss:$16 sm:%s548]
  %s550 = scalar_lea.vmem %s0, 386
  %s551 = smov 12
  %v552 = vld [vmem:[%s550] ss:$16 sm:%s551]
  %vm553 = vcmask 1043458
  %v554 = vsel %vm553, %v552, %v549
  %s555 = scalar_lea.vmem %s0, 386
  %s556 = smov 48
  %v557 = vld [vmem:[%s555] ss:$16 sm:%s556]
  %vm558 = vcmask 1045508
  %v559 = vsel %vm558, %v557, %v554
  %s560 = scalar_lea.vmem %s0, 386
  %s561 = smov 192
  %v562 = vld [vmem:[%s560] ss:$16 sm:%s561]
  %vm563 = vcmask 1047558
  %v564 = vsel %vm563, %v562, %v559
  %565 = vrot.lane.b32.xlu0 %v564, 64
  %v566 = vpop.permute.xlu0 %565
  %vm567 = vcmask 785920
  %s568 = scalar_lea.vmem %s1, 96
  %569 = vst.msk [vmem:[%s568] sm:$0xff] %vm567, %v566
  %s570 = scalar_lea.vmem %s0, 6
  %s571 = smov 3
  %v572 = vld [vmem:[%s570] ss:$16 sm:%s571]
  %s573 = scalar_lea.vmem %s0, 6
  %s574 = smov 12
  %v575 = vld [vmem:[%s573] ss:$16 sm:%s574]
  %vm576 = vcmask 1043458
  %v577 = vsel %vm576, %v575, %v572
  %s578 = scalar_lea.vmem %s0, 6
  %s579 = smov 48
  %v580 = vld [vmem:[%s578] ss:$16 sm:%s579]
  %vm581 = vcmask 1045508
  %v582 = vsel %vm581, %v580, %v577
  %s583 = scalar_lea.vmem %s0, 6
  %s584 = smov 192
  %v585 = vld [vmem:[%s583] ss:$16 sm:%s584]
  %vm586 = vcmask 1047558
  %v587 = vsel %vm586, %v585, %v582
  %588 = vrot.lane.b32.xlu0 %v587, 64
  %v589 = vpop.permute.xlu0 %588
  %vm590 = vcmask 785920
  %s591 = scalar_lea.vmem %s1, 8
  %592 = vst.msk [vmem:[%s591] sm:$0xff] %vm590, %v589
  %s593 = scalar_lea.vmem %s0, 134
  %s594 = smov 3
  %v595 = vld [vmem:[%s593] ss:$16 sm:%s594]
  %s596 = scalar_lea.vmem %s0, 134
  %s597 = smov 12
  %v598 = vld [vmem:[%s596] ss:$16 sm:%s597]
  %vm599 = vcmask 1043458
  %v600 = vsel %vm599, %v598, %v595
  %s601 = scalar_lea.vmem %s0, 134
  %s602 = smov 48
  %v603 = vld [vmem:[%s601] ss:$16 sm:%s602]
  %vm604 = vcmask 1045508
  %v605 = vsel %vm604, %v603, %v600
  %s606 = scalar_lea.vmem %s0, 134
  %s607 = smov 192
  %v608 = vld [vmem:[%s606] ss:$16 sm:%s607]
  %vm609 = vcmask 1047558
  %v610 = vsel %vm609, %v608, %v605
  %611 = vrot.lane.b32.xlu0 %v610, 64
  %v612 = vpop.permute.xlu0 %611
  %vm613 = vcmask 785920
  %s614 = scalar_lea.vmem %s1, 40
  %615 = vst.msk [vmem:[%s614] sm:$0xff] %vm613, %v612
  %s616 = scalar_lea.vmem %s0, 262
  %s617 = smov 3
  %v618 = vld [vmem:[%s616] ss:$16 sm:%s617]
  %s619 = scalar_lea.vmem %s0, 262
  %s620 = smov 12
  %v621 = vld [vmem:[%s619] ss:$16 sm:%s620]
  %vm622 = vcmask 1043458
  %v623 = vsel %vm622, %v621, %v618
  %s624 = scalar_lea.vmem %s0, 262
  %s625 = smov 48
  %v626 = vld [vmem:[%s624] ss:$16 sm:%s625]
  %vm627 = vcmask 1045508
  %v628 = vsel %vm627, %v626, %v623
  %s629 = scalar_lea.vmem %s0, 262
  %s630 = smov 192
  %v631 = vld [vmem:[%s629] ss:$16 sm:%s630]
  %vm632 = vcmask 1047558
  %v633 = vsel %vm632, %v631, %v628
  %634 = vrot.lane.b32.xlu0 %v633, 64
  %v635 = vpop.permute.xlu0 %634
  %vm636 = vcmask 785920
  %s637 = scalar_lea.vmem %s1, 72
  %638 = vst.msk [vmem:[%s637] sm:$0xff] %vm636, %v635
  %s639 = scalar_lea.vmem %s0, 390
  %s640 = smov 3
  %v641 = vld [vmem:[%s639] ss:$16 sm:%s640]
  %s642 = scalar_lea.vmem %s0, 390
  %s643 = smov 12
  %v644 = vld [vmem:[%s642] ss:$16 sm:%s643]
  %vm645 = vcmask 1043458
  %v646 = vsel %vm645, %v644, %v641
  %s647 = scalar_lea.vmem %s0, 390
  %s648 = smov 48
  %v649 = vld [vmem:[%s647] ss:$16 sm:%s648]
  %vm650 = vcmask 1045508
  %v651 = vsel %vm650, %v649, %v646
  %s652 = scalar_lea.vmem %s0, 390
  %s653 = smov 192
  %v654 = vld [vmem:[%s652] ss:$16 sm:%s653]
  %vm655 = vcmask 1047558
  %v656 = vsel %vm655, %v654, %v651
  %657 = vrot.lane.b32.xlu0 %v656, 64
  %v658 = vpop.permute.xlu0 %657
  %vm659 = vcmask 785920
  %s660 = scalar_lea.vmem %s1, 104
  %661 = vst.msk [vmem:[%s660] sm:$0xff] %vm659, %v658
  %s662 = scalar_lea.vmem %s0, 10
  %s663 = smov 3
  %v664 = vld [vmem:[%s662] ss:$16 sm:%s663]
  %s665 = scalar_lea.vmem %s0, 10
  %s666 = smov 12
  %v667 = vld [vmem:[%s665] ss:$16 sm:%s666]
  %vm668 = vcmask 1043458
  %v669 = vsel %vm668, %v667, %v664
  %s670 = scalar_lea.vmem %s0, 10
  %s671 = smov 48
  %v672 = vld [vmem:[%s670] ss:$16 sm:%s671]
  %vm673 = vcmask 1045508
  %v674 = vsel %vm673, %v672, %v669
  %s675 = scalar_lea.vmem %s0, 10
  %s676 = smov 192
  %v677 = vld [vmem:[%s675] ss:$16 sm:%s676]
  %vm678 = vcmask 1047558
  %v679 = vsel %vm678, %v677, %v674
  %680 = vrot.lane.b32.xlu0 %v679, 64
  %v681 = vpop.permute.xlu0 %680
  %vm682 = vcmask 785920
  %s683 = scalar_lea.vmem %s1, 16
  %684 = vst.msk [vmem:[%s683] sm:$0xff] %vm682, %v681
  %s685 = scalar_lea.vmem %s0, 138
  %s686 = smov 3
  %v687 = vld [vmem:[%s685] ss:$16 sm:%s686]
  %s688 = scalar_lea.vmem %s0, 138
  %s689 = smov 12
  %v690 = vld [vmem:[%s688] ss:$16 sm:%s689]
  %vm691 = vcmask 1043458
  %v692 = vsel %vm691, %v690, %v687
  %s693 = scalar_lea.vmem %s0, 138
  %s694 = smov 48
  %v695 = vld [vmem:[%s693] ss:$16 sm:%s694]
  %vm696 = vcmask 1045508
  %v697 = vsel %vm696, %v695, %v692
  %s698 = scalar_lea.vmem %s0, 138
  %s699 = smov 192
  %v700 = vld [vmem:[%s698] ss:$16 sm:%s699]
  %vm701 = vcmask 1047558
  %v702 = vsel %vm701, %v700, %v697
  %703 = vrot.lane.b32.xlu0 %v702, 64
  %v704 = vpop.permute.xlu0 %703
  %vm705 = vcmask 785920
  %s706 = scalar_lea.vmem %s1, 48
  %707 = vst.msk [vmem:[%s706] sm:$0xff] %vm705, %v704
  %s708 = scalar_lea.vmem %s0, 266
  %s709 = smov 3
  %v710 = vld [vmem:[%s708] ss:$16 sm:%s709]
  %s711 = scalar_lea.vmem %s0, 266
  %s712 = smov 12
  %v713 = vld [vmem:[%s711] ss:$16 sm:%s712]
  %vm714 = vcmask 1043458
  %v715 = vsel %vm714, %v713, %v710
  %s716 = scalar_lea.vmem %s0, 266
  %s717 = smov 48
  %v718 = vld [vmem:[%s716] ss:$16 sm:%s717]
  %vm719 = vcmask 1045508
  %v720 = vsel %vm719, %v718, %v715
  %s721 = scalar_lea.vmem %s0, 266
  %s722 = smov 192
  %v723 = vld [vmem:[%s721] ss:$16 sm:%s722]
  %vm724 = vcmask 1047558
  %v725 = vsel %vm724, %v723, %v720
  %726 = vrot.lane.b32.xlu0 %v725, 64
  %v727 = vpop.permute.xlu0 %726
  %vm728 = vcmask 785920
  %s729 = scalar_lea.vmem %s1, 80
  %730 = vst.msk [vmem:[%s729] sm:$0xff] %vm728, %v727
  %s731 = scalar_lea.vmem %s0, 394
  %s732 = smov 3
  %v733 = vld [vmem:[%s731] ss:$16 sm:%s732]
  %s734 = scalar_lea.vmem %s0, 394
  %s735 = smov 12
  %v736 = vld [vmem:[%s734] ss:$16 sm:%s735]
  %vm737 = vcmask 1043458
  %v738 = vsel %vm737, %v736, %v733
  %s739 = scalar_lea.vmem %s0, 394
  %s740 = smov 48
  %v741 = vld [vmem:[%s739] ss:$16 sm:%s740]
  %vm742 = vcmask 1045508
  %v743 = vsel %vm742, %v741, %v738
  %s744 = scalar_lea.vmem %s0, 394
  %s745 = smov 192
  %v746 = vld [vmem:[%s744] ss:$16 sm:%s745]
  %vm747 = vcmask 1047558
  %v748 = vsel %vm747, %v746, %v743
  %749 = vrot.lane.b32.xlu0 %v748, 64
  %v750 = vpop.permute.xlu0 %749
  %vm751 = vcmask 785920
  %s752 = scalar_lea.vmem %s1, 112
  %753 = vst.msk [vmem:[%s752] sm:$0xff] %vm751, %v750
  %s754 = scalar_lea.vmem %s0, 14
  %s755 = smov 3
  %v756 = vld [vmem:[%s754] ss:$16 sm:%s755]
  %s757 = scalar_lea.vmem %s0, 14
  %s758 = smov 12
  %v759 = vld [vmem:[%s757] ss:$16 sm:%s758]
  %vm760 = vcmask 1043458
  %v761 = vsel %vm760, %v759, %v756
  %s762 = scalar_lea.vmem %s0, 14
  %s763 = smov 48
  %v764 = vld [vmem:[%s762] ss:$16 sm:%s763]
  %vm765 = vcmask 1045508
  %v766 = vsel %vm765, %v764, %v761
  %s767 = scalar_lea.vmem %s0, 14
  %s768 = smov 192
  %v769 = vld [vmem:[%s767] ss:$16 sm:%s768]
  %vm770 = vcmask 1047558
  %v771 = vsel %vm770, %v769, %v766
  %772 = vrot.lane.b32.xlu0 %v771, 64
  %v773 = vpop.permute.xlu0 %772
  %vm774 = vcmask 785920
  %s775 = scalar_lea.vmem %s1, 24
  %776 = vst.msk [vmem:[%s775] sm:$0xff] %vm774, %v773
  %s777 = scalar_lea.vmem %s0, 142
  %s778 = smov 3
  %v779 = vld [vmem:[%s777] ss:$16 sm:%s778]
  %s780 = scalar_lea.vmem %s0, 142
  %s781 = smov 12
  %v782 = vld [vmem:[%s780] ss:$16 sm:%s781]
  %vm783 = vcmask 1043458
  %v784 = vsel %vm783, %v782, %v779
  %s785 = scalar_lea.vmem %s0, 142
  %s786 = smov 48
  %v787 = vld [vmem:[%s785] ss:$16 sm:%s786]
  %vm788 = vcmask 1045508
  %v789 = vsel %vm788, %v787, %v784
  %s790 = scalar_lea.vmem %s0, 142
  %s791 = smov 192
  %v792 = vld [vmem:[%s790] ss:$16 sm:%s791]
  %vm793 = vcmask 1047558
  %v794 = vsel %vm793, %v792, %v789
  %795 = vrot.lane.b32.xlu0 %v794, 64
  %v796 = vpop.permute.xlu0 %795
  %vm797 = vcmask 785920
  %s798 = scalar_lea.vmem %s1, 56
  %799 = vst.msk [vmem:[%s798] sm:$0xff] %vm797, %v796
  %s800 = scalar_lea.vmem %s0, 270
  %s801 = smov 3
  %v802 = vld [vmem:[%s800] ss:$16 sm:%s801]
  %s803 = scalar_lea.vmem %s0, 270
  %s804 = smov 12
  %v805 = vld [vmem:[%s803] ss:$16 sm:%s804]
  %vm806 = vcmask 1043458
  %v807 = vsel %vm806, %v805, %v802
  %s808 = scalar_lea.vmem %s0, 270
  %s809 = smov 48
  %v810 = vld [vmem:[%s808] ss:$16 sm:%s809]
  %vm811 = vcmask 1045508
  %v812 = vsel %vm811, %v810, %v807
  %s813 = scalar_lea.vmem %s0, 270
  %s814 = smov 192
  %v815 = vld [vmem:[%s813] ss:$16 sm:%s814]
  %vm816 = vcmask 1047558
  %v817 = vsel %vm816, %v815, %v812
  %818 = vrot.lane.b32.xlu0 %v817, 64
  %v819 = vpop.permute.xlu0 %818
  %vm820 = vcmask 785920
  %s821 = scalar_lea.vmem %s1, 88
  %822 = vst.msk [vmem:[%s821] sm:$0xff] %vm820, %v819
  %s823 = scalar_lea.vmem %s0, 398
  %s824 = smov 3
  %v825 = vld [vmem:[%s823] ss:$16 sm:%s824]
  %s826 = scalar_lea.vmem %s0, 398
  %s827 = smov 12
  %v828 = vld [vmem:[%s826] ss:$16 sm:%s827]
  %vm829 = vcmask 1043458
  %v830 = vsel %vm829, %v828, %v825
  %s831 = scalar_lea.vmem %s0, 398
  %s832 = smov 48
  %v833 = vld [vmem:[%s831] ss:$16 sm:%s832]
  %vm834 = vcmask 1045508
  %v835 = vsel %vm834, %v833, %v830
  %s836 = scalar_lea.vmem %s0, 398
  %s837 = smov 192
  %v838 = vld [vmem:[%s836] ss:$16 sm:%s837]
  %vm839 = vcmask 1047558
  %v840 = vsel %vm839, %v838, %v835
  %841 = vrot.lane.b32.xlu0 %v840, 64
  %v842 = vpop.permute.xlu0 %841
  %vm843 = vcmask 785920
  %s844 = scalar_lea.vmem %s1, 120
  %845 = vst.msk [vmem:[%s844] sm:$0xff] %vm843, %v842
  %s846 = scalar_lea.vmem %s0, 1
  %s847 = smov 3
  %v848 = vld [vmem:[%s846] ss:$16 sm:%s847]
  %s849 = scalar_lea.vmem %s0, 1
  %s850 = smov 12
  %v851 = vld [vmem:[%s849] ss:$16 sm:%s850]
  %vm852 = vcmask 1043458
  %v853 = vsel %vm852, %v851, %v848
  %s854 = scalar_lea.vmem %s0, 1
  %s855 = smov 48
  %v856 = vld [vmem:[%s854] ss:$16 sm:%s855]
  %vm857 = vcmask 1045508
  %v858 = vsel %vm857, %v856, %v853
  %s859 = scalar_lea.vmem %s0, 1
  %s860 = smov 192
  %v861 = vld [vmem:[%s859] ss:$16 sm:%s860]
  %vm862 = vcmask 1047558
  %v863 = vsel %vm862, %v861, %v858
  %864 = vrot.lane.b32.xlu0 %v863, 32
  %v865 = vpop.permute.xlu0 %864
  %vm866 = vcmask 523520
  %867 = vst.msk [vmem:[%s1] sm:$0xff] %vm866, %v865
  %s868 = scalar_lea.vmem %s0, 129
  %s869 = smov 3
  %v870 = vld [vmem:[%s868] ss:$16 sm:%s869]
  %s871 = scalar_lea.vmem %s0, 129
  %s872 = smov 12
  %v873 = vld [vmem:[%s871] ss:$16 sm:%s872]
  %vm874 = vcmask 1043458
  %v875 = vsel %vm874, %v873, %v870
  %s876 = scalar_lea.vmem %s0, 129
  %s877 = smov 48
  %v878 = vld [vmem:[%s876] ss:$16 sm:%s877]
  %vm879 = vcmask 1045508
  %v880 = vsel %vm879, %v878, %v875
  %s881 = scalar_lea.vmem %s0, 129
  %s882 = smov 192
  %v883 = vld [vmem:[%s881] ss:$16 sm:%s882]
  %vm884 = vcmask 1047558
  %v885 = vsel %vm884, %v883, %v880
  %886 = vrot.lane.b32.xlu0 %v885, 32
  %v887 = vpop.permute.xlu0 %886
  %vm888 = vcmask 523520
  %s889 = scalar_lea.vmem %s1, 32
  %890 = vst.msk [vmem:[%s889] sm:$0xff] %vm888, %v887
  %s891 = scalar_lea.vmem %s0, 257
  %s892 = smov 3
  %v893 = vld [vmem:[%s891] ss:$16 sm:%s892]
  %s894 = scalar_lea.vmem %s0, 257
  %s895 = smov 12
  %v896 = vld [vmem:[%s894] ss:$16 sm:%s895]
  %vm897 = vcmask 1043458
  %v898 = vsel %vm897, %v896, %v893
  %s899 = scalar_lea.vmem %s0, 257
  %s900 = smov 48
  %v901 = vld [vmem:[%s899] ss:$16 sm:%s900]
  %vm902 = vcmask 1045508
  %v903 = vsel %vm902, %v901, %v898
  %s904 = scalar_lea.vmem %s0, 257
  %s905 = smov 192
  %v906 = vld [vmem:[%s904] ss:$16 sm:%s905]
  %vm907 = vcmask 1047558
  %v908 = vsel %vm907, %v906, %v903
  %909 = vrot.lane.b32.xlu0 %v908, 32
  %v910 = vpop.permute.xlu0 %909
  %vm911 = vcmask 523520
  %s912 = scalar_lea.vmem %s1, 64
  %913 = vst.msk [vmem:[%s912] sm:$0xff] %vm911, %v910
  %s914 = scalar_lea.vmem %s0, 385
  %s915 = smov 3
  %v916 = vld [vmem:[%s914] ss:$16 sm:%s915]
  %s917 = scalar_lea.vmem %s0, 385
  %s918 = smov 12
  %v919 = vld [vmem:[%s917] ss:$16 sm:%s918]
  %vm920 = vcmask 1043458
  %v921 = vsel %vm920, %v919, %v916
  %s922 = scalar_lea.vmem %s0, 385
  %s923 = smov 48
  %v924 = vld [vmem:[%s922] ss:$16 sm:%s923]
  %vm925 = vcmask 1045508
  %v926 = vsel %vm925, %v924, %v921
  %s927 = scalar_lea.vmem %s0, 385
  %s928 = smov 192
  %v929 = vld [vmem:[%s927] ss:$16 sm:%s928]
  %vm930 = vcmask 1047558
  %v931 = vsel %vm930, %v929, %v926
  %932 = vrot.lane.b32.xlu0 %v931, 32
  %v933 = vpop.permute.xlu0 %932
  %vm934 = vcmask 523520
  %s935 = scalar_lea.vmem %s1, 96
  %936 = vst.msk [vmem:[%s935] sm:$0xff] %vm934, %v933
  %s937 = scalar_lea.vmem %s0, 5
  %s938 = smov 3
  %v939 = vld [vmem:[%s937] ss:$16 sm:%s938]
  %s940 = scalar_lea.vmem %s0, 5
  %s941 = smov 12
  %v942 = vld [vmem:[%s940] ss:$16 sm:%s941]
  %vm943 = vcmask 1043458
  %v944 = vsel %vm943, %v942, %v939
  %s945 = scalar_lea.vmem %s0, 5
  %s946 = smov 48
  %v947 = vld [vmem:[%s945] ss:$16 sm:%s946]
  %vm948 = vcmask 1045508
  %v949 = vsel %vm948, %v947, %v944
  %s950 = scalar_lea.vmem %s0, 5
  %s951 = smov 192
  %v952 = vld [vmem:[%s950] ss:$16 sm:%s951]
  %vm953 = vcmask 1047558
  %v954 = vsel %vm953, %v952, %v949
  %955 = vrot.lane.b32.xlu0 %v954, 32
  %v956 = vpop.permute.xlu0 %955
  %vm957 = vcmask 523520
  %s958 = scalar_lea.vmem %s1, 8
  %959 = vst.msk [vmem:[%s958] sm:$0xff] %vm957, %v956
  %s960 = scalar_lea.vmem %s0, 133
  %s961 = smov 3
  %v962 = vld [vmem:[%s960] ss:$16 sm:%s961]
  %s963 = scalar_lea.vmem %s0, 133
  %s964 = smov 12
  %v965 = vld [vmem:[%s963] ss:$16 sm:%s964]
  %vm966 = vcmask 1043458
  %v967 = vsel %vm966, %v965, %v962
  %s968 = scalar_lea.vmem %s0, 133
  %s969 = smov 48
  %v970 = vld [vmem:[%s968] ss:$16 sm:%s969]
  %vm971 = vcmask 1045508
  %v972 = vsel %vm971, %v970, %v967
  %s973 = scalar_lea.vmem %s0, 133
  %s974 = smov 192
  %v975 = vld [vmem:[%s973] ss:$16 sm:%s974]
  %vm976 = vcmask 1047558
  %v977 = vsel %vm976, %v975, %v972
  %978 = vrot.lane.b32.xlu0 %v977, 32
  %v979 = vpop.permute.xlu0 %978
  %vm980 = vcmask 523520
  %s981 = scalar_lea.vmem %s1, 40
  %982 = vst.msk [vmem:[%s981] sm:$0xff] %vm980, %v979
  %s983 = scalar_lea.vmem %s0, 261
  %s984 = smov 3
  %v985 = vld [vmem:[%s983] ss:$16 sm:%s984]
  %s986 = scalar_lea.vmem %s0, 261
  %s987 = smov 12
  %v988 = vld [vmem:[%s986] ss:$16 sm:%s987]
  %vm989 = vcmask 1043458
  %v990 = vsel %vm989, %v988, %v985
  %s991 = scalar_lea.vmem %s0, 261
  %s992 = smov 48
  %v993 = vld [vmem:[%s991] ss:$16 sm:%s992]
  %vm994 = vcmask 1045508
  %v995 = vsel %vm994, %v993, %v990
  %s996 = scalar_lea.vmem %s0, 261
  %s997 = smov 192
  %v998 = vld [vmem:[%s996] ss:$16 sm:%s997]
  %vm999 = vcmask 1047558
  %v1000 = vsel %vm999, %v998, %v995
  %1001 = vrot.lane.b32.xlu0 %v1000, 32
  %v1002 = vpop.permute.xlu0 %1001
  %vm1003 = vcmask 523520
  %s1004 = scalar_lea.vmem %s1, 72
  %1005 = vst.msk [vmem:[%s1004] sm:$0xff] %vm1003, %v1002
  %s1006 = scalar_lea.vmem %s0, 389
  %s1007 = smov 3
  %v1008 = vld [vmem:[%s1006] ss:$16 sm:%s1007]
  %s1009 = scalar_lea.vmem %s0, 389
  %s1010 = smov 12
  %v1011 = vld [vmem:[%s1009] ss:$16 sm:%s1010]
  %vm1012 = vcmask 1043458
  %v1013 = vsel %vm1012, %v1011, %v1008
  %s1014 = scalar_lea.vmem %s0, 389
  %s1015 = smov 48
  %v1016 = vld [vmem:[%s1014] ss:$16 sm:%s1015]
  %vm1017 = vcmask 1045508
  %v1018 = vsel %vm1017, %v1016, %v1013
  %s1019 = scalar_lea.vmem %s0, 389
  %s1020 = smov 192
  %v1021 = vld [vmem:[%s1019] ss:$16 sm:%s1020]
  %vm1022 = vcmask 1047558
  %v1023 = vsel %vm1022, %v1021, %v1018
  %1024 = vrot.lane.b32.xlu0 %v1023, 32
  %v1025 = vpop.permute.xlu0 %1024
  %vm1026 = vcmask 523520
  %s1027 = scalar_lea.vmem %s1, 104
  %1028 = vst.msk [vmem:[%s1027] sm:$0xff] %vm1026, %v1025
  %s1029 = scalar_lea.vmem %s0, 9
  %s1030 = smov 3
  %v1031 = vld [vmem:[%s1029] ss:$16 sm:%s1030]
  %s1032 = scalar_lea.vmem %s0, 9
  %s1033 = smov 12
  %v1034 = vld [vmem:[%s1032] ss:$16 sm:%s1033]
  %vm1035 = vcmask 1043458
  %v1036 = vsel %vm1035, %v1034, %v1031
  %s1037 = scalar_lea.vmem %s0, 9
  %s1038 = smov 48
  %v1039 = vld [vmem:[%s1037] ss:$16 sm:%s1038]
  %vm1040 = vcmask 1045508
  %v1041 = vsel %vm1040, %v1039, %v1036
  %s1042 = scalar_lea.vmem %s0, 9
  %s1043 = smov 192
  %v1044 = vld [vmem:[%s1042] ss:$16 sm:%s1043]
  %vm1045 = vcmask 1047558
  %v1046 = vsel %vm1045, %v1044, %v1041
  %1047 = vrot.lane.b32.xlu0 %v1046, 32
  %v1048 = vpop.permute.xlu0 %1047
  %vm1049 = vcmask 523520
  %s1050 = scalar_lea.vmem %s1, 16
  %1051 = vst.msk [vmem:[%s1050] sm:$0xff] %vm1049, %v1048
  %s1052 = scalar_lea.vmem %s0, 137
  %s1053 = smov 3
  %v1054 = vld [vmem:[%s1052] ss:$16 sm:%s1053]
  %s1055 = scalar_lea.vmem %s0, 137
  %s1056 = smov 12
  %v1057 = vld [vmem:[%s1055] ss:$16 sm:%s1056]
  %vm1058 = vcmask 1043458
  %v1059 = vsel %vm1058, %v1057, %v1054
  %s1060 = scalar_lea.vmem %s0, 137
  %s1061 = smov 48
  %v1062 = vld [vmem:[%s1060] ss:$16 sm:%s1061]
  %vm1063 = vcmask 1045508
  %v1064 = vsel %vm1063, %v1062, %v1059
  %s1065 = scalar_lea.vmem %s0, 137
  %s1066 = smov 192
  %v1067 = vld [vmem:[%s1065] ss:$16 sm:%s1066]
  %vm1068 = vcmask 1047558
  %v1069 = vsel %vm1068, %v1067, %v1064
  %1070 = vrot.lane.b32.xlu0 %v1069, 32
  %v1071 = vpop.permute.xlu0 %1070
  %vm1072 = vcmask 523520
  %s1073 = scalar_lea.vmem %s1, 48
  %1074 = vst.msk [vmem:[%s1073] sm:$0xff] %vm1072, %v1071
  %s1075 = scalar_lea.vmem %s0, 265
  %s1076 = smov 3
  %v1077 = vld [vmem:[%s1075] ss:$16 sm:%s1076]
  %s1078 = scalar_lea.vmem %s0, 265
  %s1079 = smov 12
  %v1080 = vld [vmem:[%s1078] ss:$16 sm:%s1079]
  %vm1081 = vcmask 1043458
  %v1082 = vsel %vm1081, %v1080, %v1077
  %s1083 = scalar_lea.vmem %s0, 265
  %s1084 = smov 48
  %v1085 = vld [vmem:[%s1083] ss:$16 sm:%s1084]
  %vm1086 = vcmask 1045508
  %v1087 = vsel %vm1086, %v1085, %v1082
  %s1088 = scalar_lea.vmem %s0, 265
  %s1089 = smov 192
  %v1090 = vld [vmem:[%s1088] ss:$16 sm:%s1089]
  %vm1091 = vcmask 1047558
  %v1092 = vsel %vm1091, %v1090, %v1087
  %1093 = vrot.lane.b32.xlu0 %v1092, 32
  %v1094 = vpop.permute.xlu0 %1093
  %vm1095 = vcmask 523520
  %s1096 = scalar_lea.vmem %s1, 80
  %1097 = vst.msk [vmem:[%s1096] sm:$0xff] %vm1095, %v1094
  %s1098 = scalar_lea.vmem %s0, 393
  %s1099 = smov 3
  %v1100 = vld [vmem:[%s1098] ss:$16 sm:%s1099]
  %s1101 = scalar_lea.vmem %s0, 393
  %s1102 = smov 12
  %v1103 = vld [vmem:[%s1101] ss:$16 sm:%s1102]
  %vm1104 = vcmask 1043458
  %v1105 = vsel %vm1104, %v1103, %v1100
  %s1106 = scalar_lea.vmem %s0, 393
  %s1107 = smov 48
  %v1108 = vld [vmem:[%s1106] ss:$16 sm:%s1107]
  %vm1109 = vcmask 1045508
  %v1110 = vsel %vm1109, %v1108, %v1105
  %s1111 = scalar_lea.vmem %s0, 393
  %s1112 = smov 192
  %v1113 = vld [vmem:[%s1111] ss:$16 sm:%s1112]
  %vm1114 = vcmask 1047558
  %v1115 = vsel %vm1114, %v1113, %v1110
  %1116 = vrot.lane.b32.xlu0 %v1115, 32
  %v1117 = vpop.permute.xlu0 %1116
  %vm1118 = vcmask 523520
  %s1119 = scalar_lea.vmem %s1, 112
  %1120 = vst.msk [vmem:[%s1119] sm:$0xff] %vm1118, %v1117
  %s1121 = scalar_lea.vmem %s0, 13
  %s1122 = smov 3
  %v1123 = vld [vmem:[%s1121] ss:$16 sm:%s1122]
  %s1124 = scalar_lea.vmem %s0, 13
  %s1125 = smov 12
  %v1126 = vld [vmem:[%s1124] ss:$16 sm:%s1125]
  %vm1127 = vcmask 1043458
  %v1128 = vsel %vm1127, %v1126, %v1123
  %s1129 = scalar_lea.vmem %s0, 13
  %s1130 = smov 48
  %v1131 = vld [vmem:[%s1129] ss:$16 sm:%s1130]
  %vm1132 = vcmask 1045508
  %v1133 = vsel %vm1132, %v1131, %v1128
  %s1134 = scalar_lea.vmem %s0, 13
  %s1135 = smov 192
  %v1136 = vld [vmem:[%s1134] ss:$16 sm:%s1135]
  %vm1137 = vcmask 1047558
  %v1138 = vsel %vm1137, %v1136, %v1133
  %1139 = vrot.lane.b32.xlu0 %v1138, 32
  %v1140 = vpop.permute.xlu0 %1139
  %vm1141 = vcmask 523520
  %s1142 = scalar_lea.vmem %s1, 24
  %1143 = vst.msk [vmem:[%s1142] sm:$0xff] %vm1141, %v1140
  %s1144 = scalar_lea.vmem %s0, 141
  %s1145 = smov 3
  %v1146 = vld [vmem:[%s1144] ss:$16 sm:%s1145]
  %s1147 = scalar_lea.vmem %s0, 141
  %s1148 = smov 12
  %v1149 = vld [vmem:[%s1147] ss:$16 sm:%s1148]
  %vm1150 = vcmask 1043458
  %v1151 = vsel %vm1150, %v1149, %v1146
  %s1152 = scalar_lea.vmem %s0, 141
  %s1153 = smov 48
  %v1154 = vld [vmem:[%s1152] ss:$16 sm:%s1153]
  %vm1155 = vcmask 1045508
  %v1156 = vsel %vm1155, %v1154, %v1151
  %s1157 = scalar_lea.vmem %s0, 141
  %s1158 = smov 192
  %v1159 = vld [vmem:[%s1157] ss:$16 sm:%s1158]
  %vm1160 = vcmask 1047558
  %v1161 = vsel %vm1160, %v1159, %v1156
  %1162 = vrot.lane.b32.xlu0 %v1161, 32
  %v1163 = vpop.permute.xlu0 %1162
  %vm1164 = vcmask 523520
  %s1165 = scalar_lea.vmem %s1, 56
  %1166 = vst.msk [vmem:[%s1165] sm:$0xff] %vm1164, %v1163
  %s1167 = scalar_lea.vmem %s0, 269
  %s1168 = smov 3
  %v1169 = vld [vmem:[%s1167] ss:$16 sm:%s1168]
  %s1170 = scalar_lea.vmem %s0, 269
  %s1171 = smov 12
  %v1172 = vld [vmem:[%s1170] ss:$16 sm:%s1171]
  %vm1173 = vcmask 1043458
  %v1174 = vsel %vm1173, %v1172, %v1169
  %s1175 = scalar_lea.vmem %s0, 269
  %s1176 = smov 48
  %v1177 = vld [vmem:[%s1175] ss:$16 sm:%s1176]
  %vm1178 = vcmask 1045508
  %v1179 = vsel %vm1178, %v1177, %v1174
  %s1180 = scalar_lea.vmem %s0, 269
  %s1181 = smov 192
  %v1182 = vld [vmem:[%s1180] ss:$16 sm:%s1181]
  %vm1183 = vcmask 1047558
  %v1184 = vsel %vm1183, %v1182, %v1179
  %1185 = vrot.lane.b32.xlu0 %v1184, 32
  %v1186 = vpop.permute.xlu0 %1185
  %vm1187 = vcmask 523520
  %s1188 = scalar_lea.vmem %s1, 88
  %1189 = vst.msk [vmem:[%s1188] sm:$0xff] %vm1187, %v1186
  %s1190 = scalar_lea.vmem %s0, 397
  %s1191 = smov 3
  %v1192 = vld [vmem:[%s1190] ss:$16 sm:%s1191]
  %s1193 = scalar_lea.vmem %s0, 397
  %s1194 = smov 12
  %v1195 = vld [vmem:[%s1193] ss:$16 sm:%s1194]
  %vm1196 = vcmask 1043458
  %v1197 = vsel %vm1196, %v1195, %v1192
  %s1198 = scalar_lea.vmem %s0, 397
  %s1199 = smov 48
  %v1200 = vld [vmem:[%s1198] ss:$16 sm:%s1199]
  %vm1201 = vcmask 1045508
  %v1202 = vsel %vm1201, %v1200, %v1197
  %s1203 = scalar_lea.vmem %s0, 397
  %s1204 = smov 192
  %v1205 = vld [vmem:[%s1203] ss:$16 sm:%s1204]
  %vm1206 = vcmask 1047558
  %v1207 = vsel %vm1206, %v1205, %v1202
  %1208 = vrot.lane.b32.xlu0 %v1207, 32
  %v1209 = vpop.permute.xlu0 %1208
  %vm1210 = vcmask 523520
  %s1211 = scalar_lea.vmem %s1, 120
  %1212 = vst.msk [vmem:[%s1211] sm:$0xff] %vm1210, %v1209

// kernel: pixelcnn_resblock.1
$region0: #{pixelcnn_resblock.1}
  #allocation0 [shape = 'u32[]', space=smem, size = 0x4, offset = 0x4, fixed_abs, tag = 'smem constant byte address 0x4 - core index']
  #allocation1 [shape = 'u32[144,128]{1,0:T(1,128)}', space=vmem, size = 0x12000, scoped, tag = 'internal scratch']
  %s0 = inlined_call_operand.vmem [shape: f32[32,512], index: 0, kind: input, shape index: {}]
  %s1 = inlined_call_operand.vmem [shape: f32[2,32,32], index: 1, kind: input, shape index: {}]
  %s2 = inlined_call_operand.vmem [shape: f32[2,512,512], index: 2, kind: input, shape index: {}]
  %s3 = inlined_call_operand.vmem [shape: f32[2,512,512], index: 3, kind: input, shape index: {}]
  %s4 = inlined_call_operand.vmem [shape: f32[512,32], index: 4, kind: input, shape index: {}]
  %s5 = inlined_call_operand.vmem [shape: f32[32,512], index: 5, kind: input, shape index: {}]
  %s6 = inlined_call_operand.vmem [shape: f32[1,32], index: 6, kind: input, shape index: {}]
  %s7 = inlined_call_operand.vmem [shape: f32[1,32], index: 7, kind: input, shape index: {}]
  %s8 = inlined_call_operand.vmem [shape: f32[32,512], index: 8, kind: output, shape index: {}]
  %s9 = sld [smem:[#allocation0]]
  $region42: #{pixelcnn_resblock.1} parent=0
    _
  %s11 = ssub.s32 1, %s9
  %s12 = scalar_select 0, %s11, %s9
  // Predicated region
  $region2: #{pixelcnn_resblock.1} parent=0 // pred_check
    _
  $region3: #{pixelcnn_resblock.1} parent=0 // pred_check_branch
    %14 = sbr.rel (0) target = $region5
  $region4: #{pixelcnn_resblock.1} parent=0 // pred_region
    _
  $region5: #{pixelcnn_resblock.1} parent=0 // pred_fallthru
    _
  // Predicated region
  $region6: #{pixelcnn_resblock.1} parent=0 // pred_check
    _
  $region7: #{pixelcnn_resblock.1} parent=0 // pred_check_branch
    %16 = sbr.rel (0) target = $region9
  $region8: #{pixelcnn_resblock.1} parent=0 // pred_region
    _
  $region9: #{pixelcnn_resblock.1} parent=0 // pred_fallthru
    _
  // Predicated region
  $region10: #{pixelcnn_resblock.1} parent=0 // pred_check
    _
  $region11: #{pixelcnn_resblock.1} parent=0 // pred_check_branch
    %18 = sbr.rel (0) target = $region13
  $region12: #{pixelcnn_resblock.1} parent=0 // pred_region
    _
  $region13: #{pixelcnn_resblock.1} parent=0 // pred_fallthru
    _
  // Predicated region
  $region14: #{pixelcnn_resblock.1} parent=0 // pred_check
    _
  $region15: #{pixelcnn_resblock.1} parent=0 // pred_check_branch
    %20 = sbr.rel (0) target = $region17
  $region16: #{pixelcnn_resblock.1} parent=0 // pred_region
    _
  $region17: #{pixelcnn_resblock.1} parent=0 // pred_fallthru
    _
  // Predicated region
  $region18: #{pixelcnn_resblock.1} parent=0 // pred_check
    _
  $region19: #{pixelcnn_resblock.1} parent=0 // pred_check_branch
    %22 = sbr.rel (0) target = $region21
  $region20: #{pixelcnn_resblock.1} parent=0 // pred_region
    _
  $region21: #{pixelcnn_resblock.1} parent=0 // pred_fallthru
    _
  // Predicated region
  $region22: #{pixelcnn_resblock.1} parent=0 // pred_check
    _
  $region23: #{pixelcnn_resblock.1} parent=0 // pred_check_branch
    %24 = sbr.rel (0) target = $region25
  $region24: #{pixelcnn_resblock.1} parent=0 // pred_region
    _
  $region25: #{pixelcnn_resblock.1} parent=0 // pred_fallthru
    _
  // Predicated region
  $region26: #{pixelcnn_resblock.1} parent=0 // pred_check
    _
  $region27: #{pixelcnn_resblock.1} parent=0 // pred_check_branch
    %26 = sbr.rel (0) target = $region29
  $region28: #{pixelcnn_resblock.1} parent=0 // pred_region
    _
  $region29: #{pixelcnn_resblock.1} parent=0 // pred_fallthru
    _
  // Predicated region
  $region30: #{pixelcnn_resblock.1} parent=0 // pred_check
    _
  $region31: #{pixelcnn_resblock.1} parent=0 // pred_check_branch
    %28 = sbr.rel (0) target = $region33
  $region32: #{pixelcnn_resblock.1} parent=0 // pred_region
    _
  $region33: #{pixelcnn_resblock.1} parent=0 // pred_fallthru
    _
  %v29 = vld [vmem:[%s0] sm:$0xff]
  %v30 = vld [vmem:[%s0 + $0x8] sm:$0xff]
  %v31 = vld [vmem:[%s0 + $0x10] sm:$0xff]
  %v32 = vld [vmem:[%s0 + $0x18] sm:$0xff]
  %v33 = vld [vmem:[%s0 + $0x20] sm:$0xff]
  %v34 = vld [vmem:[%s0 + $0x28] sm:$0xff]
  %v35 = vld [vmem:[%s0 + $0x30] sm:$0xff]
  %v36 = vld [vmem:[%s0 + $0x38] sm:$0xff]
  %v37 = vld [vmem:[%s0 + $0x40] sm:$0xff]
  %v38 = vld [vmem:[%s0 + $0x48] sm:$0xff]
  %v39 = vld [vmem:[%s0 + $0x50] sm:$0xff]
  %v40 = vld [vmem:[%s0 + $0x58] sm:$0xff]
  %v41 = vld [vmem:[%s0 + $0x60] sm:$0xff]
  %v42 = vld [vmem:[%s0 + $0x68] sm:$0xff]
  %v43 = vld [vmem:[%s0 + $0x70] sm:$0xff]
  %v44 = vld [vmem:[%s0 + $0x78] sm:$0xff]
  %v45 = vld [vmem:[%s1] sm:$0xff]
  %v46 = vld [vmem:[%s1 + $0x8] sm:$0xff]
  %v47 = vld [vmem:[%s1 + $0x10] sm:$0xff]
  %v48 = vld [vmem:[%s1 + $0x18] sm:$0xff]
  %vm49 = vcmask 261120
  %v51 = vsel %vm49, %v45, 0
  %v54 = vsel %vm49, %v46, 0
  %v57 = vsel %vm49, %v47, 0
  %v60 = vsel %vm49, %v48, 0
  %62 = vmatprep.subr.mxu0 0.0
  %63 = vmatpush1.msra.mxu0 0.0
  %64 = vmatprep.subr.mxu0 0.0
  %65 = vmatpush1.msra.mxu0 0.0
  %66 = vmatprep.subr.mxu0 0.0
  %67 = vmatpush1.msra.mxu0 0.0
  %68 = vmatprep.subr.mxu0 0.0
  %69 = vmatpush1.msra.mxu0 0.0
  %70 = vmatprep.subr.mxu0 0.0
  %71 = vmatpush1.msra.mxu0 0.0
  %72 = vmatprep.subr.mxu0 0.0
  %73 = vmatpush1.msra.mxu0 0.0
  %74 = vmatprep.subr.mxu0 0.0
  %75 = vmatpush1.msra.mxu0 0.0
  %76 = vmatprep.subr.mxu0 0.0
  %77 = vmatpush1.msra.mxu0 0.0
  %78 = vmatprep.subr.mxu0 0.0
  %79 = vmatpush1.msra.mxu0 0.0
  %80 = vmatprep.subr.mxu0 0.0
  %81 = vmatpush1.msra.mxu0 0.0
  %82 = vmatprep.subr.mxu0 0.0
  %83 = vmatpush1.msra.mxu0 0.0
  %84 = vmatprep.subr.mxu0 0.0
  %85 = vmatpush1.msra.mxu0 0.0
  %86 = vmatprep.subr.mxu0 %v42
  %87 = vmatpush1.msra.mxu0 %v41
  %88 = vmatprep.subr.mxu0 %v38
  %89 = vmatpush1.msra.mxu0 %v37
  %90 = vmatprep.subr.mxu0 %v34
  %91 = vmatpush1.msra.mxu0 %v33
  %92 = vmatprep.subr.mxu0 %v30
  %93 = vmatpush1.msra.mxu0 %v29
  %94 = vmatprep.subr.mxu0 0.0
  %95 = vmatpush2.msra.mxu0 0.0
  %96 = vmatprep.subr.mxu0 0.0
  %97 = vmatpush2.msra.mxu0 0.0
  %98 = vmatprep.subr.mxu0 0.0
  %99 = vmatpush2.msra.mxu0 0.0
  %100 = vmatprep.subr.mxu0 0.0
  %101 = vmatpush2.msra.mxu0 0.0
  %102 = vmatprep.subr.mxu0 0.0
  %103 = vmatpush2.msra.mxu0 0.0
  %104 = vmatprep.subr.mxu0 0.0
  %105 = vmatpush2.msra.mxu0 0.0
  %106 = vmatprep.subr.mxu0 0.0
  %107 = vmatpush2.msra.mxu0 0.0
  %108 = vmatprep.subr.mxu0 0.0
  %109 = vmatpush2.msra.mxu0 0.0
  %110 = vmatprep.subr.mxu0 0.0
  %111 = vmatpush2.msra.mxu0 0.0
  %112 = vmatprep.subr.mxu0 0.0
  %113 = vmatpush2.msra.mxu0 0.0
  %114 = vmatprep.subr.mxu0 0.0
  %115 = vmatpush2.msra.mxu0 0.0
  %116 = vmatprep.subr.mxu0 0.0
  %117 = vmatpush2.msra.mxu0 0.0
  %118 = vmatprep.subr.mxu0 0.0
  %119 = vmatpush2.msra.mxu0 0.0
  %120 = vmatprep.subr.mxu0 0.0
  %121 = vmatpush2.msra.mxu0 0.0
  %122 = vmatprep.subr.mxu0 0.0
  %123 = vmatpush2.msra.mxu0 0.0
  %124 = vmatprep.subr.mxu0 0.0
  %125 = vmatpush2.msra.mxu0 0.0
  %126 = vmatprep.mubr.f32.mxu0 0.0
  %127 = vmatmul.mubr.f32.gmra.mxu0 %v51
  %v128 = vpop.f32.mrf.mxu0
  %v129 = vadd.f32 0.0, %v128
  %v130 = vpop.f32.mrf.mxu0
  %v131 = vadd.f32 0.0, %v130
  %132 = vmatprep.mubr.f32.mxu0 0.0
  %133 = vmatmul.mubr.f32.gmra.mxu0 %v54
  %v134 = vpop.f32.mrf.mxu0
  %v135 = vadd.f32 0.0, %v134
  %v136 = vpop.f32.mrf.mxu0
  %v137 = vadd.f32 0.0, %v136
  %138 = vmatprep.mubr.f32.mxu0 0.0
  %139 = vmatmul.mubr.f32.gmra.mxu0 %v57
  %v140 = vpop.f32.mrf.mxu0
  %v141 = vadd.f32 0.0, %v140
  %v142 = vpop.f32.mrf.mxu0
  %v143 = vadd.f32 0.0, %v142
  %144 = vmatprep.mubr.f32.mxu0 0.0
  %145 = vmatmul.mubr.f32.gmra.mxu0 %v60
  %v146 = vpop.f32.mrf.mxu0
  %v147 = vadd.f32 0.0, %v146
  %v148 = vpop.f32.mrf.mxu0
  %v149 = vadd.f32 0.0, %v148
  %150 = vdwg.mxu0
  %151 = vmatprep.subr.mxu0 0.0
  %152 = vmatpush1.msra.mxu0 0.0
  %153 = vmatprep.subr.mxu0 0.0
  %154 = vmatpush1.msra.mxu0 0.0
  %155 = vmatprep.subr.mxu0 0.0
  %156 = vmatpush1.msra.mxu0 0.0
  %157 = vmatprep.subr.mxu0 0.0
  %158 = vmatpush1.msra.mxu0 0.0
  %159 = vmatprep.subr.mxu0 0.0
  %160 = vmatpush1.msra.mxu0 0.0
  %161 = vmatprep.subr.mxu0 0.0
  %162 = vmatpush1.msra.mxu0 0.0
  %163 = vmatprep.subr.mxu0 0.0
  %164 = vmatpush1.msra.mxu0 0.0
  %165 = vmatprep.subr.mxu0 0.0
  %166 = vmatpush1.msra.mxu0 0.0
  %167 = vmatprep.subr.mxu0 0.0
  %168 = vmatpush1.msra.mxu0 0.0
  %169 = vmatprep.subr.mxu0 0.0
  %170 = vmatpush1.msra.mxu0 0.0
  %171 = vmatprep.subr.mxu0 0.0
  %172 = vmatpush1.msra.mxu0 0.0
  %173 = vmatprep.subr.mxu0 0.0
  %174 = vmatpush1.msra.mxu0 0.0
  %175 = vmatprep.subr.mxu0 %v44
  %176 = vmatpush1.msra.mxu0 %v43
  %177 = vmatprep.subr.mxu0 %v40
  %178 = vmatpush1.msra.mxu0 %v39
  %179 = vmatprep.subr.mxu0 %v36
  %180 = vmatpush1.msra.mxu0 %v35
  %181 = vmatprep.subr.mxu0 %v32
  %182 = vmatpush1.msra.mxu0 %v31
  %183 = vmatprep.subr.mxu0 0.0
  %184 = vmatpush2.msra.mxu0 0.0
  %185 = vmatprep.subr.mxu0 0.0
  %186 = vmatpush2.msra.mxu0 0.0
  %187 = vmatprep.subr.mxu0 0.0
  %188 = vmatpush2.msra.mxu0 0.0
  %189 = vmatprep.subr.mxu0 0.0
  %190 = vmatpush2.msra.mxu0 0.0
  %191 = vmatprep.subr.mxu0 0.0
  %192 = vmatpush2.msra.mxu0 0.0
  %193 = vmatprep.subr.mxu0 0.0
  %194 = vmatpush2.msra.mxu0 0.0
  %195 = vmatprep.subr.mxu0 0.0
  %196 = vmatpush2.msra.mxu0 0.0
  %197 = vmatprep.subr.mxu0 0.0
  %198 = vmatpush2.msra.mxu0 0.0
  %199 = vmatprep.subr.mxu0 0.0
  %200 = vmatpush2.msra.mxu0 0.0
  %201 = vmatprep.subr.mxu0 0.0
  %202 = vmatpush2.msra.mxu0 0.0
  %203 = vmatprep.subr.mxu0 0.0
  %204 = vmatpush2.msra.mxu0 0.0
  %205 = vmatprep.subr.mxu0 0.0
  %206 = vmatpush2.msra.mxu0 0.0
  %207 = vmatprep.subr.mxu0 0.0
  %208 = vmatpush2.msra.mxu0 0.0
  %209 = vmatprep.subr.mxu0 0.0
  %210 = vmatpush2.msra.mxu0 0.0
  %211 = vmatprep.subr.mxu0 0.0
  %212 = vmatpush2.msra.mxu0 0.0
  %213 = vmatprep.subr.mxu0 0.0
  %214 = vmatpush2.msra.mxu0 0.0
  %215 = vmatprep.mubr.f32.mxu0 0.0
  %216 = vmatmul.mubr.f32.gmra.mxu0 %v51
  %v217 = vpop.f32.mrf.mxu0
  %v218 = vadd.f32 0.0, %v217
  %v219 = vpop.f32.mrf.mxu0
  %v220 = vadd.f32 0.0, %v219
  %221 = vmatprep.mubr.f32.mxu0 0.0
  %222 = vmatmul.mubr.f32.gmra.mxu0 %v54
  %v223 = vpop.f32.mrf.mxu0
  %v224 = vadd.f32 0.0, %v223
  %v225 = vpop.f32.mrf.mxu0
  %v226 = vadd.f32 0.0, %v225
  %227 = vmatprep.mubr.f32.mxu0 0.0
  %228 = vmatmul.mubr.f32.gmra.mxu0 %v57
  %v229 = vpop.f32.mrf.mxu0
  %v230 = vadd.f32 0.0, %v229
  %v231 = vpop.f32.mrf.mxu0
  %v232 = vadd.f32 0.0, %v231
  %233 = vmatprep.mubr.f32.mxu0 0.0
  %234 = vmatmul.mubr.f32.gmra.mxu0 %v60
  %v235 = vpop.f32.mrf.mxu0
  %v236 = vadd.f32 0.0, %v235
  %v237 = vpop.f32.mrf.mxu0
  %v238 = vadd.f32 0.0, %v237
  %239 = vdwg.mxu0
  %v240 = vld [vmem:[%s2] sm:$0xff]
  %v241 = vld [vmem:[%s2 + $0x8] sm:$0xff]
  %v242 = vld [vmem:[%s2 + $0x10] sm:$0xff]
  %v243 = vld [vmem:[%s2 + $0x18] sm:$0xff]
  %v244 = vld [vmem:[%s2 + $0x20] sm:$0xff]
  %v245 = vld [vmem:[%s2 + $0x28] sm:$0xff]
  %v246 = vld [vmem:[%s2 + $0x30] sm:$0xff]
  %v247 = vld [vmem:[%s2 + $0x38] sm:$0xff]
  %v248 = vld [vmem:[%s2 + $0x40] sm:$0xff]
  %v249 = vld [vmem:[%s2 + $0x48] sm:$0xff]
  %v250 = vld [vmem:[%s2 + $0x50] sm:$0xff]
  %v251 = vld [vmem:[%s2 + $0x58] sm:$0xff]
  %v252 = vld [vmem:[%s2 + $0x60] sm:$0xff]
  %v253 = vld [vmem:[%s2 + $0x68] sm:$0xff]
  %v254 = vld [vmem:[%s2 + $0x70] sm:$0xff]
  %v255 = vld [vmem:[%s2 + $0x78] sm:$0xff]
  %v256 = vld [vmem:[%s2 + $0x80] sm:$0xff]
  %v257 = vld [vmem:[%s2 + $0x88] sm:$0xff]
  %v258 = vld [vmem:[%s2 + $0x90] sm:$0xff]
  %v259 = vld [vmem:[%s2 + $0x98] sm:$0xff]
  %v260 = vld [vmem:[%s2 + $0xa0] sm:$0xff]
  %v261 = vld [vmem:[%s2 + $0xa8] sm:$0xff]
  %v262 = vld [vmem:[%s2 + $0xb0] sm:$0xff]
  %v263 = vld [vmem:[%s2 + $0xb8] sm:$0xff]
  %v264 = vld [vmem:[%s2 + $0xc0] sm:$0xff]
  %v265 = vld [vmem:[%s2 + $0xc8] sm:$0xff]
  %v266 = vld [vmem:[%s2 + $0xd0] sm:$0xff]
  %v267 = vld [vmem:[%s2 + $0xd8] sm:$0xff]
  %v268 = vld [vmem:[%s2 + $0xe0] sm:$0xff]
  %v269 = vld [vmem:[%s2 + $0xe8] sm:$0xff]
  %v270 = vld [vmem:[%s2 + $0xf0] sm:$0xff]
  %v271 = vld [vmem:[%s2 + $0xf8] sm:$0xff]
  %v272 = vld [vmem:[%s2 + $0x100] sm:$0xff]
  %v273 = vld [vmem:[%s2 + $0x108] sm:$0xff]
  %v274 = vld [vmem:[%s2 + $0x110] sm:$0xff]
  %v275 = vld [vmem:[%s2 + $0x118] sm:$0xff]
  %v276 = vld [vmem:[%s2 + $0x120] sm:$0xff]
  %v277 = vld [vmem:[%s2 + $0x128] sm:$0xff]
  %v278 = vld [vmem:[%s2 + $0x130] sm:$0xff]
  %v279 = vld [vmem:[%s2 + $0x138] sm:$0xff]
  %v280 = vld [vmem:[%s2 + $0x140] sm:$0xff]
  %v281 = vld [vmem:[%s2 + $0x148] sm:$0xff]
  %v282 = vld [vmem:[%s2 + $0x150] sm:$0xff]
  %v283 = vld [vmem:[%s2 + $0x158] sm:$0xff]
  %v284 = vld [vmem:[%s2 + $0x160] sm:$0xff]
  %v285 = vld [vmem:[%s2 + $0x168] sm:$0xff]
  %v286 = vld [vmem:[%s2 + $0x170] sm:$0xff]
  %v287 = vld [vmem:[%s2 + $0x178] sm:$0xff]
  %v288 = vld [vmem:[%s2 + $0x180] sm:$0xff]
  %v289 = vld [vmem:[%s2 + $0x188] sm:$0xff]
  %v290 = vld [vmem:[%s2 + $0x190] sm:$0xff]
  %v291 = vld [vmem:[%s2 + $0x198] sm:$0xff]
  %v292 = vld [vmem:[%s2 + $0x1a0] sm:$0xff]
  %v293 = vld [vmem:[%s2 + $0x1a8] sm:$0xff]
  %v294 = vld [vmem:[%s2 + $0x1b0] sm:$0xff]
  %v295 = vld [vmem:[%s2 + $0x1b8] sm:$0xff]
  %v296 = vld [vmem:[%s2 + $0x1c0] sm:$0xff]
  %v297 = vld [vmem:[%s2 + $0x1c8] sm:$0xff]
  %v298 = vld [vmem:[%s2 + $0x1d0] sm:$0xff]
  %v299 = vld [vmem:[%s2 + $0x1d8] sm:$0xff]
  %v300 = vld [vmem:[%s2 + $0x1e0] sm:$0xff]
  %v301 = vld [vmem:[%s2 + $0x1e8] sm:$0xff]
  %v302 = vld [vmem:[%s2 + $0x1f0] sm:$0xff]
  %v303 = vld [vmem:[%s2 + $0x1f8] sm:$0xff]
  %v304 = vld [vmem:[%s2 + $0x200] sm:$0xff]
  %v305 = vld [vmem:[%s2 + $0x208] sm:$0xff]
  %v306 = vld [vmem:[%s2 + $0x210] sm:$0xff]
  %v307 = vld [vmem:[%s2 + $0x218] sm:$0xff]
  %v308 = vld [vmem:[%s2 + $0x220] sm:$0xff]
  %v309 = vld [vmem:[%s2 + $0x228] sm:$0xff]
  %v310 = vld [vmem:[%s2 + $0x230] sm:$0xff]
  %v311 = vld [vmem:[%s2 + $0x238] sm:$0xff]
  %v312 = vld [vmem:[%s2 + $0x240] sm:$0xff]
  %v313 = vld [vmem:[%s2 + $0x248] sm:$0xff]
  %v314 = vld [vmem:[%s2 + $0x250] sm:$0xff]
  %v315 = vld [vmem:[%s2 + $0x258] sm:$0xff]
  %v316 = vld [vmem:[%s2 + $0x260] sm:$0xff]
  %v317 = vld [vmem:[%s2 + $0x268] sm:$0xff]
  %v318 = vld [vmem:[%s2 + $0x270] sm:$0xff]
  %v319 = vld [vmem:[%s2 + $0x278] sm:$0xff]
  %v320 = vld [vmem:[%s2 + $0x280] sm:$0xff]
  %v321 = vld [vmem:[%s2 + $0x288] sm:$0xff]
  %v322 = vld [vmem:[%s2 + $0x290] sm:$0xff]
  %v323 = vld [vmem:[%s2 + $0x298] sm:$0xff]
  %v324 = vld [vmem:[%s2 + $0x2a0] sm:$0xff]
  %v325 = vld [vmem:[%s2 + $0x2a8] sm:$0xff]
  %v326 = vld [vmem:[%s2 + $0x2b0] sm:$0xff]
  %v327 = vld [vmem:[%s2 + $0x2b8] sm:$0xff]
  %v328 = vld [vmem:[%s2 + $0x2c0] sm:$0xff]
  %v329 = vld [vmem:[%s2 + $0x2c8] sm:$0xff]
  %v330 = vld [vmem:[%s2 + $0x2d0] sm:$0xff]
  %v331 = vld [vmem:[%s2 + $0x2d8] sm:$0xff]
  %v332 = vld [vmem:[%s2 + $0x2e0] sm:$0xff]
  %v333 = vld [vmem:[%s2 + $0x2e8] sm:$0xff]
  %v334 = vld [vmem:[%s2 + $0x2f0] sm:$0xff]
  %v335 = vld [vmem:[%s2 + $0x2f8] sm:$0xff]
  %v336 = vld [vmem:[%s2 + $0x300] sm:$0xff]
  %v337 = vld [vmem:[%s2 + $0x308] sm:$0xff]
  %v338 = vld [vmem:[%s2 + $0x310] sm:$0xff]
  %v339 = vld [vmem:[%s2 + $0x318] sm:$0xff]
  %v340 = vld [vmem:[%s2 + $0x320] sm:$0xff]
  %v341 = vld [vmem:[%s2 + $0x328] sm:$0xff]
  %v342 = vld [vmem:[%s2 + $0x330] sm:$0xff]
  %v343 = vld [vmem:[%s2 + $0x338] sm:$0xff]
  %v344 = vld [vmem:[%s2 + $0x340] sm:$0xff]
  %v345 = vld [vmem:[%s2 + $0x348] sm:$0xff]
  %v346 = vld [vmem:[%s2 + $0x350] sm:$0xff]
  %v347 = vld [vmem:[%s2 + $0x358] sm:$0xff]
  %v348 = vld [vmem:[%s2 + $0x360] sm:$0xff]
  %v349 = vld [vmem:[%s2 + $0x368] sm:$0xff]
  %v350 = vld [vmem:[%s2 + $0x370] sm:$0xff]
  %v351 = vld [vmem:[%s2 + $0x378] sm:$0xff]
  %v352 = vld [vmem:[%s2 + $0x380] sm:$0xff]
  %v353 = vld [vmem:[%s2 + $0x388] sm:$0xff]
  %v354 = vld [vmem:[%s2 + $0x390] sm:$0xff]
  %v355 = vld [vmem:[%s2 + $0x398] sm:$0xff]
  %v356 = vld [vmem:[%s2 + $0x3a0] sm:$0xff]
  %v357 = vld [vmem:[%s2 + $0x3a8] sm:$0xff]
  %v358 = vld [vmem:[%s2 + $0x3b0] sm:$0xff]
  %v359 = vld [vmem:[%s2 + $0x3b8] sm:$0xff]
  %v360 = vld [vmem:[%s2 + $0x3c0] sm:$0xff]
  %v361 = vld [vmem:[%s2 + $0x3c8] sm:$0xff]
  %v362 = vld [vmem:[%s2 + $0x3d0] sm:$0xff]
  %v363 = vld [vmem:[%s2 + $0x3d8] sm:$0xff]
  %v364 = vld [vmem:[%s2 + $0x3e0] sm:$0xff]
  %v365 = vld [vmem:[%s2 + $0x3e8] sm:$0xff]
  %v366 = vld [vmem:[%s2 + $0x3f0] sm:$0xff]
  %v367 = vld [vmem:[%s2 + $0x3f8] sm:$0xff]
  %v368 = vld [vmem:[%s2 + $0x400] sm:$0xff]
  %v369 = vld [vmem:[%s2 + $0x408] sm:$0xff]
  %v370 = vld [vmem:[%s2 + $0x410] sm:$0xff]
  %v371 = vld [vmem:[%s2 + $0x418] sm:$0xff]
  %v372 = vld [vmem:[%s2 + $0x420] sm:$0xff]
  %v373 = vld [vmem:[%s2 + $0x428] sm:$0xff]
  %v374 = vld [vmem:[%s2 + $0x430] sm:$0xff]
  %v375 = vld [vmem:[%s2 + $0x438] sm:$0xff]
  %v376 = vld [vmem:[%s2 + $0x440] sm:$0xff]
  %v377 = vld [vmem:[%s2 + $0x448] sm:$0xff]
  %v378 = vld [vmem:[%s2 + $0x450] sm:$0xff]
  %v379 = vld [vmem:[%s2 + $0x458] sm:$0xff]
  %v380 = vld [vmem:[%s2 + $0x460] sm:$0xff]
  %v381 = vld [vmem:[%s2 + $0x468] sm:$0xff]
  %v382 = vld [vmem:[%s2 + $0x470] sm:$0xff]
  %v383 = vld [vmem:[%s2 + $0x478] sm:$0xff]
  %v384 = vld [vmem:[%s2 + $0x480] sm:$0xff]
  %v385 = vld [vmem:[%s2 + $0x488] sm:$0xff]
  %v386 = vld [vmem:[%s2 + $0x490] sm:$0xff]
  %v387 = vld [vmem:[%s2 + $0x498] sm:$0xff]
  %v388 = vld [vmem:[%s2 + $0x4a0] sm:$0xff]
  %v389 = vld [vmem:[%s2 + $0x4a8] sm:$0xff]
  %v390 = vld [vmem:[%s2 + $0x4b0] sm:$0xff]
  %v391 = vld [vmem:[%s2 + $0x4b8] sm:$0xff]
  %v392 = vld [vmem:[%s2 + $0x4c0] sm:$0xff]
  %v393 = vld [vmem:[%s2 + $0x4c8] sm:$0xff]
  %v394 = vld [vmem:[%s2 + $0x4d0] sm:$0xff]
  %v395 = vld [vmem:[%s2 + $0x4d8] sm:$0xff]
  %v396 = vld [vmem:[%s2 + $0x4e0] sm:$0xff]
  %v397 = vld [vmem:[%s2 + $0x4e8] sm:$0xff]
  %v398 = vld [vmem:[%s2 + $0x4f0] sm:$0xff]
  %v399 = vld [vmem:[%s2 + $0x4f8] sm:$0xff]
  %v400 = vld [vmem:[%s2 + $0x500] sm:$0xff]
  %v401 = vld [vmem:[%s2 + $0x508] sm:$0xff]
  %v402 = vld [vmem:[%s2 + $0x510] sm:$0xff]
  %v403 = vld [vmem:[%s2 + $0x518] sm:$0xff]
  %v404 = vld [vmem:[%s2 + $0x520] sm:$0xff]
  %v405 = vld [vmem:[%s2 + $0x528] sm:$0xff]
  %v406 = vld [vmem:[%s2 + $0x530] sm:$0xff]
  %v407 = vld [vmem:[%s2 + $0x538] sm:$0xff]
  %v408 = vld [vmem:[%s2 + $0x540] sm:$0xff]
  %v409 = vld [vmem:[%s2 + $0x548] sm:$0xff]
  %v410 = vld [vmem:[%s2 + $0x550] sm:$0xff]
  %v411 = vld [vmem:[%s2 + $0x558] sm:$0xff]
  %v412 = vld [vmem:[%s2 + $0x560] sm:$0xff]
  %v413 = vld [vmem:[%s2 + $0x568] sm:$0xff]
  %v414 = vld [vmem:[%s2 + $0x570] sm:$0xff]
  %v415 = vld [vmem:[%s2 + $0x578] sm:$0xff]
  %v416 = vld [vmem:[%s2 + $0x580] sm:$0xff]
  %v417 = vld [vmem:[%s2 + $0x588] sm:$0xff]
  %v418 = vld [vmem:[%s2 + $0x590] sm:$0xff]
  %v419 = vld [vmem:[%s2 + $0x598] sm:$0xff]
  %v420 = vld [vmem:[%s2 + $0x5a0] sm:$0xff]
  %v421 = vld [vmem:[%s2 + $0x5a8] sm:$0xff]
  %v422 = vld [vmem:[%s2 + $0x5b0] sm:$0xff]
  %v423 = vld [vmem:[%s2 + $0x5b8] sm:$0xff]
  %v424 = vld [vmem:[%s2 + $0x5c0] sm:$0xff]
  %v425 = vld [vmem:[%s2 + $0x5c8] sm:$0xff]
  %v426 = vld [vmem:[%s2 + $0x5d0] sm:$0xff]
  %v427 = vld [vmem:[%s2 + $0x5d8] sm:$0xff]
  %v428 = vld [vmem:[%s2 + $0x5e0] sm:$0xff]
  %v429 = vld [vmem:[%s2 + $0x5e8] sm:$0xff]
  %v430 = vld [vmem:[%s2 + $0x5f0] sm:$0xff]
  %v431 = vld [vmem:[%s2 + $0x5f8] sm:$0xff]
  %v432 = vld [vmem:[%s2 + $0x600] sm:$0xff]
  %v433 = vld [vmem:[%s2 + $0x608] sm:$0xff]
  %v434 = vld [vmem:[%s2 + $0x610] sm:$0xff]
  %v435 = vld [vmem:[%s2 + $0x618] sm:$0xff]
  %v436 = vld [vmem:[%s2 + $0x620] sm:$0xff]
  %v437 = vld [vmem:[%s2 + $0x628] sm:$0xff]
  %v438 = vld [vmem:[%s2 + $0x630] sm:$0xff]
  %v439 = vld [vmem:[%s2 + $0x638] sm:$0xff]
  %v440 = vld [vmem:[%s2 + $0x640] sm:$0xff]
  %v441 = vld [vmem:[%s2 + $0x648] sm:$0xff]
  %v442 = vld [vmem:[%s2 + $0x650] sm:$0xff]
  %v443 = vld [vmem:[%s2 + $0x658] sm:$0xff]
  %v444 = vld [vmem:[%s2 + $0x660] sm:$0xff]
  %v445 = vld [vmem:[%s2 + $0x668] sm:$0xff]
  %v446 = vld [vmem:[%s2 + $0x670] sm:$0xff]
  %v447 = vld [vmem:[%s2 + $0x678] sm:$0xff]
  %v448 = vld [vmem:[%s2 + $0x680] sm:$0xff]
  %v449 = vld [vmem:[%s2 + $0x688] sm:$0xff]
  %v450 = vld [vmem:[%s2 + $0x690] sm:$0xff]
  %v451 = vld [vmem:[%s2 + $0x698] sm:$0xff]
  %v452 = vld [vmem:[%s2 + $0x6a0] sm:$0xff]
  %v453 = vld [vmem:[%s2 + $0x6a8] sm:$0xff]
  %v454 = vld [vmem:[%s2 + $0x6b0] sm:$0xff]
  %v455 = vld [vmem:[%s2 + $0x6b8] sm:$0xff]
  %v456 = vld [vmem:[%s2 + $0x6c0] sm:$0xff]
  %v457 = vld [vmem:[%s2 + $0x6c8] sm:$0xff]
  %v458 = vld [vmem:[%s2 + $0x6d0] sm:$0xff]
  %v459 = vld [vmem:[%s2 + $0x6d8] sm:$0xff]
  %v460 = vld [vmem:[%s2 + $0x6e0] sm:$0xff]
  %v461 = vld [vmem:[%s2 + $0x6e8] sm:$0xff]
  %v462 = vld [vmem:[%s2 + $0x6f0] sm:$0xff]
  %v463 = vld [vmem:[%s2 + $0x6f8] sm:$0xff]
  %v464 = vld [vmem:[%s2 + $0x700] sm:$0xff]
  %v465 = vld [vmem:[%s2 + $0x708] sm:$0xff]
  %v466 = vld [vmem:[%s2 + $0x710] sm:$0xff]
  %v467 = vld [vmem:[%s2 + $0x718] sm:$0xff]
  %v468 = vld [vmem:[%s2 + $0x720] sm:$0xff]
  %v469 = vld [vmem:[%s2 + $0x728] sm:$0xff]
  %v470 = vld [vmem:[%s2 + $0x730] sm:$0xff]
  %v471 = vld [vmem:[%s2 + $0x738] sm:$0xff]
  %v472 = vld [vmem:[%s2 + $0x740] sm:$0xff]
  %v473 = vld [vmem:[%s2 + $0x748] sm:$0xff]
  %v474 = vld [vmem:[%s2 + $0x750] sm:$0xff]
  %v475 = vld [vmem:[%s2 + $0x758] sm:$0xff]
  %v476 = vld [vmem:[%s2 + $0x760] sm:$0xff]
  %v477 = vld [vmem:[%s2 + $0x768] sm:$0xff]
  %v478 = vld [vmem:[%s2 + $0x770] sm:$0xff]
  %v479 = vld [vmem:[%s2 + $0x778] sm:$0xff]
  %v480 = vld [vmem:[%s2 + $0x780] sm:$0xff]
  %v481 = vld [vmem:[%s2 + $0x788] sm:$0xff]
  %v482 = vld [vmem:[%s2 + $0x790] sm:$0xff]
  %v483 = vld [vmem:[%s2 + $0x798] sm:$0xff]
  %v484 = vld [vmem:[%s2 + $0x7a0] sm:$0xff]
  %v485 = vld [vmem:[%s2 + $0x7a8] sm:$0xff]
  %v486 = vld [vmem:[%s2 + $0x7b0] sm:$0xff]
  %v487 = vld [vmem:[%s2 + $0x7b8] sm:$0xff]
  %v488 = vld [vmem:[%s2 + $0x7c0] sm:$0xff]
  %v489 = vld [vmem:[%s2 + $0x7c8] sm:$0xff]
  %v490 = vld [vmem:[%s2 + $0x7d0] sm:$0xff]
  %v491 = vld [vmem:[%s2 + $0x7d8] sm:$0xff]
  %v492 = vld [vmem:[%s2 + $0x7e0] sm:$0xff]
  %v493 = vld [vmem:[%s2 + $0x7e8] sm:$0xff]
  %v494 = vld [vmem:[%s2 + $0x7f0] sm:$0xff]
  %v495 = vld [vmem:[%s2 + $0x7f8] sm:$0xff]
  %s496 = scalar_lea.vmem %s2, 2048
  %v497 = vld [vmem:[%s496] sm:$0xff]
  %v498 = vld [vmem:[%s496 + $0x8] sm:$0xff]
  %v499 = vld [vmem:[%s496 + $0x10] sm:$0xff]
  %v500 = vld [vmem:[%s496 + $0x18] sm:$0xff]
  %v501 = vld [vmem:[%s496 + $0x20] sm:$0xff]
  %v502 = vld [vmem:[%s496 + $0x28] sm:$0xff]
  %v503 = vld [vmem:[%s496 + $0x30] sm:$0xff]
  %v504 = vld [vmem:[%s496 + $0x38] sm:$0xff]
  %v505 = vld [vmem:[%s496 + $0x40] sm:$0xff]
  %v506 = vld [vmem:[%s496 + $0x48] sm:$0xff]
  %v507 = vld [vmem:[%s496 + $0x50] sm:$0xff]
  %v508 = vld [vmem:[%s496 + $0x58] sm:$0xff]
  %v509 = vld [vmem:[%s496 + $0x60] sm:$0xff]
  %v510 = vld [vmem:[%s496 + $0x68] sm:$0xff]
  %v511 = vld [vmem:[%s496 + $0x70] sm:$0xff]
  %v512 = vld [vmem:[%s496 + $0x78] sm:$0xff]
  %v513 = vld [vmem:[%s496 + $0x80] sm:$0xff]
  %v514 = vld [vmem:[%s496 + $0x88] sm:$0xff]
  %v515 = vld [vmem:[%s496 + $0x90] sm:$0xff]
  %v516 = vld [vmem:[%s496 + $0x98] sm:$0xff]
  %v517 = vld [vmem:[%s496 + $0xa0] sm:$0xff]
  %v518 = vld [vmem:[%s496 + $0xa8] sm:$0xff]
  %v519 = vld [vmem:[%s496 + $0xb0] sm:$0xff]
  %v520 = vld [vmem:[%s496 + $0xb8] sm:$0xff]
  %v521 = vld [vmem:[%s496 + $0xc0] sm:$0xff]
  %v522 = vld [vmem:[%s496 + $0xc8] sm:$0xff]
  %v523 = vld [vmem:[%s496 + $0xd0] sm:$0xff]
  %v524 = vld [vmem:[%s496 + $0xd8] sm:$0xff]
  %v525 = vld [vmem:[%s496 + $0xe0] sm:$0xff]
  %v526 = vld [vmem:[%s496 + $0xe8] sm:$0xff]
  %v527 = vld [vmem:[%s496 + $0xf0] sm:$0xff]
  %v528 = vld [vmem:[%s496 + $0xf8] sm:$0xff]
  %v529 = vld [vmem:[%s496 + $0x100] sm:$0xff]
  %v530 = vld [vmem:[%s496 + $0x108] sm:$0xff]
  %v531 = vld [vmem:[%s496 + $0x110] sm:$0xff]
  %v532 = vld [vmem:[%s496 + $0x118] sm:$0xff]
  %v533 = vld [vmem:[%s496 + $0x120] sm:$0xff]
  %v534 = vld [vmem:[%s496 + $0x128] sm:$0xff]
  %v535 = vld [vmem:[%s496 + $0x130] sm:$0xff]
  %v536 = vld [vmem:[%s496 + $0x138] sm:$0xff]
  %v537 = vld [vmem:[%s496 + $0x140] sm:$0xff]
  %v538 = vld [vmem:[%s496 + $0x148] sm:$0xff]
  %v539 = vld [vmem:[%s496 + $0x150] sm:$0xff]
  %v540 = vld [vmem:[%s496 + $0x158] sm:$0xff]
  %v541 = vld [vmem:[%s496 + $0x160] sm:$0xff]
  %v542 = vld [vmem:[%s496 + $0x168] sm:$0xff]
  %v543 = vld [vmem:[%s496 + $0x170] sm:$0xff]
  %v544 = vld [vmem:[%s496 + $0x178] sm:$0xff]
  %v545 = vld [vmem:[%s496 + $0x180] sm:$0xff]
  %v546 = vld [vmem:[%s496 + $0x188] sm:$0xff]
  %v547 = vld [vmem:[%s496 + $0x190] sm:$0xff]
  %v548 = vld [vmem:[%s496 + $0x198] sm:$0xff]
  %v549 = vld [vmem:[%s496 + $0x1a0] sm:$0xff]
  %v550 = vld [vmem:[%s496 + $0x1a8] sm:$0xff]
  %v551 = vld [vmem:[%s496 + $0x1b0] sm:$0xff]
  %v552 = vld [vmem:[%s496 + $0x1b8] sm:$0xff]
  %v553 = vld [vmem:[%s496 + $0x1c0] sm:$0xff]
  %v554 = vld [vmem:[%s496 + $0x1c8] sm:$0xff]
  %v555 = vld [vmem:[%s496 + $0x1d0] sm:$0xff]
  %v556 = vld [vmem:[%s496 + $0x1d8] sm:$0xff]
  %v557 = vld [vmem:[%s496 + $0x1e0] sm:$0xff]
  %v558 = vld [vmem:[%s496 + $0x1e8] sm:$0xff]
  %v559 = vld [vmem:[%s496 + $0x1f0] sm:$0xff]
  %v560 = vld [vmem:[%s496 + $0x1f8] sm:$0xff]
  %v561 = vld [vmem:[%s496 + $0x200] sm:$0xff]
  %v562 = vld [vmem:[%s496 + $0x208] sm:$0xff]
  %v563 = vld [vmem:[%s496 + $0x210] sm:$0xff]
  %v564 = vld [vmem:[%s496 + $0x218] sm:$0xff]
  %v565 = vld [vmem:[%s496 + $0x220] sm:$0xff]
  %v566 = vld [vmem:[%s496 + $0x228] sm:$0xff]
  %v567 = vld [vmem:[%s496 + $0x230] sm:$0xff]
  %v568 = vld [vmem:[%s496 + $0x238] sm:$0xff]
  %v569 = vld [vmem:[%s496 + $0x240] sm:$0xff]
  %v570 = vld [vmem:[%s496 + $0x248] sm:$0xff]
  %v571 = vld [vmem:[%s496 + $0x250] sm:$0xff]
  %v572 = vld [vmem:[%s496 + $0x258] sm:$0xff]
  %v573 = vld [vmem:[%s496 + $0x260] sm:$0xff]
  %v574 = vld [vmem:[%s496 + $0x268] sm:$0xff]
  %v575 = vld [vmem:[%s496 + $0x270] sm:$0xff]
  %v576 = vld [vmem:[%s496 + $0x278] sm:$0xff]
  %v577 = vld [vmem:[%s496 + $0x280] sm:$0xff]
  %v578 = vld [vmem:[%s496 + $0x288] sm:$0xff]
  %v579 = vld [vmem:[%s496 + $0x290] sm:$0xff]
  %v580 = vld [vmem:[%s496 + $0x298] sm:$0xff]
  %v581 = vld [vmem:[%s496 + $0x2a0] sm:$0xff]
  %v582 = vld [vmem:[%s496 + $0x2a8] sm:$0xff]
  %v583 = vld [vmem:[%s496 + $0x2b0] sm:$0xff]
  %v584 = vld [vmem:[%s496 + $0x2b8] sm:$0xff]
  %v585 = vld [vmem:[%s496 + $0x2c0] sm:$0xff]
  %v586 = vld [vmem:[%s496 + $0x2c8] sm:$0xff]
  %v587 = vld [vmem:[%s496 + $0x2d0] sm:$0xff]
  %v588 = vld [vmem:[%s496 + $0x2d8] sm:$0xff]
  %v589 = vld [vmem:[%s496 + $0x2e0] sm:$0xff]
  %v590 = vld [vmem:[%s496 + $0x2e8] sm:$0xff]
  %v591 = vld [vmem:[%s496 + $0x2f0] sm:$0xff]
  %v592 = vld [vmem:[%s496 + $0x2f8] sm:$0xff]
  %v593 = vld [vmem:[%s496 + $0x300] sm:$0xff]
  %v594 = vld [vmem:[%s496 + $0x308] sm:$0xff]
  %v595 = vld [vmem:[%s496 + $0x310] sm:$0xff]
  %v596 = vld [vmem:[%s496 + $0x318] sm:$0xff]
  %v597 = vld [vmem:[%s496 + $0x320] sm:$0xff]
  %v598 = vld [vmem:[%s496 + $0x328] sm:$0xff]
  %v599 = vld [vmem:[%s496 + $0x330] sm:$0xff]
  %v600 = vld [vmem:[%s496 + $0x338] sm:$0xff]
  %v601 = vld [vmem:[%s496 + $0x340] sm:$0xff]
  %v602 = vld [vmem:[%s496 + $0x348] sm:$0xff]
  %v603 = vld [vmem:[%s496 + $0x350] sm:$0xff]
  %v604 = vld [vmem:[%s496 + $0x358] sm:$0xff]
  %v605 = vld [vmem:[%s496 + $0x360] sm:$0xff]
  %v606 = vld [vmem:[%s496 + $0x368] sm:$0xff]
  %v607 = vld [vmem:[%s496 + $0x370] sm:$0xff]
  %v608 = vld [vmem:[%s496 + $0x378] sm:$0xff]
  %v609 = vld [vmem:[%s496 + $0x380] sm:$0xff]
  %v610 = vld [vmem:[%s496 + $0x388] sm:$0xff]
  %v611 = vld [vmem:[%s496 + $0x390] sm:$0xff]
  %v612 = vld [vmem:[%s496 + $0x398] sm:$0xff]
  %v613 = vld [vmem:[%s496 + $0x3a0] sm:$0xff]
  %v614 = vld [vmem:[%s496 + $0x3a8] sm:$0xff]
  %v615 = vld [vmem:[%s496 + $0x3b0] sm:$0xff]
  %v616 = vld [vmem:[%s496 + $0x3b8] sm:$0xff]
  %v617 = vld [vmem:[%s496 + $0x3c0] sm:$0xff]
  %v618 = vld [vmem:[%s496 + $0x3c8] sm:$0xff]
  %v619 = vld [vmem:[%s496 + $0x3d0] sm:$0xff]
  %v620 = vld [vmem:[%s496 + $0x3d8] sm:$0xff]
  %v621 = vld [vmem:[%s496 + $0x3e0] sm:$0xff]
  %v622 = vld [vmem:[%s496 + $0x3e8] sm:$0xff]
  %v623 = vld [vmem:[%s496 + $0x3f0] sm:$0xff]
  %v624 = vld [vmem:[%s496 + $0x3f8] sm:$0xff]
  %v625 = vld [vmem:[%s496 + $0x400] sm:$0xff]
  %v626 = vld [vmem:[%s496 + $0x408] sm:$0xff]
  %v627 = vld [vmem:[%s496 + $0x410] sm:$0xff]
  %v628 = vld [vmem:[%s496 + $0x418] sm:$0xff]
  %v629 = vld [vmem:[%s496 + $0x420] sm:$0xff]
  %v630 = vld [vmem:[%s496 + $0x428] sm:$0xff]
  %v631 = vld [vmem:[%s496 + $0x430] sm:$0xff]
  %v632 = vld [vmem:[%s496 + $0x438] sm:$0xff]
  %v633 = vld [vmem:[%s496 + $0x440] sm:$0xff]
  %v634 = vld [vmem:[%s496 + $0x448] sm:$0xff]
  %v635 = vld [vmem:[%s496 + $0x450] sm:$0xff]
  %v636 = vld [vmem:[%s496 + $0x458] sm:$0xff]
  %v637 = vld [vmem:[%s496 + $0x460] sm:$0xff]
  %v638 = vld [vmem:[%s496 + $0x468] sm:$0xff]
  %v639 = vld [vmem:[%s496 + $0x470] sm:$0xff]
  %v640 = vld [vmem:[%s496 + $0x478] sm:$0xff]
  %v641 = vld [vmem:[%s496 + $0x480] sm:$0xff]
  %v642 = vld [vmem:[%s496 + $0x488] sm:$0xff]
  %v643 = vld [vmem:[%s496 + $0x490] sm:$0xff]
  %v644 = vld [vmem:[%s496 + $0x498] sm:$0xff]
  %v645 = vld [vmem:[%s496 + $0x4a0] sm:$0xff]
  %v646 = vld [vmem:[%s496 + $0x4a8] sm:$0xff]
  %v647 = vld [vmem:[%s496 + $0x4b0] sm:$0xff]
  %v648 = vld [vmem:[%s496 + $0x4b8] sm:$0xff]
  %v649 = vld [vmem:[%s496 + $0x4c0] sm:$0xff]
  %v650 = vld [vmem:[%s496 + $0x4c8] sm:$0xff]
  %v651 = vld [vmem:[%s496 + $0x4d0] sm:$0xff]
  %v652 = vld [vmem:[%s496 + $0x4d8] sm:$0xff]
  %v653 = vld [vmem:[%s496 + $0x4e0] sm:$0xff]
  %v654 = vld [vmem:[%s496 + $0x4e8] sm:$0xff]
  %v655 = vld [vmem:[%s496 + $0x4f0] sm:$0xff]
  %v656 = vld [vmem:[%s496 + $0x4f8] sm:$0xff]
  %v657 = vld [vmem:[%s496 + $0x500] sm:$0xff]
  %v658 = vld [vmem:[%s496 + $0x508] sm:$0xff]
  %v659 = vld [vmem:[%s496 + $0x510] sm:$0xff]
  %v660 = vld [vmem:[%s496 + $0x518] sm:$0xff]
  %v661 = vld [vmem:[%s496 + $0x520] sm:$0xff]
  %v662 = vld [vmem:[%s496 + $0x528] sm:$0xff]
  %v663 = vld [vmem:[%s496 + $0x530] sm:$0xff]
  %v664 = vld [vmem:[%s496 + $0x538] sm:$0xff]
  %v665 = vld [vmem:[%s496 + $0x540] sm:$0xff]
  %v666 = vld [vmem:[%s496 + $0x548] sm:$0xff]
  %v667 = vld [vmem:[%s496 + $0x550] sm:$0xff]
  %v668 = vld [vmem:[%s496 + $0x558] sm:$0xff]
  %v669 = vld [vmem:[%s496 + $0x560] sm:$0xff]
  %v670 = vld [vmem:[%s496 + $0x568] sm:$0xff]
  %v671 = vld [vmem:[%s496 + $0x570] sm:$0xff]
  %v672 = vld [vmem:[%s496 + $0x578] sm:$0xff]
  %v673 = vld [vmem:[%s496 + $0x580] sm:$0xff]
  %v674 = vld [vmem:[%s496 + $0x588] sm:$0xff]
  %v675 = vld [vmem:[%s496 + $0x590] sm:$0xff]
  %v676 = vld [vmem:[%s496 + $0x598] sm:$0xff]
  %v677 = vld [vmem:[%s496 + $0x5a0] sm:$0xff]
  %v678 = vld [vmem:[%s496 + $0x5a8] sm:$0xff]
  %v679 = vld [vmem:[%s496 + $0x5b0] sm:$0xff]
  %v680 = vld [vmem:[%s496 + $0x5b8] sm:$0xff]
  %v681 = vld [vmem:[%s496 + $0x5c0] sm:$0xff]
  %v682 = vld [vmem:[%s496 + $0x5c8] sm:$0xff]
  %v683 = vld [vmem:[%s496 + $0x5d0] sm:$0xff]
  %v684 = vld [vmem:[%s496 + $0x5d8] sm:$0xff]
  %v685 = vld [vmem:[%s496 + $0x5e0] sm:$0xff]
  %v686 = vld [vmem:[%s496 + $0x5e8] sm:$0xff]
  %v687 = vld [vmem:[%s496 + $0x5f0] sm:$0xff]
  %v688 = vld [vmem:[%s496 + $0x5f8] sm:$0xff]
  %v689 = vld [vmem:[%s496 + $0x600] sm:$0xff]
  %v690 = vld [vmem:[%s496 + $0x608] sm:$0xff]
  %v691 = vld [vmem:[%s496 + $0x610] sm:$0xff]
  %v692 = vld [vmem:[%s496 + $0x618] sm:$0xff]
  %v693 = vld [vmem:[%s496 + $0x620] sm:$0xff]
  %v694 = vld [vmem:[%s496 + $0x628] sm:$0xff]
  %v695 = vld [vmem:[%s496 + $0x630] sm:$0xff]
  %v696 = vld [vmem:[%s496 + $0x638] sm:$0xff]
  %v697 = vld [vmem:[%s496 + $0x640] sm:$0xff]
  %v698 = vld [vmem:[%s496 + $0x648] sm:$0xff]
  %v699 = vld [vmem:[%s496 + $0x650] sm:$0xff]
  %v700 = vld [vmem:[%s496 + $0x658] sm:$0xff]
  %v701 = vld [vmem:[%s496 + $0x660] sm:$0xff]
  %v702 = vld [vmem:[%s496 + $0x668] sm:$0xff]
  %v703 = vld [vmem:[%s496 + $0x670] sm:$0xff]
  %v704 = vld [vmem:[%s496 + $0x678] sm:$0xff]
  %v705 = vld [vmem:[%s496 + $0x680] sm:$0xff]
  %v706 = vld [vmem:[%s496 + $0x688] sm:$0xff]
  %v707 = vld [vmem:[%s496 + $0x690] sm:$0xff]
  %v708 = vld [vmem:[%s496 + $0x698] sm:$0xff]
  %v709 = vld [vmem:[%s496 + $0x6a0] sm:$0xff]
  %v710 = vld [vmem:[%s496 + $0x6a8] sm:$0xff]
  %v711 = vld [vmem:[%s496 + $0x6b0] sm:$0xff]
  %v712 = vld [vmem:[%s496 + $0x6b8] sm:$0xff]
  %v713 = vld [vmem:[%s496 + $0x6c0] sm:$0xff]
  %v714 = vld [vmem:[%s496 + $0x6c8] sm:$0xff]
  %v715 = vld [vmem:[%s496 + $0x6d0] sm:$0xff]
  %v716 = vld [vmem:[%s496 + $0x6d8] sm:$0xff]
  %v717 = vld [vmem:[%s496 + $0x6e0] sm:$0xff]
  %v718 = vld [vmem:[%s496 + $0x6e8] sm:$0xff]
  %v719 = vld [vmem:[%s496 + $0x6f0] sm:$0xff]
  %v720 = vld [vmem:[%s496 + $0x6f8] sm:$0xff]
  %v721 = vld [vmem:[%s496 + $0x700] sm:$0xff]
  %v722 = vld [vmem:[%s496 + $0x708] sm:$0xff]
  %v723 = vld [vmem:[%s496 + $0x710] sm:$0xff]
  %v724 = vld [vmem:[%s496 + $0x718] sm:$0xff]
  %v725 = vld [vmem:[%s496 + $0x720] sm:$0xff]
  %v726 = vld [vmem:[%s496 + $0x728] sm:$0xff]
  %v727 = vld [vmem:[%s496 + $0x730] sm:$0xff]
  %v728 = vld [vmem:[%s496 + $0x738] sm:$0xff]
  %v729 = vld [vmem:[%s496 + $0x740] sm:$0xff]
  %v730 = vld [vmem:[%s496 + $0x748] sm:$0xff]
  %v731 = vld [vmem:[%s496 + $0x750] sm:$0xff]
  %v732 = vld [vmem:[%s496 + $0x758] sm:$0xff]
  %v733 = vld [vmem:[%s496 + $0x760] sm:$0xff]
  %v734 = vld [vmem:[%s496 + $0x768] sm:$0xff]
  %v735 = vld [vmem:[%s496 + $0x770] sm:$0xff]
  %v736 = vld [vmem:[%s496 + $0x778] sm:$0xff]
  %v737 = vld [vmem:[%s496 + $0x780] sm:$0xff]
  %v738 = vld [vmem:[%s496 + $0x788] sm:$0xff]
  %v739 = vld [vmem:[%s496 + $0x790] sm:$0xff]
  %v740 = vld [vmem:[%s496 + $0x798] sm:$0xff]
  %v741 = vld [vmem:[%s496 + $0x7a0] sm:$0xff]
  %v742 = vld [vmem:[%s496 + $0x7a8] sm:$0xff]
  %v743 = vld [vmem:[%s496 + $0x7b0] sm:$0xff]
  %v744 = vld [vmem:[%s496 + $0x7b8] sm:$0xff]
  %v745 = vld [vmem:[%s496 + $0x7c0] sm:$0xff]
  %v746 = vld [vmem:[%s496 + $0x7c8] sm:$0xff]
  %v747 = vld [vmem:[%s496 + $0x7d0] sm:$0xff]
  %v748 = vld [vmem:[%s496 + $0x7d8] sm:$0xff]
  %v749 = vld [vmem:[%s496 + $0x7e0] sm:$0xff]
  %v750 = vld [vmem:[%s496 + $0x7e8] sm:$0xff]
  %v751 = vld [vmem:[%s496 + $0x7f0] sm:$0xff]
  %v752 = vld [vmem:[%s496 + $0x7f8] sm:$0xff]
  %753 = vmatprep.subr.mxu0 %v558
  %754 = vmatpush1.msra.mxu0 %v557
  %755 = vmatprep.subr.mxu0 %v554
  %756 = vmatpush1.msra.mxu0 %v553
  %757 = vmatprep.subr.mxu0 %v550
  %758 = vmatpush1.msra.mxu0 %v549
  %759 = vmatprep.subr.mxu0 %v546
  %760 = vmatpush1.msra.mxu0 %v545
  %761 = vmatprep.subr.mxu0 %v542
  %762 = vmatpush1.msra.mxu0 %v541
  %763 = vmatprep.subr.mxu0 %v538
  %764 = vmatpush1.msra.mxu0 %v537
  %765 = vmatprep.subr.mxu0 %v534
  %766 = vmatpush1.msra.mxu0 %v533
  %767 = vmatprep.subr.mxu0 %v530
  %768 = vmatpush1.msra.mxu0 %v529
  %769 = vmatprep.subr.mxu0 %v526
  %770 = vmatpush1.msra.mxu0 %v525
  %771 = vmatprep.subr.mxu0 %v522
  %772 = vmatpush1.msra.mxu0 %v521
  %773 = vmatprep.subr.mxu0 %v518
  %774 = vmatpush1.msra.mxu0 %v517
  %775 = vmatprep.subr.mxu0 %v514
  %776 = vmatpush1.msra.mxu0 %v513
  %777 = vmatprep.subr.mxu0 %v510
  %778 = vmatpush1.msra.mxu0 %v509
  %779 = vmatprep.subr.mxu0 %v506
  %780 = vmatpush1.msra.mxu0 %v505
  %781 = vmatprep.subr.mxu0 %v502
  %782 = vmatpush1.msra.mxu0 %v501
  %783 = vmatprep.subr.mxu0 %v498
  %784 = vmatpush1.msra.mxu0 %v497
  %785 = vmatprep.subr.mxu0 %v622
  %786 = vmatpush2.msra.mxu0 %v621
  %787 = vmatprep.subr.mxu0 %v618
  %788 = vmatpush2.msra.mxu0 %v617
  %789 = vmatprep.subr.mxu0 %v614
  %790 = vmatpush2.msra.mxu0 %v613
  %791 = vmatprep.subr.mxu0 %v610
  %792 = vmatpush2.msra.mxu0 %v609
  %793 = vmatprep.subr.mxu0 %v606
  %794 = vmatpush2.msra.mxu0 %v605
  %795 = vmatprep.subr.mxu0 %v602
  %796 = vmatpush2.msra.mxu0 %v601
  %797 = vmatprep.subr.mxu0 %v598
  %798 = vmatpush2.msra.mxu0 %v597
  %799 = vmatprep.subr.mxu0 %v594
  %800 = vmatpush2.msra.mxu0 %v593
  %801 = vmatprep.subr.mxu0 %v590
  %802 = vmatpush2.msra.mxu0 %v589
  %803 = vmatprep.subr.mxu0 %v586
  %804 = vmatpush2.msra.mxu0 %v585
  %805 = vmatprep.subr.mxu0 %v582
  %806 = vmatpush2.msra.mxu0 %v581
  %807 = vmatprep.subr.mxu0 %v578
  %808 = vmatpush2.msra.mxu0 %v577
  %809 = vmatprep.subr.mxu0 %v574
  %810 = vmatpush2.msra.mxu0 %v573
  %811 = vmatprep.subr.mxu0 %v570
  %812 = vmatpush2.msra.mxu0 %v569
  %813 = vmatprep.subr.mxu0 %v566
  %814 = vmatpush2.msra.mxu0 %v565
  %815 = vmatprep.subr.mxu0 %v562
  %816 = vmatpush2.msra.mxu0 %v561
  %817 = vmatprep.mubr.f32.mxu0 %v30
  %818 = vmatmul.mubr.f32.gmra.mxu0 %v29
  %v819 = vpop.f32.mrf.mxu0
  %v820 = vadd.f32 0.0, %v819
  %v821 = vpop.f32.mrf.mxu0
  %v822 = vadd.f32 0.0, %v821
  %823 = vmatprep.mubr.f32.mxu0 %v34
  %824 = vmatmul.mubr.f32.gmra.mxu0 %v33
  %v825 = vpop.f32.mrf.mxu0
  %v826 = vadd.f32 0.0, %v825
  %v827 = vpop.f32.mrf.mxu0
  %v828 = vadd.f32 0.0, %v827
  %829 = vmatprep.mubr.f32.mxu0 %v38
  %830 = vmatmul.mubr.f32.gmra.mxu0 %v37
  %v831 = vpop.f32.mrf.mxu0
  %v832 = vadd.f32 0.0, %v831
  %v833 = vpop.f32.mrf.mxu0
  %v834 = vadd.f32 0.0, %v833
  %835 = vmatprep.mubr.f32.mxu0 %v42
  %836 = vmatmul.mubr.f32.gmra.mxu0 %v41
  %v837 = vpop.f32.mrf.mxu0
  %v838 = vadd.f32 0.0, %v837
  %v839 = vpop.f32.mrf.mxu0
  %v840 = vadd.f32 0.0, %v839
  %841 = vdwg.mxu0
  %842 = vmatprep.subr.mxu0 %v686
  %843 = vmatpush1.msra.mxu0 %v685
  %844 = vmatprep.subr.mxu0 %v682
  %845 = vmatpush1.msra.mxu0 %v681
  %846 = vmatprep.subr.mxu0 %v678
  %847 = vmatpush1.msra.mxu0 %v677
  %848 = vmatprep.subr.mxu0 %v674
  %849 = vmatpush1.msra.mxu0 %v673
  %850 = vmatprep.subr.mxu0 %v670
  %851 = vmatpush1.msra.mxu0 %v669
  %852 = vmatprep.subr.mxu0 %v666
  %853 = vmatpush1.msra.mxu0 %v665
  %854 = vmatprep.subr.mxu0 %v662
  %855 = vmatpush1.msra.mxu0 %v661
  %856 = vmatprep.subr.mxu0 %v658
  %857 = vmatpush1.msra.mxu0 %v657
  %858 = vmatprep.subr.mxu0 %v654
  %859 = vmatpush1.msra.mxu0 %v653
  %860 = vmatprep.subr.mxu0 %v650
  %861 = vmatpush1.msra.mxu0 %v649
  %862 = vmatprep.subr.mxu0 %v646
  %863 = vmatpush1.msra.mxu0 %v645
  %864 = vmatprep.subr.mxu0 %v642
  %865 = vmatpush1.msra.mxu0 %v641
  %866 = vmatprep.subr.mxu0 %v638
  %867 = vmatpush1.msra.mxu0 %v637
  %868 = vmatprep.subr.mxu0 %v634
  %869 = vmatpush1.msra.mxu0 %v633
  %870 = vmatprep.subr.mxu0 %v630
  %871 = vmatpush1.msra.mxu0 %v629
  %872 = vmatprep.subr.mxu0 %v626
  %873 = vmatpush1.msra.mxu0 %v625
  %874 = vmatprep.subr.mxu0 %v750
  %875 = vmatpush2.msra.mxu0 %v749
  %876 = vmatprep.subr.mxu0 %v746
  %877 = vmatpush2.msra.mxu0 %v745
  %878 = vmatprep.subr.mxu0 %v742
  %879 = vmatpush2.msra.mxu0 %v741
  %880 = vmatprep.subr.mxu0 %v738
  %881 = vmatpush2.msra.mxu0 %v737
  %882 = vmatprep.subr.mxu0 %v734
  %883 = vmatpush2.msra.mxu0 %v733
  %884 = vmatprep.subr.mxu0 %v730
  %885 = vmatpush2.msra.mxu0 %v729
  %886 = vmatprep.subr.mxu0 %v726
  %887 = vmatpush2.msra.mxu0 %v725
  %888 = vmatprep.subr.mxu0 %v722
  %889 = vmatpush2.msra.mxu0 %v721
  %890 = vmatprep.subr.mxu0 %v718
  %891 = vmatpush2.msra.mxu0 %v717
  %892 = vmatprep.subr.mxu0 %v714
  %893 = vmatpush2.msra.mxu0 %v713
  %894 = vmatprep.subr.mxu0 %v710
  %895 = vmatpush2.msra.mxu0 %v709
  %896 = vmatprep.subr.mxu0 %v706
  %897 = vmatpush2.msra.mxu0 %v705
  %898 = vmatprep.subr.mxu0 %v702
  %899 = vmatpush2.msra.mxu0 %v701
  %900 = vmatprep.subr.mxu0 %v698
  %901 = vmatpush2.msra.mxu0 %v697
  %902 = vmatprep.subr.mxu0 %v694
  %903 = vmatpush2.msra.mxu0 %v693
  %904 = vmatprep.subr.mxu0 %v690
  %905 = vmatpush2.msra.mxu0 %v689
  %906 = vmatprep.mubr.f32.mxu0 %v32
  %907 = vmatmul.mubr.f32.gmra.mxu0 %v31
  %v908 = vpop.f32.mrf.mxu0
  %v909 = vadd.f32 %v820, %v908
  %v910 = vpop.f32.mrf.mxu0
  %v911 = vadd.f32 %v822, %v910
  %912 = vmatprep.mubr.f32.mxu0 %v36
  %913 = vmatmul.mubr.f32.gmra.mxu0 %v35
  %v914 = vpop.f32.mrf.mxu0
  %v915 = vadd.f32 %v826, %v914
  %v916 = vpop.f32.mrf.mxu0
  %v917 = vadd.f32 %v828, %v916
  %918 = vmatprep.mubr.f32.mxu0 %v40
  %919 = vmatmul.mubr.f32.gmra.mxu0 %v39
  %v920 = vpop.f32.mrf.mxu0
  %v921 = vadd.f32 %v832, %v920
  %v922 = vpop.f32.mrf.mxu0
  %v923 = vadd.f32 %v834, %v922
  %924 = vmatprep.mubr.f32.mxu0 %v44
  %925 = vmatmul.mubr.f32.gmra.mxu0 %v43
  %v926 = vpop.f32.mrf.mxu0
  %v927 = vadd.f32 %v838, %v926
  %v928 = vpop.f32.mrf.mxu0
  %v929 = vadd.f32 %v840, %v928
  %930 = vdwg.mxu0
  %931 = vmatprep.subr.mxu0 %v560
  %932 = vmatpush1.msra.mxu0 %v559
  %933 = vmatprep.subr.mxu0 %v556
  %934 = vmatpush1.msra.mxu0 %v555
  %935 = vmatprep.subr.mxu0 %v552
  %936 = vmatpush1.msra.mxu0 %v551
  %937 = vmatprep.subr.mxu0 %v548
  %938 = vmatpush1.msra.mxu0 %v547
  %939 = vmatprep.subr.mxu0 %v544
  %940 = vmatpush1.msra.mxu0 %v543
  %941 = vmatprep.subr.mxu0 %v540
  %942 = vmatpush1.msra.mxu0 %v539
  %943 = vmatprep.subr.mxu0 %v536
  %944 = vmatpush1.msra.mxu0 %v535
  %945 = vmatprep.subr.mxu0 %v532
  %946 = vmatpush1.msra.mxu0 %v531
  %947 = vmatprep.subr.mxu0 %v528
  %948 = vmatpush1.msra.mxu0 %v527
  %949 = vmatprep.subr.mxu0 %v524
  %950 = vmatpush1.msra.mxu0 %v523
  %951 = vmatprep.subr.mxu0 %v520
  %952 = vmatpush1.msra.mxu0 %v519
  %953 = vmatprep.subr.mxu0 %v516
  %954 = vmatpush1.msra.mxu0 %v515
  %955 = vmatprep.subr.mxu0 %v512
  %956 = vmatpush1.msra.mxu0 %v511
  %957 = vmatprep.subr.mxu0 %v508
  %958 = vmatpush1.msra.mxu0 %v507
  %959 = vmatprep.subr.mxu0 %v504
  %960 = vmatpush1.msra.mxu0 %v503
  %961 = vmatprep.subr.mxu0 %v500
  %962 = vmatpush1.msra.mxu0 %v499
  %963 = vmatprep.subr.mxu0 %v624
  %964 = vmatpush2.msra.mxu0 %v623
  %965 = vmatprep.subr.mxu0 %v620
  %966 = vmatpush2.msra.mxu0 %v619
  %967 = vmatprep.subr.mxu0 %v616
  %968 = vmatpush2.msra.mxu0 %v615
  %969 = vmatprep.subr.mxu0 %v612
  %970 = vmatpush2.msra.mxu0 %v611
  %971 = vmatprep.subr.mxu0 %v608
  %972 = vmatpush2.msra.mxu0 %v607
  %973 = vmatprep.subr.mxu0 %v604
  %974 = vmatpush2.msra.mxu0 %v603
  %975 = vmatprep.subr.mxu0 %v600
  %976 = vmatpush2.msra.mxu0 %v599
  %977 = vmatprep.subr.mxu0 %v596
  %978 = vmatpush2.msra.mxu0 %v595
  %979 = vmatprep.subr.mxu0 %v592
  %980 = vmatpush2.msra.mxu0 %v591
  %981 = vmatprep.subr.mxu0 %v588
  %982 = vmatpush2.msra.mxu0 %v587
  %983 = vmatprep.subr.mxu0 %v584
  %984 = vmatpush2.msra.mxu0 %v583
  %985 = vmatprep.subr.mxu0 %v580
  %986 = vmatpush2.msra.mxu0 %v579
  %987 = vmatprep.subr.mxu0 %v576
  %988 = vmatpush2.msra.mxu0 %v575
  %989 = vmatprep.subr.mxu0 %v572
  %990 = vmatpush2.msra.mxu0 %v571
  %991 = vmatprep.subr.mxu0 %v568
  %992 = vmatpush2.msra.mxu0 %v567
  %993 = vmatprep.subr.mxu0 %v564
  %994 = vmatpush2.msra.mxu0 %v563
  %995 = vmatprep.mubr.f32.mxu0 %v30
  %996 = vmatmul.mubr.f32.gmra.mxu0 %v29
  %v997 = vpop.f32.mrf.mxu0
  %v998 = vadd.f32 0.0, %v997
  %v999 = vpop.f32.mrf.mxu0
  %v1000 = vadd.f32 0.0, %v999
  %1001 = vmatprep.mubr.f32.mxu0 %v34
  %1002 = vmatmul.mubr.f32.gmra.mxu0 %v33
  %v1003 = vpop.f32.mrf.mxu0
  %v1004 = vadd.f32 0.0, %v1003
  %v1005 = vpop.f32.mrf.mxu0
  %v1006 = vadd.f32 0.0, %v1005
  %1007 = vmatprep.mubr.f32.mxu0 %v38
  %1008 = vmatmul.mubr.f32.gmra.mxu0 %v37
  %v1009 = vpop.f32.mrf.mxu0
  %v1010 = vadd.f32 0.0, %v1009
  %v1011 = vpop.f32.mrf.mxu0
  %v1012 = vadd.f32 0.0, %v1011
  %1013 = vmatprep.mubr.f32.mxu0 %v42
  %1014 = vmatmul.mubr.f32.gmra.mxu0 %v41
  %v1015 = vpop.f32.mrf.mxu0
  %v1016 = vadd.f32 0.0, %v1015
  %v1017 = vpop.f32.mrf.mxu0
  %v1018 = vadd.f32 0.0, %v1017
  %1019 = vdwg.mxu0
  %1020 = vmatprep.subr.mxu0 %v688
  %1021 = vmatpush1.msra.mxu0 %v687
  %1022 = vmatprep.subr.mxu0 %v684
  %1023 = vmatpush1.msra.mxu0 %v683
  %1024 = vmatprep.subr.mxu0 %v680
  %1025 = vmatpush1.msra.mxu0 %v679
  %1026 = vmatprep.subr.mxu0 %v676
  %1027 = vmatpush1.msra.mxu0 %v675
  %1028 = vmatprep.subr.mxu0 %v672
  %1029 = vmatpush1.msra.mxu0 %v671
  %1030 = vmatprep.subr.mxu0 %v668
  %1031 = vmatpush1.msra.mxu0 %v667
  %1032 = vmatprep.subr.mxu0 %v664
  %1033 = vmatpush1.msra.mxu0 %v663
  %1034 = vmatprep.subr.mxu0 %v660
  %1035 = vmatpush1.msra.mxu0 %v659
  %1036 = vmatprep.subr.mxu0 %v656
  %1037 = vmatpush1.msra.mxu0 %v655
  %1038 = vmatprep.subr.mxu0 %v652
  %1039 = vmatpush1.msra.mxu0 %v651
  %1040 = vmatprep.subr.mxu0 %v648
  %1041 = vmatpush1.msra.mxu0 %v647
  %1042 = vmatprep.subr.mxu0 %v644
  %1043 = vmatpush1.msra.mxu0 %v643
  %1044 = vmatprep.subr.mxu0 %v640
  %1045 = vmatpush1.msra.mxu0 %v639
  %1046 = vmatprep.subr.mxu0 %v636
  %1047 = vmatpush1.msra.mxu0 %v635
  %1048 = vmatprep.subr.mxu0 %v632
  %1049 = vmatpush1.msra.mxu0 %v631
  %1050 = vmatprep.subr.mxu0 %v628
  %1051 = vmatpush1.msra.mxu0 %v627
  %1052 = vmatprep.subr.mxu0 %v752
  %1053 = vmatpush2.msra.mxu0 %v751
  %1054 = vmatprep.subr.mxu0 %v748
  %1055 = vmatpush2.msra.mxu0 %v747
  %1056 = vmatprep.subr.mxu0 %v744
  %1057 = vmatpush2.msra.mxu0 %v743
  %1058 = vmatprep.subr.mxu0 %v740
  %1059 = vmatpush2.msra.mxu0 %v739
  %1060 = vmatprep.subr.mxu0 %v736
  %1061 = vmatpush2.msra.mxu0 %v735
  %1062 = vmatprep.subr.mxu0 %v732
  %1063 = vmatpush2.msra.mxu0 %v731
  %1064 = vmatprep.subr.mxu0 %v728
  %1065 = vmatpush2.msra.mxu0 %v727
  %1066 = vmatprep.subr.mxu0 %v724
  %1067 = vmatpush2.msra.mxu0 %v723
  %1068 = vmatprep.subr.mxu0 %v720
  %1069 = vmatpush2.msra.mxu0 %v719
  %1070 = vmatprep.subr.mxu0 %v716
  %1071 = vmatpush2.msra.mxu0 %v715
  %1072 = vmatprep.subr.mxu0 %v712
  %1073 = vmatpush2.msra.mxu0 %v711
  %1074 = vmatprep.subr.mxu0 %v708
  %1075 = vmatpush2.msra.mxu0 %v707
  %1076 = vmatprep.subr.mxu0 %v704
  %1077 = vmatpush2.msra.mxu0 %v703
  %1078 = vmatprep.subr.mxu0 %v700
  %1079 = vmatpush2.msra.mxu0 %v699
  %1080 = vmatprep.subr.mxu0 %v696
  %1081 = vmatpush2.msra.mxu0 %v695
  %1082 = vmatprep.subr.mxu0 %v692
  %1083 = vmatpush2.msra.mxu0 %v691
  %1084 = vmatprep.mubr.f32.mxu0 %v32
  %1085 = vmatmul.mubr.f32.gmra.mxu0 %v31
  %v1086 = vpop.f32.mrf.mxu0
  %v1087 = vadd.f32 %v998, %v1086
  %v1088 = vpop.f32.mrf.mxu0
  %v1089 = vadd.f32 %v1000, %v1088
  %1090 = vmatprep.mubr.f32.mxu0 %v36
  %1091 = vmatmul.mubr.f32.gmra.mxu0 %v35
  %v1092 = vpop.f32.mrf.mxu0
  %v1093 = vadd.f32 %v1004, %v1092
  %v1094 = vpop.f32.mrf.mxu0
  %v1095 = vadd.f32 %v1006, %v1094
  %1096 = vmatprep.mubr.f32.mxu0 %v40
  %1097 = vmatmul.mubr.f32.gmra.mxu0 %v39
  %v1098 = vpop.f32.mrf.mxu0
  %v1099 = vadd.f32 %v1010, %v1098
  %v1100 = vpop.f32.mrf.mxu0
  %v1101 = vadd.f32 %v1012, %v1100
  %1102 = vmatprep.mubr.f32.mxu0 %v44
  %1103 = vmatmul.mubr.f32.gmra.mxu0 %v43
  %v1104 = vpop.f32.mrf.mxu0
  %v1105 = vadd.f32 %v1016, %v1104
  %v1106 = vpop.f32.mrf.mxu0
  %v1107 = vadd.f32 %v1018, %v1106
  %1108 = vdwg.mxu0
  %1109 = vmatprep.subr.mxu0 %v301
  %1110 = vmatpush1.msra.mxu0 %v300
  %1111 = vmatprep.subr.mxu0 %v297
  %1112 = vmatpush1.msra.mxu0 %v296
  %1113 = vmatprep.subr.mxu0 %v293
  %1114 = vmatpush1.msra.mxu0 %v292
  %1115 = vmatprep.subr.mxu0 %v289
  %1116 = vmatpush1.msra.mxu0 %v288
  %1117 = vmatprep.subr.mxu0 %v285
  %1118 = vmatpush1.msra.mxu0 %v284
  %1119 = vmatprep.subr.mxu0 %v281
  %1120 = vmatpush1.msra.mxu0 %v280
  %1121 = vmatprep.subr.mxu0 %v277
  %1122 = vmatpush1.msra.mxu0 %v276
  %1123 = vmatprep.subr.mxu0 %v273
  %1124 = vmatpush1.msra.mxu0 %v272
  %1125 = vmatprep.subr.mxu0 %v269
  %1126 = vmatpush1.msra.mxu0 %v268
  %1127 = vmatprep.subr.mxu0 %v265
  %1128 = vmatpush1.msra.mxu0 %v264
  %1129 = vmatprep.subr.mxu0 %v261
  %1130 = vmatpush1.msra.mxu0 %v260
  %1131 = vmatprep.subr.mxu0 %v257
  %1132 = vmatpush1.msra.mxu0 %v256
  %1133 = vmatprep.subr.mxu0 %v253
  %1134 = vmatpush1.msra.mxu0 %v252
  %1135 = vmatprep.subr.mxu0 %v249
  %1136 = vmatpush1.msra.mxu0 %v248
  %1137 = vmatprep.subr.mxu0 %v245
  %1138 = vmatpush1.msra.mxu0 %v244
  %1139 = vmatprep.subr.mxu0 %v241
  %1140 = vmatpush1.msra.mxu0 %v240
  %1141 = vmatprep.subr.mxu0 %v365
  %1142 = vmatpush2.msra.mxu0 %v364
  %1143 = vmatprep.subr.mxu0 %v361
  %1144 = vmatpush2.msra.mxu0 %v360
  %1145 = vmatprep.subr.mxu0 %v357
  %1146 = vmatpush2.msra.mxu0 %v356
  %1147 = vmatprep.subr.mxu0 %v353
  %1148 = vmatpush2.msra.mxu0 %v352
  %1149 = vmatprep.subr.mxu0 %v349
  %1150 = vmatpush2.msra.mxu0 %v348
  %1151 = vmatprep.subr.mxu0 %v345
  %1152 = vmatpush2.msra.mxu0 %v344
  %1153 = vmatprep.subr.mxu0 %v341
  %1154 = vmatpush2.msra.mxu0 %v340
  %1155 = vmatprep.subr.mxu0 %v337
  %1156 = vmatpush2.msra.mxu0 %v336
  %1157 = vmatprep.subr.mxu0 %v333
  %1158 = vmatpush2.msra.mxu0 %v332
  %1159 = vmatprep.subr.mxu0 %v329
  %1160 = vmatpush2.msra.mxu0 %v328
  %1161 = vmatprep.subr.mxu0 %v325
  %1162 = vmatpush2.msra.mxu0 %v324
  %1163 = vmatprep.subr.mxu0 %v321
  %1164 = vmatpush2.msra.mxu0 %v320
  %1165 = vmatprep.subr.mxu0 %v317
  %1166 = vmatpush2.msra.mxu0 %v316
  %1167 = vmatprep.subr.mxu0 %v313
  %1168 = vmatpush2.msra.mxu0 %v312
  %1169 = vmatprep.subr.mxu0 %v309
  %1170 = vmatpush2.msra.mxu0 %v308
  %1171 = vmatprep.subr.mxu0 %v305
  %1172 = vmatpush2.msra.mxu0 %v304
  %1173 = vmatprep.mubr.f32.mxu0 %v131
  %1174 = vmatmul.mubr.f32.gmra.mxu0 %v129
  %v1175 = vpop.f32.mrf.mxu0
  %v1176 = vadd.f32 %v909, %v1175
  %v1177 = vpop.f32.mrf.mxu0
  %v1178 = vadd.f32 %v911, %v1177
  %1179 = vmatprep.mubr.f32.mxu0 %v137
  %1180 = vmatmul.mubr.f32.gmra.mxu0 %v135
  %v1181 = vpop.f32.mrf.mxu0
  %v1182 = vadd.f32 %v915, %v1181
  %v1183 = vpop.f32.mrf.mxu0
  %v1184 = vadd.f32 %v917, %v1183
  %1185 = vmatprep.mubr.f32.mxu0 %v143
  %1186 = vmatmul.mubr.f32.gmra.mxu0 %v141
  %v1187 = vpop.f32.mrf.mxu0
  %v1188 = vadd.f32 %v921, %v1187
  %v1189 = vpop.f32.mrf.mxu0
  %v1190 = vadd.f32 %v923, %v1189
  %1191 = vmatprep.mubr.f32.mxu0 %v149
  %1192 = vmatmul.mubr.f32.gmra.mxu0 %v147
  %v1193 = vpop.f32.mrf.mxu0
  %v1194 = vadd.f32 %v927, %v1193
  %v1195 = vpop.f32.mrf.mxu0
  %v1196 = vadd.f32 %v929, %v1195
  %1197 = vdwg.mxu0
  %1198 = vmatprep.subr.mxu0 %v429
  %1199 = vmatpush1.msra.mxu0 %v428
  %1200 = vmatprep.subr.mxu0 %v425
  %1201 = vmatpush1.msra.mxu0 %v424
  %1202 = vmatprep.subr.mxu0 %v421
  %1203 = vmatpush1.msra.mxu0 %v420
  %1204 = vmatprep.subr.mxu0 %v417
  %1205 = vmatpush1.msra.mxu0 %v416
  %1206 = vmatprep.subr.mxu0 %v413
  %1207 = vmatpush1.msra.mxu0 %v412
  %1208 = vmatprep.subr.mxu0 %v409
  %1209 = vmatpush1.msra.mxu0 %v408
  %1210 = vmatprep.subr.mxu0 %v405
  %1211 = vmatpush1.msra.mxu0 %v404
  %1212 = vmatprep.subr.mxu0 %v401
  %1213 = vmatpush1.msra.mxu0 %v400
  %1214 = vmatprep.subr.mxu0 %v397
  %1215 = vmatpush1.msra.mxu0 %v396
  %1216 = vmatprep.subr.mxu0 %v393
  %1217 = vmatpush1.msra.mxu0 %v392
  %1218 = vmatprep.subr.mxu0 %v389
  %1219 = vmatpush1.msra.mxu0 %v388
  %1220 = vmatprep.subr.mxu0 %v385
  %1221 = vmatpush1.msra.mxu0 %v384
  %1222 = vmatprep.subr.mxu0 %v381
  %1223 = vmatpush1.msra.mxu0 %v380
  %1224 = vmatprep.subr.mxu0 %v377
  %1225 = vmatpush1.msra.mxu0 %v376
  %1226 = vmatprep.subr.mxu0 %v373
  %1227 = vmatpush1.msra.mxu0 %v372
  %1228 = vmatprep.subr.mxu0 %v369
  %1229 = vmatpush1.msra.mxu0 %v368
  %1230 = vmatprep.subr.mxu0 %v493
  %1231 = vmatpush2.msra.mxu0 %v492
  %1232 = vmatprep.subr.mxu0 %v489
  %1233 = vmatpush2.msra.mxu0 %v488
  %1234 = vmatprep.subr.mxu0 %v485
  %1235 = vmatpush2.msra.mxu0 %v484
  %1236 = vmatprep.subr.mxu0 %v481
  %1237 = vmatpush2.msra.mxu0 %v480
  %1238 = vmatprep.subr.mxu0 %v477
  %1239 = vmatpush2.msra.mxu0 %v476
  %1240 = vmatprep.subr.mxu0 %v473
  %1241 = vmatpush2.msra.mxu0 %v472
  %1242 = vmatprep.subr.mxu0 %v469
  %1243 = vmatpush2.msra.mxu0 %v468
  %1244 = vmatprep.subr.mxu0 %v465
  %1245 = vmatpush2.msra.mxu0 %v464
  %1246 = vmatprep.subr.mxu0 %v461
  %1247 = vmatpush2.msra.mxu0 %v460
  %1248 = vmatprep.subr.mxu0 %v457
  %1249 = vmatpush2.msra.mxu0 %v456
  %1250 = vmatprep.subr.mxu0 %v453
  %1251 = vmatpush2.msra.mxu0 %v452
  %1252 = vmatprep.subr.mxu0 %v449
  %1253 = vmatpush2.msra.mxu0 %v448
  %1254 = vmatprep.subr.mxu0 %v445
  %1255 = vmatpush2.msra.mxu0 %v444
  %1256 = vmatprep.subr.mxu0 %v441
  %1257 = vmatpush2.msra.mxu0 %v440
  %1258 = vmatprep.subr.mxu0 %v437
  %1259 = vmatpush2.msra.mxu0 %v436
  %1260 = vmatprep.subr.mxu0 %v433
  %1261 = vmatpush2.msra.mxu0 %v432
  %1262 = vmatprep.mubr.f32.mxu0 %v220
  %1263 = vmatmul.mubr.f32.gmra.mxu0 %v218
  %v1264 = vpop.f32.mrf.mxu0
  %v1265 = vadd.f32 %v1176, %v1264
  %v1266 = vpop.f32.mrf.mxu0
  %v1267 = vadd.f32 %v1178, %v1266
  %1268 = vmatprep.mubr.f32.mxu0 %v226
  %1269 = vmatmul.mubr.f32.gmra.mxu0 %v224
  %v1270 = vpop.f32.mrf.mxu0
  %v1271 = vadd.f32 %v1182, %v1270
  %v1272 = vpop.f32.mrf.mxu0
  %v1273 = vadd.f32 %v1184, %v1272
  %1274 = vmatprep.mubr.f32.mxu0 %v232
  %1275 = vmatmul.mubr.f32.gmra.mxu0 %v230
  %v1276 = vpop.f32.mrf.mxu0
  %v1277 = vadd.f32 %v1188, %v1276
  %v1278 = vpop.f32.mrf.mxu0
  %v1279 = vadd.f32 %v1190, %v1278
  %1280 = vmatprep.mubr.f32.mxu0 %v238
  %1281 = vmatmul.mubr.f32.gmra.mxu0 %v236
  %v1282 = vpop.f32.mrf.mxu0
  %v1283 = vadd.f32 %v1194, %v1282
  %v1284 = vpop.f32.mrf.mxu0
  %v1285 = vadd.f32 %v1196, %v1284
  %1286 = vdwg.mxu0
  %1287 = vmatprep.subr.mxu0 %v303
  %1288 = vmatpush1.msra.mxu0 %v302
  %1289 = vmatprep.subr.mxu0 %v299
  %1290 = vmatpush1.msra.mxu0 %v298
  %1291 = vmatprep.subr.mxu0 %v295
  %1292 = vmatpush1.msra.mxu0 %v294
  %1293 = vmatprep.subr.mxu0 %v291
  %1294 = vmatpush1.msra.mxu0 %v290
  %1295 = vmatprep.subr.mxu0 %v287
  %1296 = vmatpush1.msra.mxu0 %v286
  %1297 = vmatprep.subr.mxu0 %v283
  %1298 = vmatpush1.msra.mxu0 %v282
  %1299 = vmatprep.subr.mxu0 %v279
  %1300 = vmatpush1.msra.mxu0 %v278
  %1301 = vmatprep.subr.mxu0 %v275
  %1302 = vmatpush1.msra.mxu0 %v274
  %1303 = vmatprep.subr.mxu0 %v271
  %1304 = vmatpush1.msra.mxu0 %v270
  %1305 = vmatprep.subr.mxu0 %v267
  %1306 = vmatpush1.msra.mxu0 %v266
  %1307 = vmatprep.subr.mxu0 %v263
  %1308 = vmatpush1.msra.mxu0 %v262
  %1309 = vmatprep.subr.mxu0 %v259
  %1310 = vmatpush1.msra.mxu0 %v258
  %1311 = vmatprep.subr.mxu0 %v255
  %1312 = vmatpush1.msra.mxu0 %v254
  %1313 = vmatprep.subr.mxu0 %v251
  %1314 = vmatpush1.msra.mxu0 %v250
  %1315 = vmatprep.subr.mxu0 %v247
  %1316 = vmatpush1.msra.mxu0 %v246
  %1317 = vmatprep.subr.mxu0 %v243
  %1318 = vmatpush1.msra.mxu0 %v242
  %1319 = vmatprep.subr.mxu0 %v367
  %1320 = vmatpush2.msra.mxu0 %v366
  %1321 = vmatprep.subr.mxu0 %v363
  %1322 = vmatpush2.msra.mxu0 %v362
  %1323 = vmatprep.subr.mxu0 %v359
  %1324 = vmatpush2.msra.mxu0 %v358
  %1325 = vmatprep.subr.mxu0 %v355
  %1326 = vmatpush2.msra.mxu0 %v354
  %1327 = vmatprep.subr.mxu0 %v351
  %1328 = vmatpush2.msra.mxu0 %v350
  %1329 = vmatprep.subr.mxu0 %v347
  %1330 = vmatpush2.msra.mxu0 %v346
  %1331 = vmatprep.subr.mxu0 %v343
  %1332 = vmatpush2.msra.mxu0 %v342
  %1333 = vmatprep.subr.mxu0 %v339
  %1334 = vmatpush2.msra.mxu0 %v338
  %1335 = vmatprep.subr.mxu0 %v335
  %1336 = vmatpush2.msra.mxu0 %v334
  %1337 = vmatprep.subr.mxu0 %v331
  %1338 = vmatpush2.msra.mxu0 %v330
  %1339 = vmatprep.subr.mxu0 %v327
  %1340 = vmatpush2.msra.mxu0 %v326
  %1341 = vmatprep.subr.mxu0 %v323
  %1342 = vmatpush2.msra.mxu0 %v322
  %1343 = vmatprep.subr.mxu0 %v319
  %1344 = vmatpush2.msra.mxu0 %v318
  %1345 = vmatprep.subr.mxu0 %v315
  %1346 = vmatpush2.msra.mxu0 %v314
  %1347 = vmatprep.subr.mxu0 %v311
  %1348 = vmatpush2.msra.mxu0 %v310
  %1349 = vmatprep.subr.mxu0 %v307
  %1350 = vmatpush2.msra.mxu0 %v306
  %1351 = vmatprep.mubr.f32.mxu0 %v131
  %1352 = vmatmul.mubr.f32.gmra.mxu0 %v129
  %v1353 = vpop.f32.mrf.mxu0
  %v1354 = vadd.f32 %v1087, %v1353
  %v1355 = vpop.f32.mrf.mxu0
  %v1356 = vadd.f32 %v1089, %v1355
  %1357 = vmatprep.mubr.f32.mxu0 %v137
  %1358 = vmatmul.mubr.f32.gmra.mxu0 %v135
  %v1359 = vpop.f32.mrf.mxu0
  %v1360 = vadd.f32 %v1093, %v1359
  %v1361 = vpop.f32.mrf.mxu0
  %v1362 = vadd.f32 %v1095, %v1361
  %1363 = vmatprep.mubr.f32.mxu0 %v143
  %1364 = vmatmul.mubr.f32.gmra.mxu0 %v141
  %v1365 = vpop.f32.mrf.mxu0
  %v1366 = vadd.f32 %v1099, %v1365
  %v1367 = vpop.f32.mrf.mxu0
  %v1368 = vadd.f32 %v1101, %v1367
  %1369 = vmatprep.mubr.f32.mxu0 %v149
  %1370 = vmatmul.mubr.f32.gmra.mxu0 %v147
  %v1371 = vpop.f32.mrf.mxu0
  %v1372 = vadd.f32 %v1105, %v1371
  %v1373 = vpop.f32.mrf.mxu0
  %v1374 = vadd.f32 %v1107, %v1373
  %1375 = vdwg.mxu0
  %1376 = vmatprep.subr.mxu0 %v431
  %1377 = vmatpush1.msra.mxu0 %v430
  %1378 = vmatprep.subr.mxu0 %v427
  %1379 = vmatpush1.msra.mxu0 %v426
  %1380 = vmatprep.subr.mxu0 %v423
  %1381 = vmatpush1.msra.mxu0 %v422
  %1382 = vmatprep.subr.mxu0 %v419
  %1383 = vmatpush1.msra.mxu0 %v418
  %1384 = vmatprep.subr.mxu0 %v415
  %1385 = vmatpush1.msra.mxu0 %v414
  %1386 = vmatprep.subr.mxu0 %v411
  %1387 = vmatpush1.msra.mxu0 %v410
  %1388 = vmatprep.subr.mxu0 %v407
  %1389 = vmatpush1.msra.mxu0 %v406
  %1390 = vmatprep.subr.mxu0 %v403
  %1391 = vmatpush1.msra.mxu0 %v402
  %1392 = vmatprep.subr.mxu0 %v399
  %1393 = vmatpush1.msra.mxu0 %v398
  %1394 = vmatprep.subr.mxu0 %v395
  %1395 = vmatpush1.msra.mxu0 %v394
  %1396 = vmatprep.subr.mxu0 %v391
  %1397 = vmatpush1.msra.mxu0 %v390
  %1398 = vmatprep.subr.mxu0 %v387
  %1399 = vmatpush1.msra.mxu0 %v386
  %1400 = vmatprep.subr.mxu0 %v383
  %1401 = vmatpush1.msra.mxu0 %v382
  %1402 = vmatprep.subr.mxu0 %v379
  %1403 = vmatpush1.msra.mxu0 %v378
  %1404 = vmatprep.subr.mxu0 %v375
  %1405 = vmatpush1.msra.mxu0 %v374
  %1406 = vmatprep.subr.mxu0 %v371
  %1407 = vmatpush1.msra.mxu0 %v370
  %1408 = vmatprep.subr.mxu0 %v495
  %1409 = vmatpush2.msra.mxu0 %v494
  %1410 = vmatprep.subr.mxu0 %v491
  %1411 = vmatpush2.msra.mxu0 %v490
  %1412 = vmatprep.subr.mxu0 %v487
  %1413 = vmatpush2.msra.mxu0 %v486
  %1414 = vmatprep.subr.mxu0 %v483
  %1415 = vmatpush2.msra.mxu0 %v482
  %1416 = vmatprep.subr.mxu0 %v479
  %1417 = vmatpush2.msra.mxu0 %v478
  %1418 = vmatprep.subr.mxu0 %v475
  %1419 = vmatpush2.msra.mxu0 %v474
  %1420 = vmatprep.subr.mxu0 %v471
  %1421 = vmatpush2.msra.mxu0 %v470
  %1422 = vmatprep.subr.mxu0 %v467
  %1423 = vmatpush2.msra.mxu0 %v466
  %1424 = vmatprep.subr.mxu0 %v463
  %1425 = vmatpush2.msra.mxu0 %v462
  %1426 = vmatprep.subr.mxu0 %v459
  %1427 = vmatpush2.msra.mxu0 %v458
  %1428 = vmatprep.subr.mxu0 %v455
  %1429 = vmatpush2.msra.mxu0 %v454
  %1430 = vmatprep.subr.mxu0 %v451
  %1431 = vmatpush2.msra.mxu0 %v450
  %1432 = vmatprep.subr.mxu0 %v447
  %1433 = vmatpush2.msra.mxu0 %v446
  %1434 = vmatprep.subr.mxu0 %v443
  %1435 = vmatpush2.msra.mxu0 %v442
  %1436 = vmatprep.subr.mxu0 %v439
  %1437 = vmatpush2.msra.mxu0 %v438
  %1438 = vmatprep.subr.mxu0 %v435
  %1439 = vmatpush2.msra.mxu0 %v434
  %1440 = vmatprep.mubr.f32.mxu0 %v220
  %1441 = vmatmul.mubr.f32.gmra.mxu0 %v218
  %v1442 = vpop.f32.mrf.mxu0
  %v1443 = vadd.f32 %v1354, %v1442
  %v1444 = vpop.f32.mrf.mxu0
  %v1445 = vadd.f32 %v1356, %v1444
  %1446 = vmatprep.mubr.f32.mxu0 %v226
  %1447 = vmatmul.mubr.f32.gmra.mxu0 %v224
  %v1448 = vpop.f32.mrf.mxu0
  %v1449 = vadd.f32 %v1360, %v1448
  %v1450 = vpop.f32.mrf.mxu0
  %v1451 = vadd.f32 %v1362, %v1450
  %1452 = vmatprep.mubr.f32.mxu0 %v232
  %1453 = vmatmul.mubr.f32.gmra.mxu0 %v230
  %v1454 = vpop.f32.mrf.mxu0
  %v1455 = vadd.f32 %v1366, %v1454
  %v1456 = vpop.f32.mrf.mxu0
  %v1457 = vadd.f32 %v1368, %v1456
  %1458 = vmatprep.mubr.f32.mxu0 %v238
  %1459 = vmatmul.mubr.f32.gmra.mxu0 %v236
  %v1460 = vpop.f32.mrf.mxu0
  %v1461 = vadd.f32 %v1372, %v1460
  %v1462 = vpop.f32.mrf.mxu0
  %v1463 = vadd.f32 %v1374, %v1462
  %1464 = vdwg.mxu0
  %v1466 = vsel %vm49, 1.0, 0
  %1468 = vmatprep.subr.mxu0 0.0
  %1469 = vmatpush1.msra.mxu0 0.0
  %1470 = vmatprep.subr.mxu0 0.0
  %1471 = vmatpush1.msra.mxu0 0.0
  %1472 = vmatprep.subr.mxu0 0.0
  %1473 = vmatpush1.msra.mxu0 0.0
  %1474 = vmatprep.subr.mxu0 0.0
  %1475 = vmatpush1.msra.mxu0 0.0
  %1476 = vmatprep.subr.mxu0 0.0
  %1477 = vmatpush1.msra.mxu0 0.0
  %1478 = vmatprep.subr.mxu0 0.0
  %1479 = vmatpush1.msra.mxu0 0.0
  %1480 = vmatprep.subr.mxu0 0.0
  %1481 = vmatpush1.msra.mxu0 0.0
  %1482 = vmatprep.subr.mxu0 0.0
  %1483 = vmatpush1.msra.mxu0 0.0
  %1484 = vmatprep.subr.mxu0 0.0
  %1485 = vmatpush1.msra.mxu0 0.0
  %1486 = vmatprep.subr.mxu0 0.0
  %1487 = vmatpush1.msra.mxu0 0.0
  %1488 = vmatprep.subr.mxu0 0.0
  %1489 = vmatpush1.msra.mxu0 0.0
  %1490 = vmatprep.subr.mxu0 0.0
  %1491 = vmatpush1.msra.mxu0 0.0
  %1492 = vmatprep.subr.mxu0 %v1285
  %1493 = vmatpush1.msra.mxu0 %v1283
  %1494 = vmatprep.subr.mxu0 %v1279
  %1495 = vmatpush1.msra.mxu0 %v1277
  %1496 = vmatprep.subr.mxu0 %v1273
  %1497 = vmatpush1.msra.mxu0 %v1271
  %1498 = vmatprep.subr.mxu0 %v1267
  %1499 = vmatpush1.msra.mxu0 %v1265
  %1500 = vmatprep.subr.mxu0 0.0
  %1501 = vmatpush2.msra.mxu0 0.0
  %1502 = vmatprep.subr.mxu0 0.0
  %1503 = vmatpush2.msra.mxu0 0.0
  %1504 = vmatprep.subr.mxu0 0.0
  %1505 = vmatpush2.msra.mxu0 0.0
  %1506 = vmatprep.subr.mxu0 0.0
  %1507 = vmatpush2.msra.mxu0 0.0
  %1508 = vmatprep.subr.mxu0 0.0
  %1509 = vmatpush2.msra.mxu0 0.0
  %1510 = vmatprep.subr.mxu0 0.0
  %1511 = vmatpush2.msra.mxu0 0.0
  %1512 = vmatprep.subr.mxu0 0.0
  %1513 = vmatpush2.msra.mxu0 0.0
  %1514 = vmatprep.subr.mxu0 0.0
  %1515 = vmatpush2.msra.mxu0 0.0
  %1516 = vmatprep.subr.mxu0 0.0
  %1517 = vmatpush2.msra.mxu0 0.0
  %1518 = vmatprep.subr.mxu0 0.0
  %1519 = vmatpush2.msra.mxu0 0.0
  %1520 = vmatprep.subr.mxu0 0.0
  %1521 = vmatpush2.msra.mxu0 0.0
  %1522 = vmatprep.subr.mxu0 0.0
  %1523 = vmatpush2.msra.mxu0 0.0
  %1524 = vmatprep.subr.mxu0 0.0
  %1525 = vmatpush2.msra.mxu0 0.0
  %1526 = vmatprep.subr.mxu0 0.0
  %1527 = vmatpush2.msra.mxu0 0.0
  %1528 = vmatprep.subr.mxu0 0.0
  %1529 = vmatpush2.msra.mxu0 0.0
  %1530 = vmatprep.subr.mxu0 0.0
  %1531 = vmatpush2.msra.mxu0 0.0
  %1532 = vmatprep.mubr.f32.mxu0 0.0
  %1533 = vmatmul.mubr.f32.gmra.mxu0 %v1466
  %v1534 = vpop.f32.mrf.mxu0
  %v1535 = vadd.f32 0.0, %v1534
  %v1536 = vpop.f32.mrf.mxu0
  %v1537 = vadd.f32 0.0, %v1536
  %1538 = vdwg.mxu0
  %1539 = vmatprep.subr.mxu0 0.0
  %1540 = vmatpush1.msra.mxu0 0.0
  %1541 = vmatprep.subr.mxu0 0.0
  %1542 = vmatpush1.msra.mxu0 0.0
  %1543 = vmatprep.subr.mxu0 0.0
  %1544 = vmatpush1.msra.mxu0 0.0
  %1545 = vmatprep.subr.mxu0 0.0
  %1546 = vmatpush1.msra.mxu0 0.0
  %1547 = vmatprep.subr.mxu0 0.0
  %1548 = vmatpush1.msra.mxu0 0.0
  %1549 = vmatprep.subr.mxu0 0.0
  %1550 = vmatpush1.msra.mxu0 0.0
  %1551 = vmatprep.subr.mxu0 0.0
  %1552 = vmatpush1.msra.mxu0 0.0
  %1553 = vmatprep.subr.mxu0 0.0
  %1554 = vmatpush1.msra.mxu0 0.0
  %1555 = vmatprep.subr.mxu0 0.0
  %1556 = vmatpush1.msra.mxu0 0.0
  %1557 = vmatprep.subr.mxu0 0.0
  %1558 = vmatpush1.msra.mxu0 0.0
  %1559 = vmatprep.subr.mxu0 0.0
  %1560 = vmatpush1.msra.mxu0 0.0
  %1561 = vmatprep.subr.mxu0 0.0
  %1562 = vmatpush1.msra.mxu0 0.0
  %1563 = vmatprep.subr.mxu0 %v1463
  %1564 = vmatpush1.msra.mxu0 %v1461
  %1565 = vmatprep.subr.mxu0 %v1457
  %1566 = vmatpush1.msra.mxu0 %v1455
  %1567 = vmatprep.subr.mxu0 %v1451
  %1568 = vmatpush1.msra.mxu0 %v1449
  %1569 = vmatprep.subr.mxu0 %v1445
  %1570 = vmatpush1.msra.mxu0 %v1443
  %1571 = vmatprep.subr.mxu0 0.0
  %1572 = vmatpush2.msra.mxu0 0.0
  %1573 = vmatprep.subr.mxu0 0.0
  %1574 = vmatpush2.msra.mxu0 0.0
  %1575 = vmatprep.subr.mxu0 0.0
  %1576 = vmatpush2.msra.mxu0 0.0
  %1577 = vmatprep.subr.mxu0 0.0
  %1578 = vmatpush2.msra.mxu0 0.0
  %1579 = vmatprep.subr.mxu0 0.0
  %1580 = vmatpush2.msra.mxu0 0.0
  %1581 = vmatprep.subr.mxu0 0.0
  %1582 = vmatpush2.msra.mxu0 0.0
  %1583 = vmatprep.subr.mxu0 0.0
  %1584 = vmatpush2.msra.mxu0 0.0
  %1585 = vmatprep.subr.mxu0 0.0
  %1586 = vmatpush2.msra.mxu0 0.0
  %1587 = vmatprep.subr.mxu0 0.0
  %1588 = vmatpush2.msra.mxu0 0.0
  %1589 = vmatprep.subr.mxu0 0.0
  %1590 = vmatpush2.msra.mxu0 0.0
  %1591 = vmatprep.subr.mxu0 0.0
  %1592 = vmatpush2.msra.mxu0 0.0
  %1593 = vmatprep.subr.mxu0 0.0
  %1594 = vmatpush2.msra.mxu0 0.0
  %1595 = vmatprep.subr.mxu0 0.0
  %1596 = vmatpush2.msra.mxu0 0.0
  %1597 = vmatprep.subr.mxu0 0.0
  %1598 = vmatpush2.msra.mxu0 0.0
  %1599 = vmatprep.subr.mxu0 0.0
  %1600 = vmatpush2.msra.mxu0 0.0
  %1601 = vmatprep.subr.mxu0 0.0
  %1602 = vmatpush2.msra.mxu0 0.0
  %1603 = vmatprep.mubr.f32.mxu0 0.0
  %1604 = vmatmul.mubr.f32.gmra.mxu0 %v1466
  %v1605 = vpop.f32.mrf.mxu0
  %v1606 = vadd.f32 0.0, %v1605
  %v1607 = vpop.f32.mrf.mxu0
  %v1608 = vadd.f32 0.0, %v1607
  %1609 = vdwg.mxu0
  %v1610 = vld [vmem:[%s4] sm:$0xff]
  %v1611 = vld [vmem:[%s4 + $0x8] sm:$0xff]
  %v1612 = vld [vmem:[%s4 + $0x10] sm:$0xff]
  %v1613 = vld [vmem:[%s4 + $0x18] sm:$0xff]
  %v1614 = vld [vmem:[%s4 + $0x20] sm:$0xff]
  %v1615 = vld [vmem:[%s4 + $0x28] sm:$0xff]
  %v1616 = vld [vmem:[%s4 + $0x30] sm:$0xff]
  %v1617 = vld [vmem:[%s4 + $0x38] sm:$0xff]
  %v1618 = vld [vmem:[%s4 + $0x40] sm:$0xff]
  %v1619 = vld [vmem:[%s4 + $0x48] sm:$0xff]
  %v1620 = vld [vmem:[%s4 + $0x50] sm:$0xff]
  %v1621 = vld [vmem:[%s4 + $0x58] sm:$0xff]
  %v1622 = vld [vmem:[%s4 + $0x60] sm:$0xff]
  %v1623 = vld [vmem:[%s4 + $0x68] sm:$0xff]
  %v1624 = vld [vmem:[%s4 + $0x70] sm:$0xff]
  %v1625 = vld [vmem:[%s4 + $0x78] sm:$0xff]
  %v1626 = vld [vmem:[%s4 + $0x80] sm:$0xff]
  %v1627 = vld [vmem:[%s4 + $0x88] sm:$0xff]
  %v1628 = vld [vmem:[%s4 + $0x90] sm:$0xff]
  %v1629 = vld [vmem:[%s4 + $0x98] sm:$0xff]
  %v1630 = vld [vmem:[%s4 + $0xa0] sm:$0xff]
  %v1631 = vld [vmem:[%s4 + $0xa8] sm:$0xff]
  %v1632 = vld [vmem:[%s4 + $0xb0] sm:$0xff]
  %v1633 = vld [vmem:[%s4 + $0xb8] sm:$0xff]
  %v1634 = vld [vmem:[%s4 + $0xc0] sm:$0xff]
  %v1635 = vld [vmem:[%s4 + $0xc8] sm:$0xff]
  %v1636 = vld [vmem:[%s4 + $0xd0] sm:$0xff]
  %v1637 = vld [vmem:[%s4 + $0xd8] sm:$0xff]
  %v1638 = vld [vmem:[%s4 + $0xe0] sm:$0xff]
  %v1639 = vld [vmem:[%s4 + $0xe8] sm:$0xff]
  %v1640 = vld [vmem:[%s4 + $0xf0] sm:$0xff]
  %v1641 = vld [vmem:[%s4 + $0xf8] sm:$0xff]
  %v1642 = vld [vmem:[%s4 + $0x100] sm:$0xff]
  %v1643 = vld [vmem:[%s4 + $0x108] sm:$0xff]
  %v1644 = vld [vmem:[%s4 + $0x110] sm:$0xff]
  %v1645 = vld [vmem:[%s4 + $0x118] sm:$0xff]
  %v1646 = vld [vmem:[%s4 + $0x120] sm:$0xff]
  %v1647 = vld [vmem:[%s4 + $0x128] sm:$0xff]
  %v1648 = vld [vmem:[%s4 + $0x130] sm:$0xff]
  %v1649 = vld [vmem:[%s4 + $0x138] sm:$0xff]
  %v1650 = vld [vmem:[%s4 + $0x140] sm:$0xff]
  %v1651 = vld [vmem:[%s4 + $0x148] sm:$0xff]
  %v1652 = vld [vmem:[%s4 + $0x150] sm:$0xff]
  %v1653 = vld [vmem:[%s4 + $0x158] sm:$0xff]
  %v1654 = vld [vmem:[%s4 + $0x160] sm:$0xff]
  %v1655 = vld [vmem:[%s4 + $0x168] sm:$0xff]
  %v1656 = vld [vmem:[%s4 + $0x170] sm:$0xff]
  %v1657 = vld [vmem:[%s4 + $0x178] sm:$0xff]
  %v1658 = vld [vmem:[%s4 + $0x180] sm:$0xff]
  %v1659 = vld [vmem:[%s4 + $0x188] sm:$0xff]
  %v1660 = vld [vmem:[%s4 + $0x190] sm:$0xff]
  %v1661 = vld [vmem:[%s4 + $0x198] sm:$0xff]
  %v1662 = vld [vmem:[%s4 + $0x1a0] sm:$0xff]
  %v1663 = vld [vmem:[%s4 + $0x1a8] sm:$0xff]
  %v1664 = vld [vmem:[%s4 + $0x1b0] sm:$0xff]
  %v1665 = vld [vmem:[%s4 + $0x1b8] sm:$0xff]
  %v1666 = vld [vmem:[%s4 + $0x1c0] sm:$0xff]
  %v1667 = vld [vmem:[%s4 + $0x1c8] sm:$0xff]
  %v1668 = vld [vmem:[%s4 + $0x1d0] sm:$0xff]
  %v1669 = vld [vmem:[%s4 + $0x1d8] sm:$0xff]
  %v1670 = vld [vmem:[%s4 + $0x1e0] sm:$0xff]
  %v1671 = vld [vmem:[%s4 + $0x1e8] sm:$0xff]
  %v1672 = vld [vmem:[%s4 + $0x1f0] sm:$0xff]
  %v1673 = vld [vmem:[%s4 + $0x1f8] sm:$0xff]
  %1674 = vmatprep.subr.mxu0 0.0
  %1675 = vmatpush1.msra.mxu0 %v1625
  %1676 = vmatprep.subr.mxu0 0.0
  %1677 = vmatpush1.msra.mxu0 %v1624
  %1678 = vmatprep.subr.mxu0 0.0
  %1679 = vmatpush1.msra.mxu0 %v1623
  %1680 = vmatprep.subr.mxu0 0.0
  %1681 = vmatpush1.msra.mxu0 %v1622
  %1682 = vmatprep.subr.mxu0 0.0
  %1683 = vmatpush1.msra.mxu0 %v1621
  %1684 = vmatprep.subr.mxu0 0.0
  %1685 = vmatpush1.msra.mxu0 %v1620
  %1686 = vmatprep.subr.mxu0 0.0
  %1687 = vmatpush1.msra.mxu0 %v1619
  %1688 = vmatprep.subr.mxu0 0.0
  %1689 = vmatpush1.msra.mxu0 %v1618
  %1690 = vmatprep.subr.mxu0 0.0
  %1691 = vmatpush1.msra.mxu0 %v1617
  %1692 = vmatprep.subr.mxu0 0.0
  %1693 = vmatpush1.msra.mxu0 %v1616
  %1694 = vmatprep.subr.mxu0 0.0
  %1695 = vmatpush1.msra.mxu0 %v1615
  %1696 = vmatprep.subr.mxu0 0.0
  %1697 = vmatpush1.msra.mxu0 %v1614
  %1698 = vmatprep.subr.mxu0 0.0
  %1699 = vmatpush1.msra.mxu0 %v1613
  %1700 = vmatprep.subr.mxu0 0.0
  %1701 = vmatpush1.msra.mxu0 %v1612
  %1702 = vmatprep.subr.mxu0 0.0
  %1703 = vmatpush1.msra.mxu0 %v1611
  %1704 = vmatprep.subr.mxu0 0.0
  %1705 = vmatpush1.msra.mxu0 %v1610
  %1706 = vmatprep.subr.mxu0 0.0
  %1707 = vmatpush2.msra.mxu0 %v1641
  %1708 = vmatprep.subr.mxu0 0.0
  %1709 = vmatpush2.msra.mxu0 %v1640
  %1710 = vmatprep.subr.mxu0 0.0
  %1711 = vmatpush2.msra.mxu0 %v1639
  %1712 = vmatprep.subr.mxu0 0.0
  %1713 = vmatpush2.msra.mxu0 %v1638
  %1714 = vmatprep.subr.mxu0 0.0
  %1715 = vmatpush2.msra.mxu0 %v1637
  %1716 = vmatprep.subr.mxu0 0.0
  %1717 = vmatpush2.msra.mxu0 %v1636
  %1718 = vmatprep.subr.mxu0 0.0
  %1719 = vmatpush2.msra.mxu0 %v1635
  %1720 = vmatprep.subr.mxu0 0.0
  %1721 = vmatpush2.msra.mxu0 %v1634
  %1722 = vmatprep.subr.mxu0 0.0
  %1723 = vmatpush2.msra.mxu0 %v1633
  %1724 = vmatprep.subr.mxu0 0.0
  %1725 = vmatpush2.msra.mxu0 %v1632
  %1726 = vmatprep.subr.mxu0 0.0
  %1727 = vmatpush2.msra.mxu0 %v1631
  %1728 = vmatprep.subr.mxu0 0.0
  %1729 = vmatpush2.msra.mxu0 %v1630
  %1730 = vmatprep.subr.mxu0 0.0
  %1731 = vmatpush2.msra.mxu0 %v1629
  %1732 = vmatprep.subr.mxu0 0.0
  %1733 = vmatpush2.msra.mxu0 %v1628
  %1734 = vmatprep.subr.mxu0 0.0
  %1735 = vmatpush2.msra.mxu0 %v1627
  %1736 = vmatprep.subr.mxu0 0.0
  %1737 = vmatpush2.msra.mxu0 %v1626
  %1738 = vmatprep.mubr.f32.mxu0 %v1537
  %1739 = vmatmul.mubr.f32.gmra.mxu0 %v1535
  %v1740 = vpop.f32.mrf.mxu0
  %v1741 = vadd.f32 0.0, %v1740
  %v1742 = vpop.f32.mrf.mxu0
  %1743 = vdwg.mxu0
  %1744 = vmatprep.subr.mxu0 0.0
  %1745 = vmatpush1.msra.mxu0 %v1657
  %1746 = vmatprep.subr.mxu0 0.0
  %1747 = vmatpush1.msra.mxu0 %v1656
  %1748 = vmatprep.subr.mxu0 0.0
  %1749 = vmatpush1.msra.mxu0 %v1655
  %1750 = vmatprep.subr.mxu0 0.0
  %1751 = vmatpush1.msra.mxu0 %v1654
  %1752 = vmatprep.subr.mxu0 0.0
  %1753 = vmatpush1.msra.mxu0 %v1653
  %1754 = vmatprep.subr.mxu0 0.0
  %1755 = vmatpush1.msra.mxu0 %v1652
  %1756 = vmatprep.subr.mxu0 0.0
  %1757 = vmatpush1.msra.mxu0 %v1651
  %1758 = vmatprep.subr.mxu0 0.0
  %1759 = vmatpush1.msra.mxu0 %v1650
  %1760 = vmatprep.subr.mxu0 0.0
  %1761 = vmatpush1.msra.mxu0 %v1649
  %1762 = vmatprep.subr.mxu0 0.0
  %1763 = vmatpush1.msra.mxu0 %v1648
  %1764 = vmatprep.subr.mxu0 0.0
  %1765 = vmatpush1.msra.mxu0 %v1647
  %1766 = vmatprep.subr.mxu0 0.0
  %1767 = vmatpush1.msra.mxu0 %v1646
  %1768 = vmatprep.subr.mxu0 0.0
  %1769 = vmatpush1.msra.mxu0 %v1645
  %1770 = vmatprep.subr.mxu0 0.0
  %1771 = vmatpush1.msra.mxu0 %v1644
  %1772 = vmatprep.subr.mxu0 0.0
  %1773 = vmatpush1.msra.mxu0 %v1643
  %1774 = vmatprep.subr.mxu0 0.0
  %1775 = vmatpush1.msra.mxu0 %v1642
  %1776 = vmatprep.subr.mxu0 0.0
  %1777 = vmatpush2.msra.mxu0 %v1673
  %1778 = vmatprep.subr.mxu0 0.0
  %1779 = vmatpush2.msra.mxu0 %v1672
  %1780 = vmatprep.subr.mxu0 0.0
  %1781 = vmatpush2.msra.mxu0 %v1671
  %1782 = vmatprep.subr.mxu0 0.0
  %1783 = vmatpush2.msra.mxu0 %v1670
  %1784 = vmatprep.subr.mxu0 0.0
  %1785 = vmatpush2.msra.mxu0 %v1669
  %1786 = vmatprep.subr.mxu0 0.0
  %1787 = vmatpush2.msra.mxu0 %v1668
  %1788 = vmatprep.subr.mxu0 0.0
  %1789 = vmatpush2.msra.mxu0 %v1667
  %1790 = vmatprep.subr.mxu0 0.0
  %1791 = vmatpush2.msra.mxu0 %v1666
  %1792 = vmatprep.subr.mxu0 0.0
  %1793 = vmatpush2.msra.mxu0 %v1665
  %1794 = vmatprep.subr.mxu0 0.0
  %1795 = vmatpush2.msra.mxu0 %v1664
  %1796 = vmatprep.subr.mxu0 0.0
  %1797 = vmatpush2.msra.mxu0 %v1663
  %1798 = vmatprep.subr.mxu0 0.0
  %1799 = vmatpush2.msra.mxu0 %v1662
  %1800 = vmatprep.subr.mxu0 0.0
  %1801 = vmatpush2.msra.mxu0 %v1661
  %1802 = vmatprep.subr.mxu0 0.0
  %1803 = vmatpush2.msra.mxu0 %v1660
  %1804 = vmatprep.subr.mxu0 0.0
  %1805 = vmatpush2.msra.mxu0 %v1659
  %1806 = vmatprep.subr.mxu0 0.0
  %1807 = vmatpush2.msra.mxu0 %v1658
  %1808 = vmatprep.mubr.f32.mxu0 %v1608
  %1809 = vmatmul.mubr.f32.gmra.mxu0 %v1606
  %v1810 = vpop.f32.mrf.mxu0
  %v1811 = vadd.f32 %v1741, %v1810
  %v1812 = vpop.f32.mrf.mxu0
  %1813 = vdwg.mxu0
  %v1814 = vmul.f32 %v1811, 0.001953125
  %v1815 = vld [vmem:[%s5] sm:$0xff]
  %v1816 = vld [vmem:[%s5 + $0x8] sm:$0xff]
  %v1817 = vld [vmem:[%s5 + $0x10] sm:$0xff]
  %v1818 = vld [vmem:[%s5 + $0x18] sm:$0xff]
  %v1819 = vld [vmem:[%s5 + $0x20] sm:$0xff]
  %v1820 = vld [vmem:[%s5 + $0x28] sm:$0xff]
  %v1821 = vld [vmem:[%s5 + $0x30] sm:$0xff]
  %v1822 = vld [vmem:[%s5 + $0x38] sm:$0xff]
  %v1823 = vld [vmem:[%s5 + $0x40] sm:$0xff]
  %v1824 = vld [vmem:[%s5 + $0x48] sm:$0xff]
  %v1825 = vld [vmem:[%s5 + $0x50] sm:$0xff]
  %v1826 = vld [vmem:[%s5 + $0x58] sm:$0xff]
  %v1827 = vld [vmem:[%s5 + $0x60] sm:$0xff]
  %v1828 = vld [vmem:[%s5 + $0x68] sm:$0xff]
  %v1829 = vld [vmem:[%s5 + $0x70] sm:$0xff]
  %v1830 = vld [vmem:[%s5 + $0x78] sm:$0xff]
  %v1832 = vsel %vm49, %v1814, 0
  %1834 = vmatprep.subr.mxu0 0.0
  %1835 = vmatpush1.msra.mxu0 0.0
  %1836 = vmatprep.subr.mxu0 0.0
  %1837 = vmatpush1.msra.mxu0 0.0
  %1838 = vmatprep.subr.mxu0 0.0
  %1839 = vmatpush1.msra.mxu0 0.0
  %1840 = vmatprep.subr.mxu0 0.0
  %1841 = vmatpush1.msra.mxu0 0.0
  %1842 = vmatprep.subr.mxu0 0.0
  %1843 = vmatpush1.msra.mxu0 0.0
  %1844 = vmatprep.subr.mxu0 0.0
  %1845 = vmatpush1.msra.mxu0 0.0
  %1846 = vmatprep.subr.mxu0 0.0
  %1847 = vmatpush1.msra.mxu0 0.0
  %1848 = vmatprep.subr.mxu0 0.0
  %1849 = vmatpush1.msra.mxu0 0.0
  %1850 = vmatprep.subr.mxu0 0.0
  %1851 = vmatpush1.msra.mxu0 0.0
  %1852 = vmatprep.subr.mxu0 0.0
  %1853 = vmatpush1.msra.mxu0 0.0
  %1854 = vmatprep.subr.mxu0 0.0
  %1855 = vmatpush1.msra.mxu0 0.0
  %1856 = vmatprep.subr.mxu0 0.0
  %1857 = vmatpush1.msra.mxu0 0.0
  %1858 = vmatprep.subr.mxu0 %v1828
  %1859 = vmatpush1.msra.mxu0 %v1827
  %1860 = vmatprep.subr.mxu0 %v1824
  %1861 = vmatpush1.msra.mxu0 %v1823
  %1862 = vmatprep.subr.mxu0 %v1820
  %1863 = vmatpush1.msra.mxu0 %v1819
  %1864 = vmatprep.subr.mxu0 %v1816
  %1865 = vmatpush1.msra.mxu0 %v1815
  %1866 = vmatprep.subr.mxu0 0.0
  %1867 = vmatpush2.msra.mxu0 0.0
  %1868 = vmatprep.subr.mxu0 0.0
  %1869 = vmatpush2.msra.mxu0 0.0
  %1870 = vmatprep.subr.mxu0 0.0
  %1871 = vmatpush2.msra.mxu0 0.0
  %1872 = vmatprep.subr.mxu0 0.0
  %1873 = vmatpush2.msra.mxu0 0.0
  %1874 = vmatprep.subr.mxu0 0.0
  %1875 = vmatpush2.msra.mxu0 0.0
  %1876 = vmatprep.subr.mxu0 0.0
  %1877 = vmatpush2.msra.mxu0 0.0
  %1878 = vmatprep.subr.mxu0 0.0
  %1879 = vmatpush2.msra.mxu0 0.0
  %1880 = vmatprep.subr.mxu0 0.0
  %1881 = vmatpush2.msra.mxu0 0.0
  %1882 = vmatprep.subr.mxu0 0.0
  %1883 = vmatpush2.msra.mxu0 0.0
  %1884 = vmatprep.subr.mxu0 0.0
  %1885 = vmatpush2.msra.mxu0 0.0
  %1886 = vmatprep.subr.mxu0 0.0
  %1887 = vmatpush2.msra.mxu0 0.0
  %1888 = vmatprep.subr.mxu0 0.0
  %1889 = vmatpush2.msra.mxu0 0.0
  %1890 = vmatprep.subr.mxu0 0.0
  %1891 = vmatpush2.msra.mxu0 0.0
  %1892 = vmatprep.subr.mxu0 0.0
  %1893 = vmatpush2.msra.mxu0 0.0
  %1894 = vmatprep.subr.mxu0 0.0
  %1895 = vmatpush2.msra.mxu0 0.0
  %1896 = vmatprep.subr.mxu0 0.0
  %1897 = vmatpush2.msra.mxu0 0.0
  %1898 = vmatprep.mubr.f32.mxu0 0.0
  %1899 = vmatmul.mubr.f32.gmra.mxu0 %v1832
  %v1900 = vpop.f32.mrf.mxu0
  %v1901 = vadd.f32 0.0, %v1900
  %v1902 = vpop.f32.mrf.mxu0
  %v1903 = vadd.f32 0.0, %v1902
  %1904 = vdwg.mxu0
  %1905 = vmatprep.subr.mxu0 0.0
  %1906 = vmatpush1.msra.mxu0 0.0
  %1907 = vmatprep.subr.mxu0 0.0
  %1908 = vmatpush1.msra.mxu0 0.0
  %1909 = vmatprep.subr.mxu0 0.0
  %1910 = vmatpush1.msra.mxu0 0.0
  %1911 = vmatprep.subr.mxu0 0.0
  %1912 = vmatpush1.msra.mxu0 0.0
  %1913 = vmatprep.subr.mxu0 0.0
  %1914 = vmatpush1.msra.mxu0 0.0
  %1915 = vmatprep.subr.mxu0 0.0
  %1916 = vmatpush1.msra.mxu0 0.0
  %1917 = vmatprep.subr.mxu0 0.0
  %1918 = vmatpush1.msra.mxu0 0.0
  %1919 = vmatprep.subr.mxu0 0.0
  %1920 = vmatpush1.msra.mxu0 0.0
  %1921 = vmatprep.subr.mxu0 0.0
  %1922 = vmatpush1.msra.mxu0 0.0
  %1923 = vmatprep.subr.mxu0 0.0
  %1924 = vmatpush1.msra.mxu0 0.0
  %1925 = vmatprep.subr.mxu0 0.0
  %1926 = vmatpush1.msra.mxu0 0.0
  %1927 = vmatprep.subr.mxu0 0.0
  %1928 = vmatpush1.msra.mxu0 0.0
  %1929 = vmatprep.subr.mxu0 %v1830
  %1930 = vmatpush1.msra.mxu0 %v1829
  %1931 = vmatprep.subr.mxu0 %v1826
  %1932 = vmatpush1.msra.mxu0 %v1825
  %1933 = vmatprep.subr.mxu0 %v1822
  %1934 = vmatpush1.msra.mxu0 %v1821
  %1935 = vmatprep.subr.mxu0 %v1818
  %1936 = vmatpush1.msra.mxu0 %v1817
  %1937 = vmatprep.subr.mxu0 0.0
  %1938 = vmatpush2.msra.mxu0 0.0
  %1939 = vmatprep.subr.mxu0 0.0
  %1940 = vmatpush2.msra.mxu0 0.0
  %1941 = vmatprep.subr.mxu0 0.0
  %1942 = vmatpush2.msra.mxu0 0.0
  %1943 = vmatprep.subr.mxu0 0.0
  %1944 = vmatpush2.msra.mxu0 0.0
  %1945 = vmatprep.subr.mxu0 0.0
  %1946 = vmatpush2.msra.mxu0 0.0
  %1947 = vmatprep.subr.mxu0 0.0
  %1948 = vmatpush2.msra.mxu0 0.0
  %1949 = vmatprep.subr.mxu0 0.0
  %1950 = vmatpush2.msra.mxu0 0.0
  %1951 = vmatprep.subr.mxu0 0.0
  %1952 = vmatpush2.msra.mxu0 0.0
  %1953 = vmatprep.subr.mxu0 0.0
  %1954 = vmatpush2.msra.mxu0 0.0
  %1955 = vmatprep.subr.mxu0 0.0
  %1956 = vmatpush2.msra.mxu0 0.0
  %1957 = vmatprep.subr.mxu0 0.0
  %1958 = vmatpush2.msra.mxu0 0.0
  %1959 = vmatprep.subr.mxu0 0.0
  %1960 = vmatpush2.msra.mxu0 0.0
  %1961 = vmatprep.subr.mxu0 0.0
  %1962 = vmatpush2.msra.mxu0 0.0
  %1963 = vmatprep.subr.mxu0 0.0
  %1964 = vmatpush2.msra.mxu0 0.0
  %1965 = vmatprep.subr.mxu0 0.0
  %1966 = vmatpush2.msra.mxu0 0.0
  %1967 = vmatprep.subr.mxu0 0.0
  %1968 = vmatpush2.msra.mxu0 0.0
  %1969 = vmatprep.mubr.f32.mxu0 0.0
  %1970 = vmatmul.mubr.f32.gmra.mxu0 %v1832
  %v1971 = vpop.f32.mrf.mxu0
  %v1972 = vadd.f32 0.0, %v1971
  %v1973 = vpop.f32.mrf.mxu0
  %v1974 = vadd.f32 0.0, %v1973
  %1975 = vdwg.mxu0
  %v1976 = vlaneseq
  %v1977 = vshrl.u32 %v1976, 7
  %v1978 = vsub.s32 0, %v1977
  %v1979 = vrot.slane %v1901, %v1978
  %v1980 = vlaneseq
  %v1981 = vshrl.u32 %v1980, 7
  %v1982 = vsub.s32 0, %v1981
  %v1983 = vrot.slane %v1903, %v1982
  %v1984 = vlaneseq
  %v1985 = vshrl.u32 %v1984, 7
  %v1986 = vsub.s32 0, %v1985
  %v1987 = vrot.slane %v1972, %v1986
  %v1988 = vlaneseq
  %v1989 = vshrl.u32 %v1988, 7
  %v1990 = vsub.s32 0, %v1989
  %v1991 = vrot.slane %v1974, %v1990
  %v1992 = vsub.f32 %v1265, %v1979
  %v1993 = vsub.f32 %v1267, %v1983
  %v1994 = vsub.f32 %v1443, %v1987
  %v1995 = vsub.f32 %v1445, %v1991
  %v1996 = vsub.f32 %v1271, %v1979
  %v1997 = vsub.f32 %v1273, %v1983
  %v1998 = vsub.f32 %v1449, %v1987
  %v1999 = vsub.f32 %v1451, %v1991
  %v2000 = vsub.f32 %v1277, %v1979
  %v2001 = vsub.f32 %v1279, %v1983
  %v2002 = vsub.f32 %v1455, %v1987
  %v2003 = vsub.f32 %v1457, %v1991
  %v2004 = vsub.f32 %v1283, %v1979
  %v2005 = vsub.f32 %v1285, %v1983
  %v2006 = vsub.f32 %v1461, %v1987
  %v2007 = vsub.f32 %v1463, %v1991
  %v2008 = vmul.f32 %v1992, %v1992
  %v2009 = vmul.f32 %v1993, %v1993
  %v2010 = vmul.f32 %v1994, %v1994
  %v2011 = vmul.f32 %v1995, %v1995
  %v2012 = vmul.f32 %v1996, %v1996
  %v2013 = vmul.f32 %v1997, %v1997
  %v2014 = vmul.f32 %v1998, %v1998
  %v2015 = vmul.f32 %v1999, %v1999
  %v2016 = vmul.f32 %v2000, %v2000
  %v2017 = vmul.f32 %v2001, %v2001
  %v2018 = vmul.f32 %v2002, %v2002
  %v2019 = vmul.f32 %v2003, %v2003
  %v2020 = vmul.f32 %v2004, %v2004
  %v2021 = vmul.f32 %v2005, %v2005
  %v2022 = vmul.f32 %v2006, %v2006
  %v2023 = vmul.f32 %v2007, %v2007
  %2024 = vmatprep.subr.mxu0 0.0
  %2025 = vmatpush1.msra.mxu0 0.0
  %2026 = vmatprep.subr.mxu0 0.0
  %2027 = vmatpush1.msra.mxu0 0.0
  %2028 = vmatprep.subr.mxu0 0.0
  %2029 = vmatpush1.msra.mxu0 0.0
  %2030 = vmatprep.subr.mxu0 0.0
  %2031 = vmatpush1.msra.mxu0 0.0
  %2032 = vmatprep.subr.mxu0 0.0
  %2033 = vmatpush1.msra.mxu0 0.0
  %2034 = vmatprep.subr.mxu0 0.0
  %2035 = vmatpush1.msra.mxu0 0.0
  %2036 = vmatprep.subr.mxu0 0.0
  %2037 = vmatpush1.msra.mxu0 0.0
  %2038 = vmatprep.subr.mxu0 0.0
  %2039 = vmatpush1.msra.mxu0 0.0
  %2040 = vmatprep.subr.mxu0 0.0
  %2041 = vmatpush1.msra.mxu0 0.0
  %2042 = vmatprep.subr.mxu0 0.0
  %2043 = vmatpush1.msra.mxu0 0.0
  %2044 = vmatprep.subr.mxu0 0.0
  %2045 = vmatpush1.msra.mxu0 0.0
  %2046 = vmatprep.subr.mxu0 0.0
  %2047 = vmatpush1.msra.mxu0 0.0
  %2048 = vmatprep.subr.mxu0 %v2021
  %2049 = vmatpush1.msra.mxu0 %v2020
  %2050 = vmatprep.subr.mxu0 %v2017
  %2051 = vmatpush1.msra.mxu0 %v2016
  %2052 = vmatprep.subr.mxu0 %v2013
  %2053 = vmatpush1.msra.mxu0 %v2012
  %2054 = vmatprep.subr.mxu0 %v2009
  %2055 = vmatpush1.msra.mxu0 %v2008
  %2056 = vmatprep.subr.mxu0 0.0
  %2057 = vmatpush2.msra.mxu0 0.0
  %2058 = vmatprep.subr.mxu0 0.0
  %2059 = vmatpush2.msra.mxu0 0.0
  %2060 = vmatprep.subr.mxu0 0.0
  %2061 = vmatpush2.msra.mxu0 0.0
  %2062 = vmatprep.subr.mxu0 0.0
  %2063 = vmatpush2.msra.mxu0 0.0
  %2064 = vmatprep.subr.mxu0 0.0
  %2065 = vmatpush2.msra.mxu0 0.0
  %2066 = vmatprep.subr.mxu0 0.0
  %2067 = vmatpush2.msra.mxu0 0.0
  %2068 = vmatprep.subr.mxu0 0.0
  %2069 = vmatpush2.msra.mxu0 0.0
  %2070 = vmatprep.subr.mxu0 0.0
  %2071 = vmatpush2.msra.mxu0 0.0
  %2072 = vmatprep.subr.mxu0 0.0
  %2073 = vmatpush2.msra.mxu0 0.0
  %2074 = vmatprep.subr.mxu0 0.0
  %2075 = vmatpush2.msra.mxu0 0.0
  %2076 = vmatprep.subr.mxu0 0.0
  %2077 = vmatpush2.msra.mxu0 0.0
  %2078 = vmatprep.subr.mxu0 0.0
  %2079 = vmatpush2.msra.mxu0 0.0
  %2080 = vmatprep.subr.mxu0 0.0
  %2081 = vmatpush2.msra.mxu0 0.0
  %2082 = vmatprep.subr.mxu0 0.0
  %2083 = vmatpush2.msra.mxu0 0.0
  %2084 = vmatprep.subr.mxu0 0.0
  %2085 = vmatpush2.msra.mxu0 0.0
  %2086 = vmatprep.subr.mxu0 0.0
  %2087 = vmatpush2.msra.mxu0 0.0
  %2088 = vmatprep.mubr.f32.mxu0 0.0
  %2089 = vmatmul.mubr.f32.gmra.mxu0 %v1466
  %v2090 = vpop.f32.mrf.mxu0
  %v2091 = vadd.f32 0.0, %v2090
  %v2092 = vpop.f32.mrf.mxu0
  %v2093 = vadd.f32 0.0, %v2092
  %2094 = vdwg.mxu0
  %2095 = vmatprep.subr.mxu0 0.0
  %2096 = vmatpush1.msra.mxu0 0.0
  %2097 = vmatprep.subr.mxu0 0.0
  %2098 = vmatpush1.msra.mxu0 0.0
  %2099 = vmatprep.subr.mxu0 0.0
  %2100 = vmatpush1.msra.mxu0 0.0
  %2101 = vmatprep.subr.mxu0 0.0
  %2102 = vmatpush1.msra.mxu0 0.0
  %2103 = vmatprep.subr.mxu0 0.0
  %2104 = vmatpush1.msra.mxu0 0.0
  %2105 = vmatprep.subr.mxu0 0.0
  %2106 = vmatpush1.msra.mxu0 0.0
  %2107 = vmatprep.subr.mxu0 0.0
  %2108 = vmatpush1.msra.mxu0 0.0
  %2109 = vmatprep.subr.mxu0 0.0
  %2110 = vmatpush1.msra.mxu0 0.0
  %2111 = vmatprep.subr.mxu0 0.0
  %2112 = vmatpush1.msra.mxu0 0.0
  %2113 = vmatprep.subr.mxu0 0.0
  %2114 = vmatpush1.msra.mxu0 0.0
  %2115 = vmatprep.subr.mxu0 0.0
  %2116 = vmatpush1.msra.mxu0 0.0
  %2117 = vmatprep.subr.mxu0 0.0
  %2118 = vmatpush1.msra.mxu0 0.0
  %2119 = vmatprep.subr.mxu0 %v2023
  %2120 = vmatpush1.msra.mxu0 %v2022
  %2121 = vmatprep.subr.mxu0 %v2019
  %2122 = vmatpush1.msra.mxu0 %v2018
  %2123 = vmatprep.subr.mxu0 %v2015
  %2124 = vmatpush1.msra.mxu0 %v2014
  %2125 = vmatprep.subr.mxu0 %v2011
  %2126 = vmatpush1.msra.mxu0 %v2010
  %2127 = vmatprep.subr.mxu0 0.0
  %2128 = vmatpush2.msra.mxu0 0.0
  %2129 = vmatprep.subr.mxu0 0.0
  %2130 = vmatpush2.msra.mxu0 0.0
  %2131 = vmatprep.subr.mxu0 0.0
  %2132 = vmatpush2.msra.mxu0 0.0
  %2133 = vmatprep.subr.mxu0 0.0
  %2134 = vmatpush2.msra.mxu0 0.0
  %2135 = vmatprep.subr.mxu0 0.0
  %2136 = vmatpush2.msra.mxu0 0.0
  %2137 = vmatprep.subr.mxu0 0.0
  %2138 = vmatpush2.msra.mxu0 0.0
  %2139 = vmatprep.subr.mxu0 0.0
  %2140 = vmatpush2.msra.mxu0 0.0
  %2141 = vmatprep.subr.mxu0 0.0
  %2142 = vmatpush2.msra.mxu0 0.0
  %2143 = vmatprep.subr.mxu0 0.0
  %2144 = vmatpush2.msra.mxu0 0.0
  %2145 = vmatprep.subr.mxu0 0.0
  %2146 = vmatpush2.msra.mxu0 0.0
  %2147 = vmatprep.subr.mxu0 0.0
  %2148 = vmatpush2.msra.mxu0 0.0
  %2149 = vmatprep.subr.mxu0 0.0
  %2150 = vmatpush2.msra.mxu0 0.0
  %2151 = vmatprep.subr.mxu0 0.0
  %2152 = vmatpush2.msra.mxu0 0.0
  %2153 = vmatprep.subr.mxu0 0.0
  %2154 = vmatpush2.msra.mxu0 0.0
  %2155 = vmatprep.subr.mxu0 0.0
  %2156 = vmatpush2.msra.mxu0 0.0
  %2157 = vmatprep.subr.mxu0 0.0
  %2158 = vmatpush2.msra.mxu0 0.0
  %2159 = vmatprep.mubr.f32.mxu0 0.0
  %2160 = vmatmul.mubr.f32.gmra.mxu0 %v1466
  %v2161 = vpop.f32.mrf.mxu0
  %v2162 = vadd.f32 0.0, %v2161
  %v2163 = vpop.f32.mrf.mxu0
  %v2164 = vadd.f32 0.0, %v2163
  %2165 = vdwg.mxu0
  %2166 = vmatprep.subr.mxu0 0.0
  %2167 = vmatpush1.msra.mxu0 %v1625
  %2168 = vmatprep.subr.mxu0 0.0
  %2169 = vmatpush1.msra.mxu0 %v1624
  %2170 = vmatprep.subr.mxu0 0.0
  %2171 = vmatpush1.msra.mxu0 %v1623
  %2172 = vmatprep.subr.mxu0 0.0
  %2173 = vmatpush1.msra.mxu0 %v1622
  %2174 = vmatprep.subr.mxu0 0.0
  %2175 = vmatpush1.msra.mxu0 %v1621
  %2176 = vmatprep.subr.mxu0 0.0
  %2177 = vmatpush1.msra.mxu0 %v1620
  %2178 = vmatprep.subr.mxu0 0.0
  %2179 = vmatpush1.msra.mxu0 %v1619
  %2180 = vmatprep.subr.mxu0 0.0
  %2181 = vmatpush1.msra.mxu0 %v1618
  %2182 = vmatprep.subr.mxu0 0.0
  %2183 = vmatpush1.msra.mxu0 %v1617
  %2184 = vmatprep.subr.mxu0 0.0
  %2185 = vmatpush1.msra.mxu0 %v1616
  %2186 = vmatprep.subr.mxu0 0.0
  %2187 = vmatpush1.msra.mxu0 %v1615
  %2188 = vmatprep.subr.mxu0 0.0
  %2189 = vmatpush1.msra.mxu0 %v1614
  %2190 = vmatprep.subr.mxu0 0.0
  %2191 = vmatpush1.msra.mxu0 %v1613
  %2192 = vmatprep.subr.mxu0 0.0
  %2193 = vmatpush1.msra.mxu0 %v1612
  %2194 = vmatprep.subr.mxu0 0.0
  %2195 = vmatpush1.msra.mxu0 %v1611
  %2196 = vmatprep.subr.mxu0 0.0
  %2197 = vmatpush1.msra.mxu0 %v1610
  %2198 = vmatprep.subr.mxu0 0.0
  %2199 = vmatpush2.msra.mxu0 %v1641
  %2200 = vmatprep.subr.mxu0 0.0
  %2201 = vmatpush2.msra.mxu0 %v1640
  %2202 = vmatprep.subr.mxu0 0.0
  %2203 = vmatpush2.msra.mxu0 %v1639
  %2204 = vmatprep.subr.mxu0 0.0
  %2205 = vmatpush2.msra.mxu0 %v1638
  %2206 = vmatprep.subr.mxu0 0.0
  %2207 = vmatpush2.msra.mxu0 %v1637
  %2208 = vmatprep.subr.mxu0 0.0
  %2209 = vmatpush2.msra.mxu0 %v1636
  %2210 = vmatprep.subr.mxu0 0.0
  %2211 = vmatpush2.msra.mxu0 %v1635
  %2212 = vmatprep.subr.mxu0 0.0
  %2213 = vmatpush2.msra.mxu0 %v1634
  %2214 = vmatprep.subr.mxu0 0.0
  %2215 = vmatpush2.msra.mxu0 %v1633
  %2216 = vmatprep.subr.mxu0 0.0
  %2217 = vmatpush2.msra.mxu0 %v1632
  %2218 = vmatprep.subr.mxu0 0.0
  %2219 = vmatpush2.msra.mxu0 %v1631
  %2220 = vmatprep.subr.mxu0 0.0
  %2221 = vmatpush2.msra.mxu0 %v1630
  %2222 = vmatprep.subr.mxu0 0.0
  %2223 = vmatpush2.msra.mxu0 %v1629
  %2224 = vmatprep.subr.mxu0 0.0
  %2225 = vmatpush2.msra.mxu0 %v1628
  %2226 = vmatprep.subr.mxu0 0.0
  %2227 = vmatpush2.msra.mxu0 %v1627
  %2228 = vmatprep.subr.mxu0 0.0
  %2229 = vmatpush2.msra.mxu0 %v1626
  %2230 = vmatprep.mubr.f32.mxu0 %v2093
  %2231 = vmatmul.mubr.f32.gmra.mxu0 %v2091
  %v2232 = vpop.f32.mrf.mxu0
  %v2233 = vadd.f32 0.0, %v2232
  %v2234 = vpop.f32.mrf.mxu0
  %2235 = vdwg.mxu0
  %2236 = vmatprep.subr.mxu0 0.0
  %2237 = vmatpush1.msra.mxu0 %v1657
  %2238 = vmatprep.subr.mxu0 0.0
  %2239 = vmatpush1.msra.mxu0 %v1656
  %2240 = vmatprep.subr.mxu0 0.0
  %2241 = vmatpush1.msra.mxu0 %v1655
  %2242 = vmatprep.subr.mxu0 0.0
  %2243 = vmatpush1.msra.mxu0 %v1654
  %2244 = vmatprep.subr.mxu0 0.0
  %2245 = vmatpush1.msra.mxu0 %v1653
  %2246 = vmatprep.subr.mxu0 0.0
  %2247 = vmatpush1.msra.mxu0 %v1652
  %2248 = vmatprep.subr.mxu0 0.0
  %2249 = vmatpush1.msra.mxu0 %v1651
  %2250 = vmatprep.subr.mxu0 0.0
  %2251 = vmatpush1.msra.mxu0 %v1650
  %2252 = vmatprep.subr.mxu0 0.0
  %2253 = vmatpush1.msra.mxu0 %v1649
  %2254 = vmatprep.subr.mxu0 0.0
  %2255 = vmatpush1.msra.mxu0 %v1648
  %2256 = vmatprep.subr.mxu0 0.0
  %2257 = vmatpush1.msra.mxu0 %v1647
  %2258 = vmatprep.subr.mxu0 0.0
  %2259 = vmatpush1.msra.mxu0 %v1646
  %2260 = vmatprep.subr.mxu0 0.0
  %2261 = vmatpush1.msra.mxu0 %v1645
  %2262 = vmatprep.subr.mxu0 0.0
  %2263 = vmatpush1.msra.mxu0 %v1644
  %2264 = vmatprep.subr.mxu0 0.0
  %2265 = vmatpush1.msra.mxu0 %v1643
  %2266 = vmatprep.subr.mxu0 0.0
  %2267 = vmatpush1.msra.mxu0 %v1642
  %2268 = vmatprep.subr.mxu0 0.0
  %2269 = vmatpush2.msra.mxu0 %v1673
  %2270 = vmatprep.subr.mxu0 0.0
  %2271 = vmatpush2.msra.mxu0 %v1672
  %2272 = vmatprep.subr.mxu0 0.0
  %2273 = vmatpush2.msra.mxu0 %v1671
  %2274 = vmatprep.subr.mxu0 0.0
  %2275 = vmatpush2.msra.mxu0 %v1670
  %2276 = vmatprep.subr.mxu0 0.0
  %2277 = vmatpush2.msra.mxu0 %v1669
  %2278 = vmatprep.subr.mxu0 0.0
  %2279 = vmatpush2.msra.mxu0 %v1668
  %2280 = vmatprep.subr.mxu0 0.0
  %2281 = vmatpush2.msra.mxu0 %v1667
  %2282 = vmatprep.subr.mxu0 0.0
  %2283 = vmatpush2.msra.mxu0 %v1666
  %2284 = vmatprep.subr.mxu0 0.0
  %2285 = vmatpush2.msra.mxu0 %v1665
  %2286 = vmatprep.subr.mxu0 0.0
  %2287 = vmatpush2.msra.mxu0 %v1664
  %2288 = vmatprep.subr.mxu0 0.0
  %2289 = vmatpush2.msra.mxu0 %v1663
  %2290 = vmatprep.subr.mxu0 0.0
  %2291 = vmatpush2.msra.mxu0 %v1662
  %2292 = vmatprep.subr.mxu0 0.0
  %2293 = vmatpush2.msra.mxu0 %v1661
  %2294 = vmatprep.subr.mxu0 0.0
  %2295 = vmatpush2.msra.mxu0 %v1660
  %2296 = vmatprep.subr.mxu0 0.0
  %2297 = vmatpush2.msra.mxu0 %v1659
  %2298 = vmatprep.subr.mxu0 0.0
  %2299 = vmatpush2.msra.mxu0 %v1658
  %2300 = vmatprep.mubr.f32.mxu0 %v2164
  %2301 = vmatmul.mubr.f32.gmra.mxu0 %v2162
  %v2302 = vpop.f32.mrf.mxu0
  %v2303 = vadd.f32 %v2233, %v2302
  %v2304 = vpop.f32.mrf.mxu0
  %2305 = vdwg.mxu0
  %v2306 = vmul.f32 %v2303, 0.001953125
  %v2307 = vld [vmem:[%s6] sm:$0x1]
  %v2308 = vadd.f32 %v2306, 1e-05
  %v2309 = vrsqrt.pop %v2308
  %v2310 = vmul.f32 %v2307, %v2309
  %v2312 = vsel %vm49, %v2310, 0
  %2314 = vmatprep.subr.mxu0 0.0
  %2315 = vmatpush1.msra.mxu0 0.0
  %2316 = vmatprep.subr.mxu0 0.0
  %2317 = vmatpush1.msra.mxu0 0.0
  %2318 = vmatprep.subr.mxu0 0.0
  %2319 = vmatpush1.msra.mxu0 0.0
  %2320 = vmatprep.subr.mxu0 0.0
  %2321 = vmatpush1.msra.mxu0 0.0
  %2322 = vmatprep.subr.mxu0 0.0
  %2323 = vmatpush1.msra.mxu0 0.0
  %2324 = vmatprep.subr.mxu0 0.0
  %2325 = vmatpush1.msra.mxu0 0.0
  %2326 = vmatprep.subr.mxu0 0.0
  %2327 = vmatpush1.msra.mxu0 0.0
  %2328 = vmatprep.subr.mxu0 0.0
  %2329 = vmatpush1.msra.mxu0 0.0
  %2330 = vmatprep.subr.mxu0 0.0
  %2331 = vmatpush1.msra.mxu0 0.0
  %2332 = vmatprep.subr.mxu0 0.0
  %2333 = vmatpush1.msra.mxu0 0.0
  %2334 = vmatprep.subr.mxu0 0.0
  %2335 = vmatpush1.msra.mxu0 0.0
  %2336 = vmatprep.subr.mxu0 0.0
  %2337 = vmatpush1.msra.mxu0 0.0
  %2338 = vmatprep.subr.mxu0 %v1828
  %2339 = vmatpush1.msra.mxu0 %v1827
  %2340 = vmatprep.subr.mxu0 %v1824
  %2341 = vmatpush1.msra.mxu0 %v1823
  %2342 = vmatprep.subr.mxu0 %v1820
  %2343 = vmatpush1.msra.mxu0 %v1819
  %2344 = vmatprep.subr.mxu0 %v1816
  %2345 = vmatpush1.msra.mxu0 %v1815
  %2346 = vmatprep.subr.mxu0 0.0
  %2347 = vmatpush2.msra.mxu0 0.0
  %2348 = vmatprep.subr.mxu0 0.0
  %2349 = vmatpush2.msra.mxu0 0.0
  %2350 = vmatprep.subr.mxu0 0.0
  %2351 = vmatpush2.msra.mxu0 0.0
  %2352 = vmatprep.subr.mxu0 0.0
  %2353 = vmatpush2.msra.mxu0 0.0
  %2354 = vmatprep.subr.mxu0 0.0
  %2355 = vmatpush2.msra.mxu0 0.0
  %2356 = vmatprep.subr.mxu0 0.0
  %2357 = vmatpush2.msra.mxu0 0.0
  %2358 = vmatprep.subr.mxu0 0.0
  %2359 = vmatpush2.msra.mxu0 0.0
  %2360 = vmatprep.subr.mxu0 0.0
  %2361 = vmatpush2.msra.mxu0 0.0
  %2362 = vmatprep.subr.mxu0 0.0
  %2363 = vmatpush2.msra.mxu0 0.0
  %2364 = vmatprep.subr.mxu0 0.0
  %2365 = vmatpush2.msra.mxu0 0.0
  %2366 = vmatprep.subr.mxu0 0.0
  %2367 = vmatpush2.msra.mxu0 0.0
  %2368 = vmatprep.subr.mxu0 0.0
  %2369 = vmatpush2.msra.mxu0 0.0
  %2370 = vmatprep.subr.mxu0 0.0
  %2371 = vmatpush2.msra.mxu0 0.0
  %2372 = vmatprep.subr.mxu0 0.0
  %2373 = vmatpush2.msra.mxu0 0.0
  %2374 = vmatprep.subr.mxu0 0.0
  %2375 = vmatpush2.msra.mxu0 0.0
  %2376 = vmatprep.subr.mxu0 0.0
  %2377 = vmatpush2.msra.mxu0 0.0
  %2378 = vmatprep.mubr.f32.mxu0 0.0
  %2379 = vmatmul.mubr.f32.gmra.mxu0 %v2312
  %v2380 = vpop.f32.mrf.mxu0
  %v2381 = vadd.f32 0.0, %v2380
  %v2382 = vpop.f32.mrf.mxu0
  %v2383 = vadd.f32 0.0, %v2382
  %2384 = vdwg.mxu0
  %2385 = vmatprep.subr.mxu0 0.0
  %2386 = vmatpush1.msra.mxu0 0.0
  %2387 = vmatprep.subr.mxu0 0.0
  %2388 = vmatpush1.msra.mxu0 0.0
  %2389 = vmatprep.subr.mxu0 0.0
  %2390 = vmatpush1.msra.mxu0 0.0
  %2391 = vmatprep.subr.mxu0 0.0
  %2392 = vmatpush1.msra.mxu0 0.0
  %2393 = vmatprep.subr.mxu0 0.0
  %2394 = vmatpush1.msra.mxu0 0.0
  %2395 = vmatprep.subr.mxu0 0.0
  %2396 = vmatpush1.msra.mxu0 0.0
  %2397 = vmatprep.subr.mxu0 0.0
  %2398 = vmatpush1.msra.mxu0 0.0
  %2399 = vmatprep.subr.mxu0 0.0
  %2400 = vmatpush1.msra.mxu0 0.0
  %2401 = vmatprep.subr.mxu0 0.0
  %2402 = vmatpush1.msra.mxu0 0.0
  %2403 = vmatprep.subr.mxu0 0.0
  %2404 = vmatpush1.msra.mxu0 0.0
  %2405 = vmatprep.subr.mxu0 0.0
  %2406 = vmatpush1.msra.mxu0 0.0
  %2407 = vmatprep.subr.mxu0 0.0
  %2408 = vmatpush1.msra.mxu0 0.0
  %2409 = vmatprep.subr.mxu0 %v1830
  %2410 = vmatpush1.msra.mxu0 %v1829
  %2411 = vmatprep.subr.mxu0 %v1826
  %2412 = vmatpush1.msra.mxu0 %v1825
  %2413 = vmatprep.subr.mxu0 %v1822
  %2414 = vmatpush1.msra.mxu0 %v1821
  %2415 = vmatprep.subr.mxu0 %v1818
  %2416 = vmatpush1.msra.mxu0 %v1817
  %2417 = vmatprep.subr.mxu0 0.0
  %2418 = vmatpush2.msra.mxu0 0.0
  %2419 = vmatprep.subr.mxu0 0.0
  %2420 = vmatpush2.msra.mxu0 0.0
  %2421 = vmatprep.subr.mxu0 0.0
  %2422 = vmatpush2.msra.mxu0 0.0
  %2423 = vmatprep.subr.mxu0 0.0
  %2424 = vmatpush2.msra.mxu0 0.0
  %2425 = vmatprep.subr.mxu0 0.0
  %2426 = vmatpush2.msra.mxu0 0.0
  %2427 = vmatprep.subr.mxu0 0.0
  %2428 = vmatpush2.msra.mxu0 0.0
  %2429 = vmatprep.subr.mxu0 0.0
  %2430 = vmatpush2.msra.mxu0 0.0
  %2431 = vmatprep.subr.mxu0 0.0
  %2432 = vmatpush2.msra.mxu0 0.0
  %2433 = vmatprep.subr.mxu0 0.0
  %2434 = vmatpush2.msra.mxu0 0.0
  %2435 = vmatprep.subr.mxu0 0.0
  %2436 = vmatpush2.msra.mxu0 0.0
  %2437 = vmatprep.subr.mxu0 0.0
  %2438 = vmatpush2.msra.mxu0 0.0
  %2439 = vmatprep.subr.mxu0 0.0
  %2440 = vmatpush2.msra.mxu0 0.0
  %2441 = vmatprep.subr.mxu0 0.0
  %2442 = vmatpush2.msra.mxu0 0.0
  %2443 = vmatprep.subr.mxu0 0.0
  %2444 = vmatpush2.msra.mxu0 0.0
  %2445 = vmatprep.subr.mxu0 0.0
  %2446 = vmatpush2.msra.mxu0 0.0
  %2447 = vmatprep.subr.mxu0 0.0
  %2448 = vmatpush2.msra.mxu0 0.0
  %2449 = vmatprep.mubr.f32.mxu0 0.0
  %2450 = vmatmul.mubr.f32.gmra.mxu0 %v2312
  %v2451 = vpop.f32.mrf.mxu0
  %v2452 = vadd.f32 0.0, %v2451
  %v2453 = vpop.f32.mrf.mxu0
  %v2454 = vadd.f32 0.0, %v2453
  %2455 = vdwg.mxu0
  %v2456 = vld [vmem:[%s7] sm:$0x1]
  %v2458 = vsel %vm49, %v2456, 0
  %2460 = vmatprep.subr.mxu0 0.0
  %2461 = vmatpush1.msra.mxu0 0.0
  %2462 = vmatprep.subr.mxu0 0.0
  %2463 = vmatpush1.msra.mxu0 0.0
  %2464 = vmatprep.subr.mxu0 0.0
  %2465 = vmatpush1.msra.mxu0 0.0
  %2466 = vmatprep.subr.mxu0 0.0
  %2467 = vmatpush1.msra.mxu0 0.0
  %2468 = vmatprep.subr.mxu0 0.0
  %2469 = vmatpush1.msra.mxu0 0.0
  %2470 = vmatprep.subr.mxu0 0.0
  %2471 = vmatpush1.msra.mxu0 0.0
  %2472 = vmatprep.subr.mxu0 0.0
  %2473 = vmatpush1.msra.mxu0 0.0
  %2474 = vmatprep.subr.mxu0 0.0
  %2475 = vmatpush1.msra.mxu0 0.0
  %2476 = vmatprep.subr.mxu0 0.0
  %2477 = vmatpush1.msra.mxu0 0.0
  %2478 = vmatprep.subr.mxu0 0.0
  %2479 = vmatpush1.msra.mxu0 0.0
  %2480 = vmatprep.subr.mxu0 0.0
  %2481 = vmatpush1.msra.mxu0 0.0
  %2482 = vmatprep.subr.mxu0 0.0
  %2483 = vmatpush1.msra.mxu0 0.0
  %2484 = vmatprep.subr.mxu0 %v1828
  %2485 = vmatpush1.msra.mxu0 %v1827
  %2486 = vmatprep.subr.mxu0 %v1824
  %2487 = vmatpush1.msra.mxu0 %v1823
  %2488 = vmatprep.subr.mxu0 %v1820
  %2489 = vmatpush1.msra.mxu0 %v1819
  %2490 = vmatprep.subr.mxu0 %v1816
  %2491 = vmatpush1.msra.mxu0 %v1815
  %2492 = vmatprep.subr.mxu0 0.0
  %2493 = vmatpush2.msra.mxu0 0.0
  %2494 = vmatprep.subr.mxu0 0.0
  %2495 = vmatpush2.msra.mxu0 0.0
  %2496 = vmatprep.subr.mxu0 0.0
  %2497 = vmatpush2.msra.mxu0 0.0
  %2498 = vmatprep.subr.mxu0 0.0
  %2499 = vmatpush2.msra.mxu0 0.0
  %2500 = vmatprep.subr.mxu0 0.0
  %2501 = vmatpush2.msra.mxu0 0.0
  %2502 = vmatprep.subr.mxu0 0.0
  %2503 = vmatpush2.msra.mxu0 0.0
  %2504 = vmatprep.subr.mxu0 0.0
  %2505 = vmatpush2.msra.mxu0 0.0
  %2506 = vmatprep.subr.mxu0 0.0
  %2507 = vmatpush2.msra.mxu0 0.0
  %2508 = vmatprep.subr.mxu0 0.0
  %2509 = vmatpush2.msra.mxu0 0.0
  %2510 = vmatprep.subr.mxu0 0.0
  %2511 = vmatpush2.msra.mxu0 0.0
  %2512 = vmatprep.subr.mxu0 0.0
  %2513 = vmatpush2.msra.mxu0 0.0
  %2514 = vmatprep.subr.mxu0 0.0
  %2515 = vmatpush2.msra.mxu0 0.0
  %2516 = vmatprep.subr.mxu0 0.0
  %2517 = vmatpush2.msra.mxu0 0.0
  %2518 = vmatprep.subr.mxu0 0.0
  %2519 = vmatpush2.msra.mxu0 0.0
  %2520 = vmatprep.subr.mxu0 0.0
  %2521 = vmatpush2.msra.mxu0 0.0
  %2522 = vmatprep.subr.mxu0 0.0
  %2523 = vmatpush2.msra.mxu0 0.0
  %2524 = vmatprep.mubr.f32.mxu0 0.0
  %2525 = vmatmul.mubr.f32.gmra.mxu0 %v2458
  %v2526 = vpop.f32.mrf.mxu0
  %v2527 = vadd.f32 0.0, %v2526
  %v2528 = vpop.f32.mrf.mxu0
  %v2529 = vadd.f32 0.0, %v2528
  %2530 = vdwg.mxu0
  %2531 = vmatprep.subr.mxu0 0.0
  %2532 = vmatpush1.msra.mxu0 0.0
  %2533 = vmatprep.subr.mxu0 0.0
  %2534 = vmatpush1.msra.mxu0 0.0
  %2535 = vmatprep.subr.mxu0 0.0
  %2536 = vmatpush1.msra.mxu0 0.0
  %2537 = vmatprep.subr.mxu0 0.0
  %2538 = vmatpush1.msra.mxu0 0.0
  %2539 = vmatprep.subr.mxu0 0.0
  %2540 = vmatpush1.msra.mxu0 0.0
  %2541 = vmatprep.subr.mxu0 0.0
  %2542 = vmatpush1.msra.mxu0 0.0
  %2543 = vmatprep.subr.mxu0 0.0
  %2544 = vmatpush1.msra.mxu0 0.0
  %2545 = vmatprep.subr.mxu0 0.0
  %2546 = vmatpush1.msra.mxu0 0.0
  %2547 = vmatprep.subr.mxu0 0.0
  %2548 = vmatpush1.msra.mxu0 0.0
  %2549 = vmatprep.subr.mxu0 0.0
  %2550 = vmatpush1.msra.mxu0 0.0
  %2551 = vmatprep.subr.mxu0 0.0
  %2552 = vmatpush1.msra.mxu0 0.0
  %2553 = vmatprep.subr.mxu0 0.0
  %2554 = vmatpush1.msra.mxu0 0.0
  %2555 = vmatprep.subr.mxu0 %v1830
  %2556 = vmatpush1.msra.mxu0 %v1829
  %2557 = vmatprep.subr.mxu0 %v1826
  %2558 = vmatpush1.msra.mxu0 %v1825
  %2559 = vmatprep.subr.mxu0 %v1822
  %2560 = vmatpush1.msra.mxu0 %v1821
  %2561 = vmatprep.subr.mxu0 %v1818
  %2562 = vmatpush1.msra.mxu0 %v1817
  %2563 = vmatprep.subr.mxu0 0.0
  %2564 = vmatpush2.msra.mxu0 0.0
  %2565 = vmatprep.subr.mxu0 0.0
  %2566 = vmatpush2.msra.mxu0 0.0
  %2567 = vmatprep.subr.mxu0 0.0
  %2568 = vmatpush2.msra.mxu0 0.0
  %2569 = vmatprep.subr.mxu0 0.0
  %2570 = vmatpush2.msra.mxu0 0.0
  %2571 = vmatprep.subr.mxu0 0.0
  %2572 = vmatpush2.msra.mxu0 0.0
  %2573 = vmatprep.subr.mxu0 0.0
  %2574 = vmatpush2.msra.mxu0 0.0
  %2575 = vmatprep.subr.mxu0 0.0
  %2576 = vmatpush2.msra.mxu0 0.0
  %2577 = vmatprep.subr.mxu0 0.0
  %2578 = vmatpush2.msra.mxu0 0.0
  %2579 = vmatprep.subr.mxu0 0.0
  %2580 = vmatpush2.msra.mxu0 0.0
  %2581 = vmatprep.subr.mxu0 0.0
  %2582 = vmatpush2.msra.mxu0 0.0
  %2583 = vmatprep.subr.mxu0 0.0
  %2584 = vmatpush2.msra.mxu0 0.0
  %2585 = vmatprep.subr.mxu0 0.0
  %2586 = vmatpush2.msra.mxu0 0.0
  %2587 = vmatprep.subr.mxu0 0.0
  %2588 = vmatpush2.msra.mxu0 0.0
  %2589 = vmatprep.subr.mxu0 0.0
  %2590 = vmatpush2.msra.mxu0 0.0
  %2591 = vmatprep.subr.mxu0 0.0
  %2592 = vmatpush2.msra.mxu0 0.0
  %2593 = vmatprep.subr.mxu0 0.0
  %2594 = vmatpush2.msra.mxu0 0.0
  %2595 = vmatprep.mubr.f32.mxu0 0.0
  %2596 = vmatmul.mubr.f32.gmra.mxu0 %v2458
  %v2597 = vpop.f32.mrf.mxu0
  %v2598 = vadd.f32 0.0, %v2597
  %v2599 = vpop.f32.mrf.mxu0
  %v2600 = vadd.f32 0.0, %v2599
  %2601 = vdwg.mxu0
  %v2602 = vlaneseq
  %v2603 = vshrl.u32 %v2602, 7
  %v2604 = vsub.s32 0, %v2603
  %v2605 = vrot.slane %v2381, %v2604
  %v2606 = vlaneseq
  %v2607 = vshrl.u32 %v2606, 7
  %v2608 = vsub.s32 0, %v2607
  %v2609 = vrot.slane %v2383, %v2608
  %v2610 = vlaneseq
  %v2611 = vshrl.u32 %v2610, 7
  %v2612 = vsub.s32 0, %v2611
  %v2613 = vrot.slane %v2452, %v2612
  %v2614 = vlaneseq
  %v2615 = vshrl.u32 %v2614, 7
  %v2616 = vsub.s32 0, %v2615
  %v2617 = vrot.slane %v2454, %v2616
  %v2618 = vmul.f32 %v1992, %v2605
  %v2619 = vmul.f32 %v1993, %v2609
  %v2620 = vmul.f32 %v1994, %v2613
  %v2621 = vmul.f32 %v1995, %v2617
  %v2622 = vmul.f32 %v1996, %v2605
  %v2623 = vmul.f32 %v1997, %v2609
  %v2624 = vmul.f32 %v1998, %v2613
  %v2625 = vmul.f32 %v1999, %v2617
  %v2626 = vmul.f32 %v2000, %v2605
  %v2627 = vmul.f32 %v2001, %v2609
  %v2628 = vmul.f32 %v2002, %v2613
  %v2629 = vmul.f32 %v2003, %v2617
  %v2630 = vmul.f32 %v2004, %v2605
  %v2631 = vmul.f32 %v2005, %v2609
  %v2632 = vmul.f32 %v2006, %v2613
  %v2633 = vmul.f32 %v2007, %v2617
  %v2634 = vlaneseq
  %v2635 = vshrl.u32 %v2634, 7
  %v2636 = vsub.s32 0, %v2635
  %v2637 = vrot.slane %v2527, %v2636
  %v2638 = vlaneseq
  %v2639 = vshrl.u32 %v2638, 7
  %v2640 = vsub.s32 0, %v2639
  %v2641 = vrot.slane %v2529, %v2640
  %v2642 = vlaneseq
  %v2643 = vshrl.u32 %v2642, 7
  %v2644 = vsub.s32 0, %v2643
  %v2645 = vrot.slane %v2598, %v2644
  %v2646 = vlaneseq
  %v2647 = vshrl.u32 %v2646, 7
  %v2648 = vsub.s32 0, %v2647
  %v2649 = vrot.slane %v2600, %v2648
  %v2650 = vadd.f32 %v2618, %v2637
  %v2651 = vadd.f32 %v2619, %v2641
  %v2652 = vadd.f32 %v2620, %v2645
  %v2653 = vadd.f32 %v2621, %v2649
  %v2654 = vadd.f32 %v2622, %v2637
  %v2655 = vadd.f32 %v2623, %v2641
  %v2656 = vadd.f32 %v2624, %v2645
  %v2657 = vadd.f32 %v2625, %v2649
  %v2658 = vadd.f32 %v2626, %v2637
  %v2659 = vadd.f32 %v2627, %v2641
  %v2660 = vadd.f32 %v2628, %v2645
  %v2661 = vadd.f32 %v2629, %v2649
  %v2662 = vadd.f32 %v2630, %v2637
  %v2663 = vadd.f32 %v2631, %v2641
  %v2664 = vadd.f32 %v2632, %v2645
  %v2665 = vadd.f32 %v2633, %v2649
  %v2666 = vmax.f32 %v2650, 0.0
  %v2667 = vmax.f32 %v2651, 0.0
  %v2668 = vmax.f32 %v2652, 0.0
  %v2669 = vmax.f32 %v2653, 0.0
  %v2670 = vmax.f32 %v2654, 0.0
  %v2671 = vmax.f32 %v2655, 0.0
  %v2672 = vmax.f32 %v2656, 0.0
  %v2673 = vmax.f32 %v2657, 0.0
  %v2674 = vmax.f32 %v2658, 0.0
  %v2675 = vmax.f32 %v2659, 0.0
  %v2676 = vmax.f32 %v2660, 0.0
  %v2677 = vmax.f32 %v2661, 0.0
  %v2678 = vmax.f32 %v2662, 0.0
  %v2679 = vmax.f32 %v2663, 0.0
  %v2680 = vmax.f32 %v2664, 0.0
  %v2681 = vmax.f32 %v2665, 0.0
  %2682 = vmatprep.subr.mxu0 0.0
  %2683 = vmatpush1.msra.mxu0 0.0
  %2684 = vmatprep.subr.mxu0 0.0
  %2685 = vmatpush1.msra.mxu0 0.0
  %2686 = vmatprep.subr.mxu0 0.0
  %2687 = vmatpush1.msra.mxu0 0.0
  %2688 = vmatprep.subr.mxu0 0.0
  %2689 = vmatpush1.msra.mxu0 0.0
  %2690 = vmatprep.subr.mxu0 0.0
  %2691 = vmatpush1.msra.mxu0 0.0
  %2692 = vmatprep.subr.mxu0 0.0
  %2693 = vmatpush1.msra.mxu0 0.0
  %2694 = vmatprep.subr.mxu0 0.0
  %2695 = vmatpush1.msra.mxu0 0.0
  %2696 = vmatprep.subr.mxu0 0.0
  %2697 = vmatpush1.msra.mxu0 0.0
  %2698 = vmatprep.subr.mxu0 0.0
  %2699 = vmatpush1.msra.mxu0 0.0
  %2700 = vmatprep.subr.mxu0 0.0
  %2701 = vmatpush1.msra.mxu0 0.0
  %2702 = vmatprep.subr.mxu0 0.0
  %2703 = vmatpush1.msra.mxu0 0.0
  %2704 = vmatprep.subr.mxu0 0.0
  %2705 = vmatpush1.msra.mxu0 0.0
  %2706 = vmatprep.subr.mxu0 %v2679
  %2707 = vmatpush1.msra.mxu0 %v2678
  %2708 = vmatprep.subr.mxu0 %v2675
  %2709 = vmatpush1.msra.mxu0 %v2674
  %2710 = vmatprep.subr.mxu0 %v2671
  %2711 = vmatpush1.msra.mxu0 %v2670
  %2712 = vmatprep.subr.mxu0 %v2667
  %2713 = vmatpush1.msra.mxu0 %v2666
  %2714 = vmatprep.subr.mxu0 0.0
  %2715 = vmatpush2.msra.mxu0 0.0
  %2716 = vmatprep.subr.mxu0 0.0
  %2717 = vmatpush2.msra.mxu0 0.0
  %2718 = vmatprep.subr.mxu0 0.0
  %2719 = vmatpush2.msra.mxu0 0.0
  %2720 = vmatprep.subr.mxu0 0.0
  %2721 = vmatpush2.msra.mxu0 0.0
  %2722 = vmatprep.subr.mxu0 0.0
  %2723 = vmatpush2.msra.mxu0 0.0
  %2724 = vmatprep.subr.mxu0 0.0
  %2725 = vmatpush2.msra.mxu0 0.0
  %2726 = vmatprep.subr.mxu0 0.0
  %2727 = vmatpush2.msra.mxu0 0.0
  %2728 = vmatprep.subr.mxu0 0.0
  %2729 = vmatpush2.msra.mxu0 0.0
  %2730 = vmatprep.subr.mxu0 0.0
  %2731 = vmatpush2.msra.mxu0 0.0
  %2732 = vmatprep.subr.mxu0 0.0
  %2733 = vmatpush2.msra.mxu0 0.0
  %2734 = vmatprep.subr.mxu0 0.0
  %2735 = vmatpush2.msra.mxu0 0.0
  %2736 = vmatprep.subr.mxu0 0.0
  %2737 = vmatpush2.msra.mxu0 0.0
  %2738 = vmatprep.subr.mxu0 0.0
  %2739 = vmatpush2.msra.mxu0 0.0
  %2740 = vmatprep.subr.mxu0 0.0
  %2741 = vmatpush2.msra.mxu0 0.0
  %2742 = vmatprep.subr.mxu0 0.0
  %2743 = vmatpush2.msra.mxu0 0.0
  %2744 = vmatprep.subr.mxu0 0.0
  %2745 = vmatpush2.msra.mxu0 0.0
  %2746 = vmatprep.mubr.f32.mxu0 0.0
  %2747 = vmatmul.mubr.f32.gmra.mxu0 %v51
  %v2748 = vpop.f32.mrf.mxu0
  %v2749 = vadd.f32 0.0, %v2748
  %v2750 = vpop.f32.mrf.mxu0
  %v2751 = vadd.f32 0.0, %v2750
  %2752 = vmatprep.mubr.f32.mxu0 0.0
  %2753 = vmatmul.mubr.f32.gmra.mxu0 %v54
  %v2754 = vpop.f32.mrf.mxu0
  %v2755 = vadd.f32 0.0, %v2754
  %v2756 = vpop.f32.mrf.mxu0
  %v2757 = vadd.f32 0.0, %v2756
  %2758 = vmatprep.mubr.f32.mxu0 0.0
  %2759 = vmatmul.mubr.f32.gmra.mxu0 %v57
  %v2760 = vpop.f32.mrf.mxu0
  %v2761 = vadd.f32 0.0, %v2760
  %v2762 = vpop.f32.mrf.mxu0
  %v2763 = vadd.f32 0.0, %v2762
  %2764 = vmatprep.mubr.f32.mxu0 0.0
  %2765 = vmatmul.mubr.f32.gmra.mxu0 %v60
  %v2766 = vpop.f32.mrf.mxu0
  %v2767 = vadd.f32 0.0, %v2766
  %v2768 = vpop.f32.mrf.mxu0
  %v2769 = vadd.f32 0.0, %v2768
  %2770 = vdwg.mxu0
  %2771 = vmatprep.subr.mxu0 0.0
  %2772 = vmatpush1.msra.mxu0 0.0
  %2773 = vmatprep.subr.mxu0 0.0
  %2774 = vmatpush1.msra.mxu0 0.0
  %2775 = vmatprep.subr.mxu0 0.0
  %2776 = vmatpush1.msra.mxu0 0.0
  %2777 = vmatprep.subr.mxu0 0.0
  %2778 = vmatpush1.msra.mxu0 0.0
  %2779 = vmatprep.subr.mxu0 0.0
  %2780 = vmatpush1.msra.mxu0 0.0
  %2781 = vmatprep.subr.mxu0 0.0
  %2782 = vmatpush1.msra.mxu0 0.0
  %2783 = vmatprep.subr.mxu0 0.0
  %2784 = vmatpush1.msra.mxu0 0.0
  %2785 = vmatprep.subr.mxu0 0.0
  %2786 = vmatpush1.msra.mxu0 0.0
  %2787 = vmatprep.subr.mxu0 0.0
  %2788 = vmatpush1.msra.mxu0 0.0
  %2789 = vmatprep.subr.mxu0 0.0
  %2790 = vmatpush1.msra.mxu0 0.0
  %2791 = vmatprep.subr.mxu0 0.0
  %2792 = vmatpush1.msra.mxu0 0.0
  %2793 = vmatprep.subr.mxu0 0.0
  %2794 = vmatpush1.msra.mxu0 0.0
  %2795 = vmatprep.subr.mxu0 %v2681
  %2796 = vmatpush1.msra.mxu0 %v2680
  %2797 = vmatprep.subr.mxu0 %v2677
  %2798 = vmatpush1.msra.mxu0 %v2676
  %2799 = vmatprep.subr.mxu0 %v2673
  %2800 = vmatpush1.msra.mxu0 %v2672
  %2801 = vmatprep.subr.mxu0 %v2669
  %2802 = vmatpush1.msra.mxu0 %v2668
  %2803 = vmatprep.subr.mxu0 0.0
  %2804 = vmatpush2.msra.mxu0 0.0
  %2805 = vmatprep.subr.mxu0 0.0
  %2806 = vmatpush2.msra.mxu0 0.0
  %2807 = vmatprep.subr.mxu0 0.0
  %2808 = vmatpush2.msra.mxu0 0.0
  %2809 = vmatprep.subr.mxu0 0.0
  %2810 = vmatpush2.msra.mxu0 0.0
  %2811 = vmatprep.subr.mxu0 0.0
  %2812 = vmatpush2.msra.mxu0 0.0
  %2813 = vmatprep.subr.mxu0 0.0
  %2814 = vmatpush2.msra.mxu0 0.0
  %2815 = vmatprep.subr.mxu0 0.0
  %2816 = vmatpush2.msra.mxu0 0.0
  %2817 = vmatprep.subr.mxu0 0.0
  %2818 = vmatpush2.msra.mxu0 0.0
  %2819 = vmatprep.subr.mxu0 0.0
  %2820 = vmatpush2.msra.mxu0 0.0
  %2821 = vmatprep.subr.mxu0 0.0
  %2822 = vmatpush2.msra.mxu0 0.0
  %2823 = vmatprep.subr.mxu0 0.0
  %2824 = vmatpush2.msra.mxu0 0.0
  %2825 = vmatprep.subr.mxu0 0.0
  %2826 = vmatpush2.msra.mxu0 0.0
  %2827 = vmatprep.subr.mxu0 0.0
  %2828 = vmatpush2.msra.mxu0 0.0
  %2829 = vmatprep.subr.mxu0 0.0
  %2830 = vmatpush2.msra.mxu0 0.0
  %2831 = vmatprep.subr.mxu0 0.0
  %2832 = vmatpush2.msra.mxu0 0.0
  %2833 = vmatprep.subr.mxu0 0.0
  %2834 = vmatpush2.msra.mxu0 0.0
  %2835 = vmatprep.mubr.f32.mxu0 0.0
  %2836 = vmatmul.mubr.f32.gmra.mxu0 %v51
  %v2837 = vpop.f32.mrf.mxu0
  %v2838 = vadd.f32 0.0, %v2837
  %v2839 = vpop.f32.mrf.mxu0
  %v2840 = vadd.f32 0.0, %v2839
  %2841 = vmatprep.mubr.f32.mxu0 0.0
  %2842 = vmatmul.mubr.f32.gmra.mxu0 %v54
  %v2843 = vpop.f32.mrf.mxu0
  %v2844 = vadd.f32 0.0, %v2843
  %v2845 = vpop.f32.mrf.mxu0
  %v2846 = vadd.f32 0.0, %v2845
  %2847 = vmatprep.mubr.f32.mxu0 0.0
  %2848 = vmatmul.mubr.f32.gmra.mxu0 %v57
  %v2849 = vpop.f32.mrf.mxu0
  %v2850 = vadd.f32 0.0, %v2849
  %v2851 = vpop.f32.mrf.mxu0
  %v2852 = vadd.f32 0.0, %v2851
  %2853 = vmatprep.mubr.f32.mxu0 0.0
  %2854 = vmatmul.mubr.f32.gmra.mxu0 %v60
  %v2855 = vpop.f32.mrf.mxu0
  %v2856 = vadd.f32 0.0, %v2855
  %v2857 = vpop.f32.mrf.mxu0
  %v2858 = vadd.f32 0.0, %v2857
  %2859 = vdwg.mxu0
  %v2860 = vld [vmem:[%s3] sm:$0xff]
  %v2861 = vld [vmem:[%s3 + $0x8] sm:$0xff]
  %v2862 = vld [vmem:[%s3 + $0x10] sm:$0xff]
  %v2863 = vld [vmem:[%s3 + $0x18] sm:$0xff]
  %v2864 = vld [vmem:[%s3 + $0x20] sm:$0xff]
  %v2865 = vld [vmem:[%s3 + $0x28] sm:$0xff]
  %v2866 = vld [vmem:[%s3 + $0x30] sm:$0xff]
  %v2867 = vld [vmem:[%s3 + $0x38] sm:$0xff]
  %v2868 = vld [vmem:[%s3 + $0x40] sm:$0xff]
  %v2869 = vld [vmem:[%s3 + $0x48] sm:$0xff]
  %v2870 = vld [vmem:[%s3 + $0x50] sm:$0xff]
  %v2871 = vld [vmem:[%s3 + $0x58] sm:$0xff]
  %v2872 = vld [vmem:[%s3 + $0x60] sm:$0xff]
  %v2873 = vld [vmem:[%s3 + $0x68] sm:$0xff]
  %v2874 = vld [vmem:[%s3 + $0x70] sm:$0xff]
  %v2875 = vld [vmem:[%s3 + $0x78] sm:$0xff]
  %v2876 = vld [vmem:[%s3 + $0x80] sm:$0xff]
  %v2877 = vld [vmem:[%s3 + $0x88] sm:$0xff]
  %v2878 = vld [vmem:[%s3 + $0x90] sm:$0xff]
  %v2879 = vld [vmem:[%s3 + $0x98] sm:$0xff]
  %v2880 = vld [vmem:[%s3 + $0xa0] sm:$0xff]
  %v2881 = vld [vmem:[%s3 + $0xa8] sm:$0xff]
  %v2882 = vld [vmem:[%s3 + $0xb0] sm:$0xff]
  %v2883 = vld [vmem:[%s3 + $0xb8] sm:$0xff]
  %v2884 = vld [vmem:[%s3 + $0xc0] sm:$0xff]
  %v2885 = vld [vmem:[%s3 + $0xc8] sm:$0xff]
  %v2886 = vld [vmem:[%s3 + $0xd0] sm:$0xff]
  %v2887 = vld [vmem:[%s3 + $0xd8] sm:$0xff]
  %v2888 = vld [vmem:[%s3 + $0xe0] sm:$0xff]
  %v2889 = vld [vmem:[%s3 + $0xe8] sm:$0xff]
  %v2890 = vld [vmem:[%s3 + $0xf0] sm:$0xff]
  %v2891 = vld [vmem:[%s3 + $0xf8] sm:$0xff]
  %v2892 = vld [vmem:[%s3 + $0x100] sm:$0xff]
  %v2893 = vld [vmem:[%s3 + $0x108] sm:$0xff]
  %v2894 = vld [vmem:[%s3 + $0x110] sm:$0xff]
  %v2895 = vld [vmem:[%s3 + $0x118] sm:$0xff]
  %v2896 = vld [vmem:[%s3 + $0x120] sm:$0xff]
  %v2897 = vld [vmem:[%s3 + $0x128] sm:$0xff]
  %v2898 = vld [vmem:[%s3 + $0x130] sm:$0xff]
  %v2899 = vld [vmem:[%s3 + $0x138] sm:$0xff]
  %v2900 = vld [vmem:[%s3 + $0x140] sm:$0xff]
  %v2901 = vld [vmem:[%s3 + $0x148] sm:$0xff]
  %v2902 = vld [vmem:[%s3 + $0x150] sm:$0xff]
  %v2903 = vld [vmem:[%s3 + $0x158] sm:$0xff]
  %v2904 = vld [vmem:[%s3 + $0x160] sm:$0xff]
  %v2905 = vld [vmem:[%s3 + $0x168] sm:$0xff]
  %v2906 = vld [vmem:[%s3 + $0x170] sm:$0xff]
  %v2907 = vld [vmem:[%s3 + $0x178] sm:$0xff]
  %v2908 = vld [vmem:[%s3 + $0x180] sm:$0xff]
  %v2909 = vld [vmem:[%s3 + $0x188] sm:$0xff]
  %v2910 = vld [vmem:[%s3 + $0x190] sm:$0xff]
  %v2911 = vld [vmem:[%s3 + $0x198] sm:$0xff]
  %v2912 = vld [vmem:[%s3 + $0x1a0] sm:$0xff]
  %v2913 = vld [vmem:[%s3 + $0x1a8] sm:$0xff]
  %v2914 = vld [vmem:[%s3 + $0x1b0] sm:$0xff]
  %v2915 = vld [vmem:[%s3 + $0x1b8] sm:$0xff]
  %v2916 = vld [vmem:[%s3 + $0x1c0] sm:$0xff]
  %v2917 = vld [vmem:[%s3 + $0x1c8] sm:$0xff]
  %v2918 = vld [vmem:[%s3 + $0x1d0] sm:$0xff]
  %v2919 = vld [vmem:[%s3 + $0x1d8] sm:$0xff]
  %v2920 = vld [vmem:[%s3 + $0x1e0] sm:$0xff]
  %v2921 = vld [vmem:[%s3 + $0x1e8] sm:$0xff]
  %v2922 = vld [vmem:[%s3 + $0x1f0] sm:$0xff]
  %v2923 = vld [vmem:[%s3 + $0x1f8] sm:$0xff]
  %v2924 = vld [vmem:[%s3 + $0x200] sm:$0xff]
  %v2925 = vld [vmem:[%s3 + $0x208] sm:$0xff]
  %v2926 = vld [vmem:[%s3 + $0x210] sm:$0xff]
  %v2927 = vld [vmem:[%s3 + $0x218] sm:$0xff]
  %v2928 = vld [vmem:[%s3 + $0x220] sm:$0xff]
  %v2929 = vld [vmem:[%s3 + $0x228] sm:$0xff]
  %v2930 = vld [vmem:[%s3 + $0x230] sm:$0xff]
  %v2931 = vld [vmem:[%s3 + $0x238] sm:$0xff]
  %v2932 = vld [vmem:[%s3 + $0x240] sm:$0xff]
  %v2933 = vld [vmem:[%s3 + $0x248] sm:$0xff]
  %v2934 = vld [vmem:[%s3 + $0x250] sm:$0xff]
  %v2935 = vld [vmem:[%s3 + $0x258] sm:$0xff]
  %v2936 = vld [vmem:[%s3 + $0x260] sm:$0xff]
  %v2937 = vld [vmem:[%s3 + $0x268] sm:$0xff]
  %v2938 = vld [vmem:[%s3 + $0x270] sm:$0xff]
  %v2939 = vld [vmem:[%s3 + $0x278] sm:$0xff]
  %v2940 = vld [vmem:[%s3 + $0x280] sm:$0xff]
  %v2941 = vld [vmem:[%s3 + $0x288] sm:$0xff]
  %v2942 = vld [vmem:[%s3 + $0x290] sm:$0xff]
  %v2943 = vld [vmem:[%s3 + $0x298] sm:$0xff]
  %v2944 = vld [vmem:[%s3 + $0x2a0] sm:$0xff]
  %v2945 = vld [vmem:[%s3 + $0x2a8] sm:$0xff]
  %v2946 = vld [vmem:[%s3 + $0x2b0] sm:$0xff]
  %v2947 = vld [vmem:[%s3 + $0x2b8] sm:$0xff]
  %v2948 = vld [vmem:[%s3 + $0x2c0] sm:$0xff]
  %v2949 = vld [vmem:[%s3 + $0x2c8] sm:$0xff]
  %v2950 = vld [vmem:[%s3 + $0x2d0] sm:$0xff]
  %v2951 = vld [vmem:[%s3 + $0x2d8] sm:$0xff]
  %v2952 = vld [vmem:[%s3 + $0x2e0] sm:$0xff]
  %v2953 = vld [vmem:[%s3 + $0x2e8] sm:$0xff]
  %v2954 = vld [vmem:[%s3 + $0x2f0] sm:$0xff]
  %v2955 = vld [vmem:[%s3 + $0x2f8] sm:$0xff]
  %v2956 = vld [vmem:[%s3 + $0x300] sm:$0xff]
  %v2957 = vld [vmem:[%s3 + $0x308] sm:$0xff]
  %v2958 = vld [vmem:[%s3 + $0x310] sm:$0xff]
  %v2959 = vld [vmem:[%s3 + $0x318] sm:$0xff]
  %v2960 = vld [vmem:[%s3 + $0x320] sm:$0xff]
  %v2961 = vld [vmem:[%s3 + $0x328] sm:$0xff]
  %v2962 = vld [vmem:[%s3 + $0x330] sm:$0xff]
  %v2963 = vld [vmem:[%s3 + $0x338] sm:$0xff]
  %v2964 = vld [vmem:[%s3 + $0x340] sm:$0xff]
  %v2965 = vld [vmem:[%s3 + $0x348] sm:$0xff]
  %v2966 = vld [vmem:[%s3 + $0x350] sm:$0xff]
  %v2967 = vld [vmem:[%s3 + $0x358] sm:$0xff]
  %v2968 = vld [vmem:[%s3 + $0x360] sm:$0xff]
  %v2969 = vld [vmem:[%s3 + $0x368] sm:$0xff]
  %v2970 = vld [vmem:[%s3 + $0x370] sm:$0xff]
  %v2971 = vld [vmem:[%s3 + $0x378] sm:$0xff]
  %v2972 = vld [vmem:[%s3 + $0x380] sm:$0xff]
  %v2973 = vld [vmem:[%s3 + $0x388] sm:$0xff]
  %v2974 = vld [vmem:[%s3 + $0x390] sm:$0xff]
  %v2975 = vld [vmem:[%s3 + $0x398] sm:$0xff]
  %v2976 = vld [vmem:[%s3 + $0x3a0] sm:$0xff]
  %v2977 = vld [vmem:[%s3 + $0x3a8] sm:$0xff]
  %v2978 = vld [vmem:[%s3 + $0x3b0] sm:$0xff]
  %v2979 = vld [vmem:[%s3 + $0x3b8] sm:$0xff]
  %v2980 = vld [vmem:[%s3 + $0x3c0] sm:$0xff]
  %v2981 = vld [vmem:[%s3 + $0x3c8] sm:$0xff]
  %v2982 = vld [vmem:[%s3 + $0x3d0] sm:$0xff]
  %v2983 = vld [vmem:[%s3 + $0x3d8] sm:$0xff]
  %v2984 = vld [vmem:[%s3 + $0x3e0] sm:$0xff]
  %v2985 = vld [vmem:[%s3 + $0x3e8] sm:$0xff]
  %v2986 = vld [vmem:[%s3 + $0x3f0] sm:$0xff]
  %v2987 = vld [vmem:[%s3 + $0x3f8] sm:$0xff]
  %v2988 = vld [vmem:[%s3 + $0x400] sm:$0xff]
  %v2989 = vld [vmem:[%s3 + $0x408] sm:$0xff]
  %v2990 = vld [vmem:[%s3 + $0x410] sm:$0xff]
  %v2991 = vld [vmem:[%s3 + $0x418] sm:$0xff]
  %v2992 = vld [vmem:[%s3 + $0x420] sm:$0xff]
  %v2993 = vld [vmem:[%s3 + $0x428] sm:$0xff]
  %v2994 = vld [vmem:[%s3 + $0x430] sm:$0xff]
  %v2995 = vld [vmem:[%s3 + $0x438] sm:$0xff]
  %v2996 = vld [vmem:[%s3 + $0x440] sm:$0xff]
  %v2997 = vld [vmem:[%s3 + $0x448] sm:$0xff]
  %v2998 = vld [vmem:[%s3 + $0x450] sm:$0xff]
  %v2999 = vld [vmem:[%s3 + $0x458] sm:$0xff]
  %v3000 = vld [vmem:[%s3 + $0x460] sm:$0xff]
  %v3001 = vld [vmem:[%s3 + $0x468] sm:$0xff]
  %v3002 = vld [vmem:[%s3 + $0x470] sm:$0xff]
  %v3003 = vld [vmem:[%s3 + $0x478] sm:$0xff]
  %v3004 = vld [vmem:[%s3 + $0x480] sm:$0xff]
  %v3005 = vld [vmem:[%s3 + $0x488] sm:$0xff]
  %v3006 = vld [vmem:[%s3 + $0x490] sm:$0xff]
  %v3007 = vld [vmem:[%s3 + $0x498] sm:$0xff]
  %v3008 = vld [vmem:[%s3 + $0x4a0] sm:$0xff]
  %v3009 = vld [vmem:[%s3 + $0x4a8] sm:$0xff]
  %v3010 = vld [vmem:[%s3 + $0x4b0] sm:$0xff]
  %v3011 = vld [vmem:[%s3 + $0x4b8] sm:$0xff]
  %v3012 = vld [vmem:[%s3 + $0x4c0] sm:$0xff]
  %v3013 = vld [vmem:[%s3 + $0x4c8] sm:$0xff]
  %v3014 = vld [vmem:[%s3 + $0x4d0] sm:$0xff]
  %v3015 = vld [vmem:[%s3 + $0x4d8] sm:$0xff]
  %v3016 = vld [vmem:[%s3 + $0x4e0] sm:$0xff]
  %v3017 = vld [vmem:[%s3 + $0x4e8] sm:$0xff]
  %v3018 = vld [vmem:[%s3 + $0x4f0] sm:$0xff]
  %v3019 = vld [vmem:[%s3 + $0x4f8] sm:$0xff]
  %v3020 = vld [vmem:[%s3 + $0x500] sm:$0xff]
  %v3021 = vld [vmem:[%s3 + $0x508] sm:$0xff]
  %v3022 = vld [vmem:[%s3 + $0x510] sm:$0xff]
  %v3023 = vld [vmem:[%s3 + $0x518] sm:$0xff]
  %v3024 = vld [vmem:[%s3 + $0x520] sm:$0xff]
  %v3025 = vld [vmem:[%s3 + $0x528] sm:$0xff]
  %v3026 = vld [vmem:[%s3 + $0x530] sm:$0xff]
  %v3027 = vld [vmem:[%s3 + $0x538] sm:$0xff]
  %v3028 = vld [vmem:[%s3 + $0x540] sm:$0xff]
  %v3029 = vld [vmem:[%s3 + $0x548] sm:$0xff]
  %v3030 = vld [vmem:[%s3 + $0x550] sm:$0xff]
  %v3031 = vld [vmem:[%s3 + $0x558] sm:$0xff]
  %v3032 = vld [vmem:[%s3 + $0x560] sm:$0xff]
  %v3033 = vld [vmem:[%s3 + $0x568] sm:$0xff]
  %v3034 = vld [vmem:[%s3 + $0x570] sm:$0xff]
  %v3035 = vld [vmem:[%s3 + $0x578] sm:$0xff]
  %v3036 = vld [vmem:[%s3 + $0x580] sm:$0xff]
  %v3037 = vld [vmem:[%s3 + $0x588] sm:$0xff]
  %v3038 = vld [vmem:[%s3 + $0x590] sm:$0xff]
  %v3039 = vld [vmem:[%s3 + $0x598] sm:$0xff]
  %v3040 = vld [vmem:[%s3 + $0x5a0] sm:$0xff]
  %v3041 = vld [vmem:[%s3 + $0x5a8] sm:$0xff]
  %v3042 = vld [vmem:[%s3 + $0x5b0] sm:$0xff]
  %v3043 = vld [vmem:[%s3 + $0x5b8] sm:$0xff]
  %v3044 = vld [vmem:[%s3 + $0x5c0] sm:$0xff]
  %v3045 = vld [vmem:[%s3 + $0x5c8] sm:$0xff]
  %v3046 = vld [vmem:[%s3 + $0x5d0] sm:$0xff]
  %v3047 = vld [vmem:[%s3 + $0x5d8] sm:$0xff]
  %v3048 = vld [vmem:[%s3 + $0x5e0] sm:$0xff]
  %v3049 = vld [vmem:[%s3 + $0x5e8] sm:$0xff]
  %v3050 = vld [vmem:[%s3 + $0x5f0] sm:$0xff]
  %v3051 = vld [vmem:[%s3 + $0x5f8] sm:$0xff]
  %v3052 = vld [vmem:[%s3 + $0x600] sm:$0xff]
  %v3053 = vld [vmem:[%s3 + $0x608] sm:$0xff]
  %v3054 = vld [vmem:[%s3 + $0x610] sm:$0xff]
  %v3055 = vld [vmem:[%s3 + $0x618] sm:$0xff]
  %v3056 = vld [vmem:[%s3 + $0x620] sm:$0xff]
  %v3057 = vld [vmem:[%s3 + $0x628] sm:$0xff]
  %v3058 = vld [vmem:[%s3 + $0x630] sm:$0xff]
  %v3059 = vld [vmem:[%s3 + $0x638] sm:$0xff]
  %v3060 = vld [vmem:[%s3 + $0x640] sm:$0xff]
  %v3061 = vld [vmem:[%s3 + $0x648] sm:$0xff]
  %v3062 = vld [vmem:[%s3 + $0x650] sm:$0xff]
  %v3063 = vld [vmem:[%s3 + $0x658] sm:$0xff]
  %v3064 = vld [vmem:[%s3 + $0x660] sm:$0xff]
  %v3065 = vld [vmem:[%s3 + $0x668] sm:$0xff]
  %v3066 = vld [vmem:[%s3 + $0x670] sm:$0xff]
  %v3067 = vld [vmem:[%s3 + $0x678] sm:$0xff]
  %v3068 = vld [vmem:[%s3 + $0x680] sm:$0xff]
  %v3069 = vld [vmem:[%s3 + $0x688] sm:$0xff]
  %v3070 = vld [vmem:[%s3 + $0x690] sm:$0xff]
  %v3071 = vld [vmem:[%s3 + $0x698] sm:$0xff]
  %v3072 = vld [vmem:[%s3 + $0x6a0] sm:$0xff]
  %v3073 = vld [vmem:[%s3 + $0x6a8] sm:$0xff]
  %v3074 = vld [vmem:[%s3 + $0x6b0] sm:$0xff]
  %v3075 = vld [vmem:[%s3 + $0x6b8] sm:$0xff]
  %v3076 = vld [vmem:[%s3 + $0x6c0] sm:$0xff]
  %v3077 = vld [vmem:[%s3 + $0x6c8] sm:$0xff]
  %v3078 = vld [vmem:[%s3 + $0x6d0] sm:$0xff]
  %v3079 = vld [vmem:[%s3 + $0x6d8] sm:$0xff]
  %v3080 = vld [vmem:[%s3 + $0x6e0] sm:$0xff]
  %v3081 = vld [vmem:[%s3 + $0x6e8] sm:$0xff]
  %v3082 = vld [vmem:[%s3 + $0x6f0] sm:$0xff]
  %v3083 = vld [vmem:[%s3 + $0x6f8] sm:$0xff]
  %v3084 = vld [vmem:[%s3 + $0x700] sm:$0xff]
  %v3085 = vld [vmem:[%s3 + $0x708] sm:$0xff]
  %v3086 = vld [vmem:[%s3 + $0x710] sm:$0xff]
  %v3087 = vld [vmem:[%s3 + $0x718] sm:$0xff]
  %v3088 = vld [vmem:[%s3 + $0x720] sm:$0xff]
  %v3089 = vld [vmem:[%s3 + $0x728] sm:$0xff]
  %v3090 = vld [vmem:[%s3 + $0x730] sm:$0xff]
  %v3091 = vld [vmem:[%s3 + $0x738] sm:$0xff]
  %v3092 = vld [vmem:[%s3 + $0x740] sm:$0xff]
  %v3093 = vld [vmem:[%s3 + $0x748] sm:$0xff]
  %v3094 = vld [vmem:[%s3 + $0x750] sm:$0xff]
  %v3095 = vld [vmem:[%s3 + $0x758] sm:$0xff]
  %v3096 = vld [vmem:[%s3 + $0x760] sm:$0xff]
  %v3097 = vld [vmem:[%s3 + $0x768] sm:$0xff]
  %v3098 = vld [vmem:[%s3 + $0x770] sm:$0xff]
  %v3099 = vld [vmem:[%s3 + $0x778] sm:$0xff]
  %v3100 = vld [vmem:[%s3 + $0x780] sm:$0xff]
  %v3101 = vld [vmem:[%s3 + $0x788] sm:$0xff]
  %v3102 = vld [vmem:[%s3 + $0x790] sm:$0xff]
  %v3103 = vld [vmem:[%s3 + $0x798] sm:$0xff]
  %v3104 = vld [vmem:[%s3 + $0x7a0] sm:$0xff]
  %v3105 = vld [vmem:[%s3 + $0x7a8] sm:$0xff]
  %v3106 = vld [vmem:[%s3 + $0x7b0] sm:$0xff]
  %v3107 = vld [vmem:[%s3 + $0x7b8] sm:$0xff]
  %v3108 = vld [vmem:[%s3 + $0x7c0] sm:$0xff]
  %v3109 = vld [vmem:[%s3 + $0x7c8] sm:$0xff]
  %v3110 = vld [vmem:[%s3 + $0x7d0] sm:$0xff]
  %v3111 = vld [vmem:[%s3 + $0x7d8] sm:$0xff]
  %v3112 = vld [vmem:[%s3 + $0x7e0] sm:$0xff]
  %v3113 = vld [vmem:[%s3 + $0x7e8] sm:$0xff]
  %v3114 = vld [vmem:[%s3 + $0x7f0] sm:$0xff]
  %v3115 = vld [vmem:[%s3 + $0x7f8] sm:$0xff]
  %s3116 = scalar_lea.vmem %s3, 2048
  %v3117 = vld [vmem:[%s3116] sm:$0xff]
  %v3118 = vld [vmem:[%s3116 + $0x8] sm:$0xff]
  %v3119 = vld [vmem:[%s3116 + $0x10] sm:$0xff]
  %v3120 = vld [vmem:[%s3116 + $0x18] sm:$0xff]
  %v3121 = vld [vmem:[%s3116 + $0x20] sm:$0xff]
  %v3122 = vld [vmem:[%s3116 + $0x28] sm:$0xff]
  %v3123 = vld [vmem:[%s3116 + $0x30] sm:$0xff]
  %v3124 = vld [vmem:[%s3116 + $0x38] sm:$0xff]
  %v3125 = vld [vmem:[%s3116 + $0x40] sm:$0xff]
  %v3126 = vld [vmem:[%s3116 + $0x48] sm:$0xff]
  %v3127 = vld [vmem:[%s3116 + $0x50] sm:$0xff]
  %v3128 = vld [vmem:[%s3116 + $0x58] sm:$0xff]
  %v3129 = vld [vmem:[%s3116 + $0x60] sm:$0xff]
  %v3130 = vld [vmem:[%s3116 + $0x68] sm:$0xff]
  %v3131 = vld [vmem:[%s3116 + $0x70] sm:$0xff]
  %v3132 = vld [vmem:[%s3116 + $0x78] sm:$0xff]
  %v3133 = vld [vmem:[%s3116 + $0x80] sm:$0xff]
  %v3134 = vld [vmem:[%s3116 + $0x88] sm:$0xff]
  %v3135 = vld [vmem:[%s3116 + $0x90] sm:$0xff]
  %v3136 = vld [vmem:[%s3116 + $0x98] sm:$0xff]
  %v3137 = vld [vmem:[%s3116 + $0xa0] sm:$0xff]
  %v3138 = vld [vmem:[%s3116 + $0xa8] sm:$0xff]
  %v3139 = vld [vmem:[%s3116 + $0xb0] sm:$0xff]
  %v3140 = vld [vmem:[%s3116 + $0xb8] sm:$0xff]
  %v3141 = vld [vmem:[%s3116 + $0xc0] sm:$0xff]
  %v3142 = vld [vmem:[%s3116 + $0xc8] sm:$0xff]
  %v3143 = vld [vmem:[%s3116 + $0xd0] sm:$0xff]
  %v3144 = vld [vmem:[%s3116 + $0xd8] sm:$0xff]
  %v3145 = vld [vmem:[%s3116 + $0xe0] sm:$0xff]
  %v3146 = vld [vmem:[%s3116 + $0xe8] sm:$0xff]
  %v3147 = vld [vmem:[%s3116 + $0xf0] sm:$0xff]
  %v3148 = vld [vmem:[%s3116 + $0xf8] sm:$0xff]
  %v3149 = vld [vmem:[%s3116 + $0x100] sm:$0xff]
  %v3150 = vld [vmem:[%s3116 + $0x108] sm:$0xff]
  %v3151 = vld [vmem:[%s3116 + $0x110] sm:$0xff]
  %v3152 = vld [vmem:[%s3116 + $0x118] sm:$0xff]
  %v3153 = vld [vmem:[%s3116 + $0x120] sm:$0xff]
  %v3154 = vld [vmem:[%s3116 + $0x128] sm:$0xff]
  %v3155 = vld [vmem:[%s3116 + $0x130] sm:$0xff]
  %v3156 = vld [vmem:[%s3116 + $0x138] sm:$0xff]
  %v3157 = vld [vmem:[%s3116 + $0x140] sm:$0xff]
  %v3158 = vld [vmem:[%s3116 + $0x148] sm:$0xff]
  %v3159 = vld [vmem:[%s3116 + $0x150] sm:$0xff]
  %v3160 = vld [vmem:[%s3116 + $0x158] sm:$0xff]
  %v3161 = vld [vmem:[%s3116 + $0x160] sm:$0xff]
  %v3162 = vld [vmem:[%s3116 + $0x168] sm:$0xff]
  %v3163 = vld [vmem:[%s3116 + $0x170] sm:$0xff]
  %v3164 = vld [vmem:[%s3116 + $0x178] sm:$0xff]
  %v3165 = vld [vmem:[%s3116 + $0x180] sm:$0xff]
  %v3166 = vld [vmem:[%s3116 + $0x188] sm:$0xff]
  %v3167 = vld [vmem:[%s3116 + $0x190] sm:$0xff]
  %v3168 = vld [vmem:[%s3116 + $0x198] sm:$0xff]
  %v3169 = vld [vmem:[%s3116 + $0x1a0] sm:$0xff]
  %v3170 = vld [vmem:[%s3116 + $0x1a8] sm:$0xff]
  %v3171 = vld [vmem:[%s3116 + $0x1b0] sm:$0xff]
  %v3172 = vld [vmem:[%s3116 + $0x1b8] sm:$0xff]
  %v3173 = vld [vmem:[%s3116 + $0x1c0] sm:$0xff]
  %v3174 = vld [vmem:[%s3116 + $0x1c8] sm:$0xff]
  %v3175 = vld [vmem:[%s3116 + $0x1d0] sm:$0xff]
  %v3176 = vld [vmem:[%s3116 + $0x1d8] sm:$0xff]
  %v3177 = vld [vmem:[%s3116 + $0x1e0] sm:$0xff]
  %v3178 = vld [vmem:[%s3116 + $0x1e8] sm:$0xff]
  %v3179 = vld [vmem:[%s3116 + $0x1f0] sm:$0xff]
  %v3180 = vld [vmem:[%s3116 + $0x1f8] sm:$0xff]
  %v3181 = vld [vmem:[%s3116 + $0x200] sm:$0xff]
  %v3182 = vld [vmem:[%s3116 + $0x208] sm:$0xff]
  %v3183 = vld [vmem:[%s3116 + $0x210] sm:$0xff]
  %v3184 = vld [vmem:[%s3116 + $0x218] sm:$0xff]
  %v3185 = vld [vmem:[%s3116 + $0x220] sm:$0xff]
  %v3186 = vld [vmem:[%s3116 + $0x228] sm:$0xff]
  %v3187 = vld [vmem:[%s3116 + $0x230] sm:$0xff]
  %v3188 = vld [vmem:[%s3116 + $0x238] sm:$0xff]
  %v3189 = vld [vmem:[%s3116 + $0x240] sm:$0xff]
  %v3190 = vld [vmem:[%s3116 + $0x248] sm:$0xff]
  %v3191 = vld [vmem:[%s3116 + $0x250] sm:$0xff]
  %v3192 = vld [vmem:[%s3116 + $0x258] sm:$0xff]
  %v3193 = vld [vmem:[%s3116 + $0x260] sm:$0xff]
  %v3194 = vld [vmem:[%s3116 + $0x268] sm:$0xff]
  %v3195 = vld [vmem:[%s3116 + $0x270] sm:$0xff]
  %v3196 = vld [vmem:[%s3116 + $0x278] sm:$0xff]
  %v3197 = vld [vmem:[%s3116 + $0x280] sm:$0xff]
  %v3198 = vld [vmem:[%s3116 + $0x288] sm:$0xff]
  %v3199 = vld [vmem:[%s3116 + $0x290] sm:$0xff]
  %v3200 = vld [vmem:[%s3116 + $0x298] sm:$0xff]
  %v3201 = vld [vmem:[%s3116 + $0x2a0] sm:$0xff]
  %v3202 = vld [vmem:[%s3116 + $0x2a8] sm:$0xff]
  %v3203 = vld [vmem:[%s3116 + $0x2b0] sm:$0xff]
  %v3204 = vld [vmem:[%s3116 + $0x2b8] sm:$0xff]
  %v3205 = vld [vmem:[%s3116 + $0x2c0] sm:$0xff]
  %v3206 = vld [vmem:[%s3116 + $0x2c8] sm:$0xff]
  %v3207 = vld [vmem:[%s3116 + $0x2d0] sm:$0xff]
  %v3208 = vld [vmem:[%s3116 + $0x2d8] sm:$0xff]
  %v3209 = vld [vmem:[%s3116 + $0x2e0] sm:$0xff]
  %v3210 = vld [vmem:[%s3116 + $0x2e8] sm:$0xff]
  %v3211 = vld [vmem:[%s3116 + $0x2f0] sm:$0xff]
  %v3212 = vld [vmem:[%s3116 + $0x2f8] sm:$0xff]
  %v3213 = vld [vmem:[%s3116 + $0x300] sm:$0xff]
  %v3214 = vld [vmem:[%s3116 + $0x308] sm:$0xff]
  %v3215 = vld [vmem:[%s3116 + $0x310] sm:$0xff]
  %v3216 = vld [vmem:[%s3116 + $0x318] sm:$0xff]
  %v3217 = vld [vmem:[%s3116 + $0x320] sm:$0xff]
  %v3218 = vld [vmem:[%s3116 + $0x328] sm:$0xff]
  %v3219 = vld [vmem:[%s3116 + $0x330] sm:$0xff]
  %v3220 = vld [vmem:[%s3116 + $0x338] sm:$0xff]
  %v3221 = vld [vmem:[%s3116 + $0x340] sm:$0xff]
  %v3222 = vld [vmem:[%s3116 + $0x348] sm:$0xff]
  %v3223 = vld [vmem:[%s3116 + $0x350] sm:$0xff]
  %v3224 = vld [vmem:[%s3116 + $0x358] sm:$0xff]
  %v3225 = vld [vmem:[%s3116 + $0x360] sm:$0xff]
  %v3226 = vld [vmem:[%s3116 + $0x368] sm:$0xff]
  %v3227 = vld [vmem:[%s3116 + $0x370] sm:$0xff]
  %v3228 = vld [vmem:[%s3116 + $0x378] sm:$0xff]
  %v3229 = vld [vmem:[%s3116 + $0x380] sm:$0xff]
  %v3230 = vld [vmem:[%s3116 + $0x388] sm:$0xff]
  %v3231 = vld [vmem:[%s3116 + $0x390] sm:$0xff]
  %v3232 = vld [vmem:[%s3116 + $0x398] sm:$0xff]
  %v3233 = vld [vmem:[%s3116 + $0x3a0] sm:$0xff]
  %v3234 = vld [vmem:[%s3116 + $0x3a8] sm:$0xff]
  %v3235 = vld [vmem:[%s3116 + $0x3b0] sm:$0xff]
  %v3236 = vld [vmem:[%s3116 + $0x3b8] sm:$0xff]
  %v3237 = vld [vmem:[%s3116 + $0x3c0] sm:$0xff]
  %v3238 = vld [vmem:[%s3116 + $0x3c8] sm:$0xff]
  %v3239 = vld [vmem:[%s3116 + $0x3d0] sm:$0xff]
  %v3240 = vld [vmem:[%s3116 + $0x3d8] sm:$0xff]
  %v3241 = vld [vmem:[%s3116 + $0x3e0] sm:$0xff]
  %v3242 = vld [vmem:[%s3116 + $0x3e8] sm:$0xff]
  %v3243 = vld [vmem:[%s3116 + $0x3f0] sm:$0xff]
  %v3244 = vld [vmem:[%s3116 + $0x3f8] sm:$0xff]
  %v3245 = vld [vmem:[%s3116 + $0x400] sm:$0xff]
  %v3246 = vld [vmem:[%s3116 + $0x408] sm:$0xff]
  %v3247 = vld [vmem:[%s3116 + $0x410] sm:$0xff]
  %v3248 = vld [vmem:[%s3116 + $0x418] sm:$0xff]
  %v3249 = vld [vmem:[%s3116 + $0x420] sm:$0xff]
  %v3250 = vld [vmem:[%s3116 + $0x428] sm:$0xff]
  %v3251 = vld [vmem:[%s3116 + $0x430] sm:$0xff]
  %v3252 = vld [vmem:[%s3116 + $0x438] sm:$0xff]
  %v3253 = vld [vmem:[%s3116 + $0x440] sm:$0xff]
  %v3254 = vld [vmem:[%s3116 + $0x448] sm:$0xff]
  %v3255 = vld [vmem:[%s3116 + $0x450] sm:$0xff]
  %v3256 = vld [vmem:[%s3116 + $0x458] sm:$0xff]
  %v3257 = vld [vmem:[%s3116 + $0x460] sm:$0xff]
  %v3258 = vld [vmem:[%s3116 + $0x468] sm:$0xff]
  %v3259 = vld [vmem:[%s3116 + $0x470] sm:$0xff]
  %v3260 = vld [vmem:[%s3116 + $0x478] sm:$0xff]
  %v3261 = vld [vmem:[%s3116 + $0x480] sm:$0xff]
  %v3262 = vld [vmem:[%s3116 + $0x488] sm:$0xff]
  %v3263 = vld [vmem:[%s3116 + $0x490] sm:$0xff]
  %v3264 = vld [vmem:[%s3116 + $0x498] sm:$0xff]
  %v3265 = vld [vmem:[%s3116 + $0x4a0] sm:$0xff]
  %v3266 = vld [vmem:[%s3116 + $0x4a8] sm:$0xff]
  %v3267 = vld [vmem:[%s3116 + $0x4b0] sm:$0xff]
  %v3268 = vld [vmem:[%s3116 + $0x4b8] sm:$0xff]
  %v3269 = vld [vmem:[%s3116 + $0x4c0] sm:$0xff]
  %v3270 = vld [vmem:[%s3116 + $0x4c8] sm:$0xff]
  %v3271 = vld [vmem:[%s3116 + $0x4d0] sm:$0xff]
  %v3272 = vld [vmem:[%s3116 + $0x4d8] sm:$0xff]
  %v3273 = vld [vmem:[%s3116 + $0x4e0] sm:$0xff]
  %v3274 = vld [vmem:[%s3116 + $0x4e8] sm:$0xff]
  %v3275 = vld [vmem:[%s3116 + $0x4f0] sm:$0xff]
  %v3276 = vld [vmem:[%s3116 + $0x4f8] sm:$0xff]
  %v3277 = vld [vmem:[%s3116 + $0x500] sm:$0xff]
  %v3278 = vld [vmem:[%s3116 + $0x508] sm:$0xff]
  %v3279 = vld [vmem:[%s3116 + $0x510] sm:$0xff]
  %v3280 = vld [vmem:[%s3116 + $0x518] sm:$0xff]
  %v3281 = vld [vmem:[%s3116 + $0x520] sm:$0xff]
  %v3282 = vld [vmem:[%s3116 + $0x528] sm:$0xff]
  %v3283 = vld [vmem:[%s3116 + $0x530] sm:$0xff]
  %v3284 = vld [vmem:[%s3116 + $0x538] sm:$0xff]
  %v3285 = vld [vmem:[%s3116 + $0x540] sm:$0xff]
  %v3286 = vld [vmem:[%s3116 + $0x548] sm:$0xff]
  %v3287 = vld [vmem:[%s3116 + $0x550] sm:$0xff]
  %v3288 = vld [vmem:[%s3116 + $0x558] sm:$0xff]
  %v3289 = vld [vmem:[%s3116 + $0x560] sm:$0xff]
  %v3290 = vld [vmem:[%s3116 + $0x568] sm:$0xff]
  %v3291 = vld [vmem:[%s3116 + $0x570] sm:$0xff]
  %v3292 = vld [vmem:[%s3116 + $0x578] sm:$0xff]
  %v3293 = vld [vmem:[%s3116 + $0x580] sm:$0xff]
  %v3294 = vld [vmem:[%s3116 + $0x588] sm:$0xff]
  %v3295 = vld [vmem:[%s3116 + $0x590] sm:$0xff]
  %v3296 = vld [vmem:[%s3116 + $0x598] sm:$0xff]
  %v3297 = vld [vmem:[%s3116 + $0x5a0] sm:$0xff]
  %v3298 = vld [vmem:[%s3116 + $0x5a8] sm:$0xff]
  %v3299 = vld [vmem:[%s3116 + $0x5b0] sm:$0xff]
  %v3300 = vld [vmem:[%s3116 + $0x5b8] sm:$0xff]
  %v3301 = vld [vmem:[%s3116 + $0x5c0] sm:$0xff]
  %v3302 = vld [vmem:[%s3116 + $0x5c8] sm:$0xff]
  %v3303 = vld [vmem:[%s3116 + $0x5d0] sm:$0xff]
  %v3304 = vld [vmem:[%s3116 + $0x5d8] sm:$0xff]
  %v3305 = vld [vmem:[%s3116 + $0x5e0] sm:$0xff]
  %v3306 = vld [vmem:[%s3116 + $0x5e8] sm:$0xff]
  %v3307 = vld [vmem:[%s3116 + $0x5f0] sm:$0xff]
  %v3308 = vld [vmem:[%s3116 + $0x5f8] sm:$0xff]
  %v3309 = vld [vmem:[%s3116 + $0x600] sm:$0xff]
  %v3310 = vld [vmem:[%s3116 + $0x608] sm:$0xff]
  %v3311 = vld [vmem:[%s3116 + $0x610] sm:$0xff]
  %v3312 = vld [vmem:[%s3116 + $0x618] sm:$0xff]
  %v3313 = vld [vmem:[%s3116 + $0x620] sm:$0xff]
  %v3314 = vld [vmem:[%s3116 + $0x628] sm:$0xff]
  %v3315 = vld [vmem:[%s3116 + $0x630] sm:$0xff]
  %v3316 = vld [vmem:[%s3116 + $0x638] sm:$0xff]
  %v3317 = vld [vmem:[%s3116 + $0x640] sm:$0xff]
  %v3318 = vld [vmem:[%s3116 + $0x648] sm:$0xff]
  %v3319 = vld [vmem:[%s3116 + $0x650] sm:$0xff]
  %v3320 = vld [vmem:[%s3116 + $0x658] sm:$0xff]
  %v3321 = vld [vmem:[%s3116 + $0x660] sm:$0xff]
  %v3322 = vld [vmem:[%s3116 + $0x668] sm:$0xff]
  %v3323 = vld [vmem:[%s3116 + $0x670] sm:$0xff]
  %v3324 = vld [vmem:[%s3116 + $0x678] sm:$0xff]
  %v3325 = vld [vmem:[%s3116 + $0x680] sm:$0xff]
  %v3326 = vld [vmem:[%s3116 + $0x688] sm:$0xff]
  %v3327 = vld [vmem:[%s3116 + $0x690] sm:$0xff]
  %v3328 = vld [vmem:[%s3116 + $0x698] sm:$0xff]
  %v3329 = vld [vmem:[%s3116 + $0x6a0] sm:$0xff]
  %v3330 = vld [vmem:[%s3116 + $0x6a8] sm:$0xff]
  %v3331 = vld [vmem:[%s3116 + $0x6b0] sm:$0xff]
  %v3332 = vld [vmem:[%s3116 + $0x6b8] sm:$0xff]
  %v3333 = vld [vmem:[%s3116 + $0x6c0] sm:$0xff]
  %v3334 = vld [vmem:[%s3116 + $0x6c8] sm:$0xff]
  %v3335 = vld [vmem:[%s3116 + $0x6d0] sm:$0xff]
  %v3336 = vld [vmem:[%s3116 + $0x6d8] sm:$0xff]
  %v3337 = vld [vmem:[%s3116 + $0x6e0] sm:$0xff]
  %v3338 = vld [vmem:[%s3116 + $0x6e8] sm:$0xff]
  %v3339 = vld [vmem:[%s3116 + $0x6f0] sm:$0xff]
  %v3340 = vld [vmem:[%s3116 + $0x6f8] sm:$0xff]
  %v3341 = vld [vmem:[%s3116 + $0x700] sm:$0xff]
  %v3342 = vld [vmem:[%s3116 + $0x708] sm:$0xff]
  %v3343 = vld [vmem:[%s3116 + $0x710] sm:$0xff]
  %v3344 = vld [vmem:[%s3116 + $0x718] sm:$0xff]
  %v3345 = vld [vmem:[%s3116 + $0x720] sm:$0xff]
  %v3346 = vld [vmem:[%s3116 + $0x728] sm:$0xff]
  %v3347 = vld [vmem:[%s3116 + $0x730] sm:$0xff]
  %v3348 = vld [vmem:[%s3116 + $0x738] sm:$0xff]
  %v3349 = vld [vmem:[%s3116 + $0x740] sm:$0xff]
  %v3350 = vld [vmem:[%s3116 + $0x748] sm:$0xff]
  %v3351 = vld [vmem:[%s3116 + $0x750] sm:$0xff]
  %v3352 = vld [vmem:[%s3116 + $0x758] sm:$0xff]
  %v3353 = vld [vmem:[%s3116 + $0x760] sm:$0xff]
  %v3354 = vld [vmem:[%s3116 + $0x768] sm:$0xff]
  %v3355 = vld [vmem:[%s3116 + $0x770] sm:$0xff]
  %v3356 = vld [vmem:[%s3116 + $0x778] sm:$0xff]
  %v3357 = vld [vmem:[%s3116 + $0x780] sm:$0xff]
  %v3358 = vld [vmem:[%s3116 + $0x788] sm:$0xff]
  %v3359 = vld [vmem:[%s3116 + $0x790] sm:$0xff]
  %v3360 = vld [vmem:[%s3116 + $0x798] sm:$0xff]
  %v3361 = vld [vmem:[%s3116 + $0x7a0] sm:$0xff]
  %v3362 = vld [vmem:[%s3116 + $0x7a8] sm:$0xff]
  %v3363 = vld [vmem:[%s3116 + $0x7b0] sm:$0xff]
  %v3364 = vld [vmem:[%s3116 + $0x7b8] sm:$0xff]
  %v3365 = vld [vmem:[%s3116 + $0x7c0] sm:$0xff]
  %v3366 = vld [vmem:[%s3116 + $0x7c8] sm:$0xff]
  %v3367 = vld [vmem:[%s3116 + $0x7d0] sm:$0xff]
  %v3368 = vld [vmem:[%s3116 + $0x7d8] sm:$0xff]
  %v3369 = vld [vmem:[%s3116 + $0x7e0] sm:$0xff]
  %v3370 = vld [vmem:[%s3116 + $0x7e8] sm:$0xff]
  %v3371 = vld [vmem:[%s3116 + $0x7f0] sm:$0xff]
  %v3372 = vld [vmem:[%s3116 + $0x7f8] sm:$0xff]
  %3373 = vmatprep.subr.mxu0 %v3178
  %3374 = vmatpush1.msra.mxu0 %v3177
  %3375 = vmatprep.subr.mxu0 %v3174
  %3376 = vmatpush1.msra.mxu0 %v3173
  %3377 = vmatprep.subr.mxu0 %v3170
  %3378 = vmatpush1.msra.mxu0 %v3169
  %3379 = vmatprep.subr.mxu0 %v3166
  %3380 = vmatpush1.msra.mxu0 %v3165
  %3381 = vmatprep.subr.mxu0 %v3162
  %3382 = vmatpush1.msra.mxu0 %v3161
  %3383 = vmatprep.subr.mxu0 %v3158
  %3384 = vmatpush1.msra.mxu0 %v3157
  %3385 = vmatprep.subr.mxu0 %v3154
  %3386 = vmatpush1.msra.mxu0 %v3153
  %3387 = vmatprep.subr.mxu0 %v3150
  %3388 = vmatpush1.msra.mxu0 %v3149
  %3389 = vmatprep.subr.mxu0 %v3146
  %3390 = vmatpush1.msra.mxu0 %v3145
  %3391 = vmatprep.subr.mxu0 %v3142
  %3392 = vmatpush1.msra.mxu0 %v3141
  %3393 = vmatprep.subr.mxu0 %v3138
  %3394 = vmatpush1.msra.mxu0 %v3137
  %3395 = vmatprep.subr.mxu0 %v3134
  %3396 = vmatpush1.msra.mxu0 %v3133
  %3397 = vmatprep.subr.mxu0 %v3130
  %3398 = vmatpush1.msra.mxu0 %v3129
  %3399 = vmatprep.subr.mxu0 %v3126
  %3400 = vmatpush1.msra.mxu0 %v3125
  %3401 = vmatprep.subr.mxu0 %v3122
  %3402 = vmatpush1.msra.mxu0 %v3121
  %3403 = vmatprep.subr.mxu0 %v3118
  %3404 = vmatpush1.msra.mxu0 %v3117
  %3405 = vmatprep.subr.mxu0 %v3242
  %3406 = vmatpush2.msra.mxu0 %v3241
  %3407 = vmatprep.subr.mxu0 %v3238
  %3408 = vmatpush2.msra.mxu0 %v3237
  %3409 = vmatprep.subr.mxu0 %v3234
  %3410 = vmatpush2.msra.mxu0 %v3233
  %3411 = vmatprep.subr.mxu0 %v3230
  %3412 = vmatpush2.msra.mxu0 %v3229
  %3413 = vmatprep.subr.mxu0 %v3226
  %3414 = vmatpush2.msra.mxu0 %v3225
  %3415 = vmatprep.subr.mxu0 %v3222
  %3416 = vmatpush2.msra.mxu0 %v3221
  %3417 = vmatprep.subr.mxu0 %v3218
  %3418 = vmatpush2.msra.mxu0 %v3217
  %3419 = vmatprep.subr.mxu0 %v3214
  %3420 = vmatpush2.msra.mxu0 %v3213
  %3421 = vmatprep.subr.mxu0 %v3210
  %3422 = vmatpush2.msra.mxu0 %v3209
  %3423 = vmatprep.subr.mxu0 %v3206
  %3424 = vmatpush2.msra.mxu0 %v3205
  %3425 = vmatprep.subr.mxu0 %v3202
  %3426 = vmatpush2.msra.mxu0 %v3201
  %3427 = vmatprep.subr.mxu0 %v3198
  %3428 = vmatpush2.msra.mxu0 %v3197
  %3429 = vmatprep.subr.mxu0 %v3194
  %3430 = vmatpush2.msra.mxu0 %v3193
  %3431 = vmatprep.subr.mxu0 %v3190
  %3432 = vmatpush2.msra.mxu0 %v3189
  %3433 = vmatprep.subr.mxu0 %v3186
  %3434 = vmatpush2.msra.mxu0 %v3185
  %3435 = vmatprep.subr.mxu0 %v3182
  %3436 = vmatpush2.msra.mxu0 %v3181
  %3437 = vmatprep.mubr.f32.mxu0 %v2667
  %3438 = vmatmul.mubr.f32.gmra.mxu0 %v2666
  %v3439 = vpop.f32.mrf.mxu0
  %v3440 = vadd.f32 0.0, %v3439
  %v3441 = vpop.f32.mrf.mxu0
  %v3442 = vadd.f32 0.0, %v3441
  %3443 = vmatprep.mubr.f32.mxu0 %v2671
  %3444 = vmatmul.mubr.f32.gmra.mxu0 %v2670
  %v3445 = vpop.f32.mrf.mxu0
  %v3446 = vadd.f32 0.0, %v3445
  %v3447 = vpop.f32.mrf.mxu0
  %v3448 = vadd.f32 0.0, %v3447
  %3449 = vmatprep.mubr.f32.mxu0 %v2675
  %3450 = vmatmul.mubr.f32.gmra.mxu0 %v2674
  %v3451 = vpop.f32.mrf.mxu0
  %v3452 = vadd.f32 0.0, %v3451
  %v3453 = vpop.f32.mrf.mxu0
  %v3454 = vadd.f32 0.0, %v3453
  %3455 = vmatprep.mubr.f32.mxu0 %v2679
  %3456 = vmatmul.mubr.f32.gmra.mxu0 %v2678
  %v3457 = vpop.f32.mrf.mxu0
  %v3458 = vadd.f32 0.0, %v3457
  %v3459 = vpop.f32.mrf.mxu0
  %v3460 = vadd.f32 0.0, %v3459
  %3461 = vdwg.mxu0
  %3462 = vmatprep.subr.mxu0 %v3306
  %3463 = vmatpush1.msra.mxu0 %v3305
  %3464 = vmatprep.subr.mxu0 %v3302
  %3465 = vmatpush1.msra.mxu0 %v3301
  %3466 = vmatprep.subr.mxu0 %v3298
  %3467 = vmatpush1.msra.mxu0 %v3297
  %3468 = vmatprep.subr.mxu0 %v3294
  %3469 = vmatpush1.msra.mxu0 %v3293
  %3470 = vmatprep.subr.mxu0 %v3290
  %3471 = vmatpush1.msra.mxu0 %v3289
  %3472 = vmatprep.subr.mxu0 %v3286
  %3473 = vmatpush1.msra.mxu0 %v3285
  %3474 = vmatprep.subr.mxu0 %v3282
  %3475 = vmatpush1.msra.mxu0 %v3281
  %3476 = vmatprep.subr.mxu0 %v3278
  %3477 = vmatpush1.msra.mxu0 %v3277
  %3478 = vmatprep.subr.mxu0 %v3274
  %3479 = vmatpush1.msra.mxu0 %v3273
  %3480 = vmatprep.subr.mxu0 %v3270
  %3481 = vmatpush1.msra.mxu0 %v3269
  %3482 = vmatprep.subr.mxu0 %v3266
  %3483 = vmatpush1.msra.mxu0 %v3265
  %3484 = vmatprep.subr.mxu0 %v3262
  %3485 = vmatpush1.msra.mxu0 %v3261
  %3486 = vmatprep.subr.mxu0 %v3258
  %3487 = vmatpush1.msra.mxu0 %v3257
  %3488 = vmatprep.subr.mxu0 %v3254
  %3489 = vmatpush1.msra.mxu0 %v3253
  %3490 = vmatprep.subr.mxu0 %v3250
  %3491 = vmatpush1.msra.mxu0 %v3249
  %3492 = vmatprep.subr.mxu0 %v3246
  %3493 = vmatpush1.msra.mxu0 %v3245
  %3494 = vmatprep.subr.mxu0 %v3370
  %3495 = vmatpush2.msra.mxu0 %v3369
  %3496 = vmatprep.subr.mxu0 %v3366
  %3497 = vmatpush2.msra.mxu0 %v3365
  %3498 = vmatprep.subr.mxu0 %v3362
  %3499 = vmatpush2.msra.mxu0 %v3361
  %3500 = vmatprep.subr.mxu0 %v3358
  %3501 = vmatpush2.msra.mxu0 %v3357
  %3502 = vmatprep.subr.mxu0 %v3354
  %3503 = vmatpush2.msra.mxu0 %v3353
  %3504 = vmatprep.subr.mxu0 %v3350
  %3505 = vmatpush2.msra.mxu0 %v3349
  %3506 = vmatprep.subr.mxu0 %v3346
  %3507 = vmatpush2.msra.mxu0 %v3345
  %3508 = vmatprep.subr.mxu0 %v3342
  %3509 = vmatpush2.msra.mxu0 %v3341
  %3510 = vmatprep.subr.mxu0 %v3338
  %3511 = vmatpush2.msra.mxu0 %v3337
  %3512 = vmatprep.subr.mxu0 %v3334
  %3513 = vmatpush2.msra.mxu0 %v3333
  %3514 = vmatprep.subr.mxu0 %v3330
  %3515 = vmatpush2.msra.mxu0 %v3329
  %3516 = vmatprep.subr.mxu0 %v3326
  %3517 = vmatpush2.msra.mxu0 %v3325
  %3518 = vmatprep.subr.mxu0 %v3322
  %3519 = vmatpush2.msra.mxu0 %v3321
  %3520 = vmatprep.subr.mxu0 %v3318
  %3521 = vmatpush2.msra.mxu0 %v3317
  %3522 = vmatprep.subr.mxu0 %v3314
  %3523 = vmatpush2.msra.mxu0 %v3313
  %3524 = vmatprep.subr.mxu0 %v3310
  %3525 = vmatpush2.msra.mxu0 %v3309
  %3526 = vmatprep.mubr.f32.mxu0 %v2669
  %3527 = vmatmul.mubr.f32.gmra.mxu0 %v2668
  %v3528 = vpop.f32.mrf.mxu0
  %v3529 = vadd.f32 %v3440, %v3528
  %v3530 = vpop.f32.mrf.mxu0
  %v3531 = vadd.f32 %v3442, %v3530
  %3532 = vmatprep.mubr.f32.mxu0 %v2673
  %3533 = vmatmul.mubr.f32.gmra.mxu0 %v2672
  %v3534 = vpop.f32.mrf.mxu0
  %v3535 = vadd.f32 %v3446, %v3534
  %v3536 = vpop.f32.mrf.mxu0
  %v3537 = vadd.f32 %v3448, %v3536
  %3538 = vmatprep.mubr.f32.mxu0 %v2677
  %3539 = vmatmul.mubr.f32.gmra.mxu0 %v2676
  %v3540 = vpop.f32.mrf.mxu0
  %v3541 = vadd.f32 %v3452, %v3540
  %v3542 = vpop.f32.mrf.mxu0
  %v3543 = vadd.f32 %v3454, %v3542
  %3544 = vmatprep.mubr.f32.mxu0 %v2681
  %3545 = vmatmul.mubr.f32.gmra.mxu0 %v2680
  %v3546 = vpop.f32.mrf.mxu0
  %v3547 = vadd.f32 %v3458, %v3546
  %v3548 = vpop.f32.mrf.mxu0
  %v3549 = vadd.f32 %v3460, %v3548
  %3550 = vdwg.mxu0
  %3551 = vmatprep.subr.mxu0 %v3180
  %3552 = vmatpush1.msra.mxu0 %v3179
  %3553 = vmatprep.subr.mxu0 %v3176
  %3554 = vmatpush1.msra.mxu0 %v3175
  %3555 = vmatprep.subr.mxu0 %v3172
  %3556 = vmatpush1.msra.mxu0 %v3171
  %3557 = vmatprep.subr.mxu0 %v3168
  %3558 = vmatpush1.msra.mxu0 %v3167
  %3559 = vmatprep.subr.mxu0 %v3164
  %3560 = vmatpush1.msra.mxu0 %v3163
  %3561 = vmatprep.subr.mxu0 %v3160
  %3562 = vmatpush1.msra.mxu0 %v3159
  %3563 = vmatprep.subr.mxu0 %v3156
  %3564 = vmatpush1.msra.mxu0 %v3155
  %3565 = vmatprep.subr.mxu0 %v3152
  %3566 = vmatpush1.msra.mxu0 %v3151
  %3567 = vmatprep.subr.mxu0 %v3148
  %3568 = vmatpush1.msra.mxu0 %v3147
  %3569 = vmatprep.subr.mxu0 %v3144
  %3570 = vmatpush1.msra.mxu0 %v3143
  %3571 = vmatprep.subr.mxu0 %v3140
  %3572 = vmatpush1.msra.mxu0 %v3139
  %3573 = vmatprep.subr.mxu0 %v3136
  %3574 = vmatpush1.msra.mxu0 %v3135
  %3575 = vmatprep.subr.mxu0 %v3132
  %3576 = vmatpush1.msra.mxu0 %v3131
  %3577 = vmatprep.subr.mxu0 %v3128
  %3578 = vmatpush1.msra.mxu0 %v3127
  %3579 = vmatprep.subr.mxu0 %v3124
  %3580 = vmatpush1.msra.mxu0 %v3123
  %3581 = vmatprep.subr.mxu0 %v3120
  %3582 = vmatpush1.msra.mxu0 %v3119
  %3583 = vmatprep.subr.mxu0 %v3244
  %3584 = vmatpush2.msra.mxu0 %v3243
  %3585 = vmatprep.subr.mxu0 %v3240
  %3586 = vmatpush2.msra.mxu0 %v3239
  %3587 = vmatprep.subr.mxu0 %v3236
  %3588 = vmatpush2.msra.mxu0 %v3235
  %3589 = vmatprep.subr.mxu0 %v3232
  %3590 = vmatpush2.msra.mxu0 %v3231
  %3591 = vmatprep.subr.mxu0 %v3228
  %3592 = vmatpush2.msra.mxu0 %v3227
  %3593 = vmatprep.subr.mxu0 %v3224
  %3594 = vmatpush2.msra.mxu0 %v3223
  %3595 = vmatprep.subr.mxu0 %v3220
  %3596 = vmatpush2.msra.mxu0 %v3219
  %3597 = vmatprep.subr.mxu0 %v3216
  %3598 = vmatpush2.msra.mxu0 %v3215
  %3599 = vmatprep.subr.mxu0 %v3212
  %3600 = vmatpush2.msra.mxu0 %v3211
  %3601 = vmatprep.subr.mxu0 %v3208
  %3602 = vmatpush2.msra.mxu0 %v3207
  %3603 = vmatprep.subr.mxu0 %v3204
  %3604 = vmatpush2.msra.mxu0 %v3203
  %3605 = vmatprep.subr.mxu0 %v3200
  %3606 = vmatpush2.msra.mxu0 %v3199
  %3607 = vmatprep.subr.mxu0 %v3196
  %3608 = vmatpush2.msra.mxu0 %v3195
  %3609 = vmatprep.subr.mxu0 %v3192
  %3610 = vmatpush2.msra.mxu0 %v3191
  %3611 = vmatprep.subr.mxu0 %v3188
  %3612 = vmatpush2.msra.mxu0 %v3187
  %3613 = vmatprep.subr.mxu0 %v3184
  %3614 = vmatpush2.msra.mxu0 %v3183
  %3615 = vmatprep.mubr.f32.mxu0 %v2667
  %3616 = vmatmul.mubr.f32.gmra.mxu0 %v2666
  %v3617 = vpop.f32.mrf.mxu0
  %v3618 = vadd.f32 0.0, %v3617
  %v3619 = vpop.f32.mrf.mxu0
  %v3620 = vadd.f32 0.0, %v3619
  %3621 = vmatprep.mubr.f32.mxu0 %v2671
  %3622 = vmatmul.mubr.f32.gmra.mxu0 %v2670
  %v3623 = vpop.f32.mrf.mxu0
  %v3624 = vadd.f32 0.0, %v3623
  %v3625 = vpop.f32.mrf.mxu0
  %v3626 = vadd.f32 0.0, %v3625
  %3627 = vmatprep.mubr.f32.mxu0 %v2675
  %3628 = vmatmul.mubr.f32.gmra.mxu0 %v2674
  %v3629 = vpop.f32.mrf.mxu0
  %v3630 = vadd.f32 0.0, %v3629
  %v3631 = vpop.f32.mrf.mxu0
  %v3632 = vadd.f32 0.0, %v3631
  %3633 = vmatprep.mubr.f32.mxu0 %v2679
  %3634 = vmatmul.mubr.f32.gmra.mxu0 %v2678
  %v3635 = vpop.f32.mrf.mxu0
  %v3636 = vadd.f32 0.0, %v3635
  %v3637 = vpop.f32.mrf.mxu0
  %v3638 = vadd.f32 0.0, %v3637
  %3639 = vdwg.mxu0
  %3640 = vmatprep.subr.mxu0 %v3308
  %3641 = vmatpush1.msra.mxu0 %v3307
  %3642 = vmatprep.subr.mxu0 %v3304
  %3643 = vmatpush1.msra.mxu0 %v3303
  %3644 = vmatprep.subr.mxu0 %v3300
  %3645 = vmatpush1.msra.mxu0 %v3299
  %3646 = vmatprep.subr.mxu0 %v3296
  %3647 = vmatpush1.msra.mxu0 %v3295
  %3648 = vmatprep.subr.mxu0 %v3292
  %3649 = vmatpush1.msra.mxu0 %v3291
  %3650 = vmatprep.subr.mxu0 %v3288
  %3651 = vmatpush1.msra.mxu0 %v3287
  %3652 = vmatprep.subr.mxu0 %v3284
  %3653 = vmatpush1.msra.mxu0 %v3283
  %3654 = vmatprep.subr.mxu0 %v3280
  %3655 = vmatpush1.msra.mxu0 %v3279
  %3656 = vmatprep.subr.mxu0 %v3276
  %3657 = vmatpush1.msra.mxu0 %v3275
  %3658 = vmatprep.subr.mxu0 %v3272
  %3659 = vmatpush1.msra.mxu0 %v3271
  %3660 = vmatprep.subr.mxu0 %v3268
  %3661 = vmatpush1.msra.mxu0 %v3267
  %3662 = vmatprep.subr.mxu0 %v3264
  %3663 = vmatpush1.msra.mxu0 %v3263
  %3664 = vmatprep.subr.mxu0 %v3260
  %3665 = vmatpush1.msra.mxu0 %v3259
  %3666 = vmatprep.subr.mxu0 %v3256
  %3667 = vmatpush1.msra.mxu0 %v3255
  %3668 = vmatprep.subr.mxu0 %v3252
  %3669 = vmatpush1.msra.mxu0 %v3251
  %3670 = vmatprep.subr.mxu0 %v3248
  %3671 = vmatpush1.msra.mxu0 %v3247
  %3672 = vmatprep.subr.mxu0 %v3372
  %3673 = vmatpush2.msra.mxu0 %v3371
  %3674 = vmatprep.subr.mxu0 %v3368
  %3675 = vmatpush2.msra.mxu0 %v3367
  %3676 = vmatprep.subr.mxu0 %v3364
  %3677 = vmatpush2.msra.mxu0 %v3363
  %3678 = vmatprep.subr.mxu0 %v3360
  %3679 = vmatpush2.msra.mxu0 %v3359
  %3680 = vmatprep.subr.mxu0 %v3356
  %3681 = vmatpush2.msra.mxu0 %v3355
  %3682 = vmatprep.subr.mxu0 %v3352
  %3683 = vmatpush2.msra.mxu0 %v3351
  %3684 = vmatprep.subr.mxu0 %v3348
  %3685 = vmatpush2.msra.mxu0 %v3347
  %3686 = vmatprep.subr.mxu0 %v3344
  %3687 = vmatpush2.msra.mxu0 %v3343
  %3688 = vmatprep.subr.mxu0 %v3340
  %3689 = vmatpush2.msra.mxu0 %v3339
  %3690 = vmatprep.subr.mxu0 %v3336
  %3691 = vmatpush2.msra.mxu0 %v3335
  %3692 = vmatprep.subr.mxu0 %v3332
  %3693 = vmatpush2.msra.mxu0 %v3331
  %3694 = vmatprep.subr.mxu0 %v3328
  %3695 = vmatpush2.msra.mxu0 %v3327
  %3696 = vmatprep.subr.mxu0 %v3324
  %3697 = vmatpush2.msra.mxu0 %v3323
  %3698 = vmatprep.subr.mxu0 %v3320
  %3699 = vmatpush2.msra.mxu0 %v3319
  %3700 = vmatprep.subr.mxu0 %v3316
  %3701 = vmatpush2.msra.mxu0 %v3315
  %3702 = vmatprep.subr.mxu0 %v3312
  %3703 = vmatpush2.msra.mxu0 %v3311
  %3704 = vmatprep.mubr.f32.mxu0 %v2669
  %3705 = vmatmul.mubr.f32.gmra.mxu0 %v2668
  %v3706 = vpop.f32.mrf.mxu0
  %v3707 = vadd.f32 %v3618, %v3706
  %v3708 = vpop.f32.mrf.mxu0
  %v3709 = vadd.f32 %v3620, %v3708
  %3710 = vmatprep.mubr.f32.mxu0 %v2673
  %3711 = vmatmul.mubr.f32.gmra.mxu0 %v2672
  %v3712 = vpop.f32.mrf.mxu0
  %v3713 = vadd.f32 %v3624, %v3712
  %v3714 = vpop.f32.mrf.mxu0
  %v3715 = vadd.f32 %v3626, %v3714
  %3716 = vmatprep.mubr.f32.mxu0 %v2677
  %3717 = vmatmul.mubr.f32.gmra.mxu0 %v2676
  %v3718 = vpop.f32.mrf.mxu0
  %v3719 = vadd.f32 %v3630, %v3718
  %v3720 = vpop.f32.mrf.mxu0
  %v3721 = vadd.f32 %v3632, %v3720
  %3722 = vmatprep.mubr.f32.mxu0 %v2681
  %3723 = vmatmul.mubr.f32.gmra.mxu0 %v2680
  %v3724 = vpop.f32.mrf.mxu0
  %v3725 = vadd.f32 %v3636, %v3724
  %v3726 = vpop.f32.mrf.mxu0
  %v3727 = vadd.f32 %v3638, %v3726
  %3728 = vdwg.mxu0
  %3729 = vmatprep.subr.mxu0 %v2921
  %3730 = vmatpush1.msra.mxu0 %v2920
  %3731 = vmatprep.subr.mxu0 %v2917
  %3732 = vmatpush1.msra.mxu0 %v2916
  %3733 = vmatprep.subr.mxu0 %v2913
  %3734 = vmatpush1.msra.mxu0 %v2912
  %3735 = vmatprep.subr.mxu0 %v2909
  %3736 = vmatpush1.msra.mxu0 %v2908
  %3737 = vmatprep.subr.mxu0 %v2905
  %3738 = vmatpush1.msra.mxu0 %v2904
  %3739 = vmatprep.subr.mxu0 %v2901
  %3740 = vmatpush1.msra.mxu0 %v2900
  %3741 = vmatprep.subr.mxu0 %v2897
  %3742 = vmatpush1.msra.mxu0 %v2896
  %3743 = vmatprep.subr.mxu0 %v2893
  %3744 = vmatpush1.msra.mxu0 %v2892
  %3745 = vmatprep.subr.mxu0 %v2889
  %3746 = vmatpush1.msra.mxu0 %v2888
  %3747 = vmatprep.subr.mxu0 %v2885
  %3748 = vmatpush1.msra.mxu0 %v2884
  %3749 = vmatprep.subr.mxu0 %v2881
  %3750 = vmatpush1.msra.mxu0 %v2880
  %3751 = vmatprep.subr.mxu0 %v2877
  %3752 = vmatpush1.msra.mxu0 %v2876
  %3753 = vmatprep.subr.mxu0 %v2873
  %3754 = vmatpush1.msra.mxu0 %v2872
  %3755 = vmatprep.subr.mxu0 %v2869
  %3756 = vmatpush1.msra.mxu0 %v2868
  %3757 = vmatprep.subr.mxu0 %v2865
  %3758 = vmatpush1.msra.mxu0 %v2864
  %3759 = vmatprep.subr.mxu0 %v2861
  %3760 = vmatpush1.msra.mxu0 %v2860
  %3761 = vmatprep.subr.mxu0 %v2985
  %3762 = vmatpush2.msra.mxu0 %v2984
  %3763 = vmatprep.subr.mxu0 %v2981
  %3764 = vmatpush2.msra.mxu0 %v2980
  %3765 = vmatprep.subr.mxu0 %v2977
  %3766 = vmatpush2.msra.mxu0 %v2976
  %3767 = vmatprep.subr.mxu0 %v2973
  %3768 = vmatpush2.msra.mxu0 %v2972
  %3769 = vmatprep.subr.mxu0 %v2969
  %3770 = vmatpush2.msra.mxu0 %v2968
  %3771 = vmatprep.subr.mxu0 %v2965
  %3772 = vmatpush2.msra.mxu0 %v2964
  %3773 = vmatprep.subr.mxu0 %v2961
  %3774 = vmatpush2.msra.mxu0 %v2960
  %3775 = vmatprep.subr.mxu0 %v2957
  %3776 = vmatpush2.msra.mxu0 %v2956
  %3777 = vmatprep.subr.mxu0 %v2953
  %3778 = vmatpush2.msra.mxu0 %v2952
  %3779 = vmatprep.subr.mxu0 %v2949
  %3780 = vmatpush2.msra.mxu0 %v2948
  %3781 = vmatprep.subr.mxu0 %v2945
  %3782 = vmatpush2.msra.mxu0 %v2944
  %3783 = vmatprep.subr.mxu0 %v2941
  %3784 = vmatpush2.msra.mxu0 %v2940
  %3785 = vmatprep.subr.mxu0 %v2937
  %3786 = vmatpush2.msra.mxu0 %v2936
  %3787 = vmatprep.subr.mxu0 %v2933
  %3788 = vmatpush2.msra.mxu0 %v2932
  %3789 = vmatprep.subr.mxu0 %v2929
  %3790 = vmatpush2.msra.mxu0 %v2928
  %3791 = vmatprep.subr.mxu0 %v2925
  %3792 = vmatpush2.msra.mxu0 %v2924
  %3793 = vmatprep.mubr.f32.mxu0 %v2751
  %3794 = vmatmul.mubr.f32.gmra.mxu0 %v2749
  %v3795 = vpop.f32.mrf.mxu0
  %v3796 = vadd.f32 %v3529, %v3795
  %v3797 = vpop.f32.mrf.mxu0
  %v3798 = vadd.f32 %v3531, %v3797
  %3799 = vmatprep.mubr.f32.mxu0 %v2757
  %3800 = vmatmul.mubr.f32.gmra.mxu0 %v2755
  %v3801 = vpop.f32.mrf.mxu0
  %v3802 = vadd.f32 %v3535, %v3801
  %v3803 = vpop.f32.mrf.mxu0
  %v3804 = vadd.f32 %v3537, %v3803
  %3805 = vmatprep.mubr.f32.mxu0 %v2763
  %3806 = vmatmul.mubr.f32.gmra.mxu0 %v2761
  %v3807 = vpop.f32.mrf.mxu0
  %v3808 = vadd.f32 %v3541, %v3807
  %v3809 = vpop.f32.mrf.mxu0
  %v3810 = vadd.f32 %v3543, %v3809
  %3811 = vmatprep.mubr.f32.mxu0 %v2769
  %3812 = vmatmul.mubr.f32.gmra.mxu0 %v2767
  %v3813 = vpop.f32.mrf.mxu0
  %v3814 = vadd.f32 %v3547, %v3813
  %v3815 = vpop.f32.mrf.mxu0
  %v3816 = vadd.f32 %v3549, %v3815
  %3817 = vdwg.mxu0
  %3818 = vmatprep.subr.mxu0 %v3049
  %3819 = vmatpush1.msra.mxu0 %v3048
  %3820 = vmatprep.subr.mxu0 %v3045
  %3821 = vmatpush1.msra.mxu0 %v3044
  %3822 = vmatprep.subr.mxu0 %v3041
  %3823 = vmatpush1.msra.mxu0 %v3040
  %3824 = vmatprep.subr.mxu0 %v3037
  %3825 = vmatpush1.msra.mxu0 %v3036
  %3826 = vmatprep.subr.mxu0 %v3033
  %3827 = vmatpush1.msra.mxu0 %v3032
  %3828 = vmatprep.subr.mxu0 %v3029
  %3829 = vmatpush1.msra.mxu0 %v3028
  %3830 = vmatprep.subr.mxu0 %v3025
  %3831 = vmatpush1.msra.mxu0 %v3024
  %3832 = vmatprep.subr.mxu0 %v3021
  %3833 = vmatpush1.msra.mxu0 %v3020
  %3834 = vmatprep.subr.mxu0 %v3017
  %3835 = vmatpush1.msra.mxu0 %v3016
  %3836 = vmatprep.subr.mxu0 %v3013
  %3837 = vmatpush1.msra.mxu0 %v3012
  %3838 = vmatprep.subr.mxu0 %v3009
  %3839 = vmatpush1.msra.mxu0 %v3008
  %3840 = vmatprep.subr.mxu0 %v3005
  %3841 = vmatpush1.msra.mxu0 %v3004
  %3842 = vmatprep.subr.mxu0 %v3001
  %3843 = vmatpush1.msra.mxu0 %v3000
  %3844 = vmatprep.subr.mxu0 %v2997
  %3845 = vmatpush1.msra.mxu0 %v2996
  %3846 = vmatprep.subr.mxu0 %v2993
  %3847 = vmatpush1.msra.mxu0 %v2992
  %3848 = vmatprep.subr.mxu0 %v2989
  %3849 = vmatpush1.msra.mxu0 %v2988
  %3850 = vmatprep.subr.mxu0 %v3113
  %3851 = vmatpush2.msra.mxu0 %v3112
  %3852 = vmatprep.subr.mxu0 %v3109
  %3853 = vmatpush2.msra.mxu0 %v3108
  %3854 = vmatprep.subr.mxu0 %v3105
  %3855 = vmatpush2.msra.mxu0 %v3104
  %3856 = vmatprep.subr.mxu0 %v3101
  %3857 = vmatpush2.msra.mxu0 %v3100
  %3858 = vmatprep.subr.mxu0 %v3097
  %3859 = vmatpush2.msra.mxu0 %v3096
  %3860 = vmatprep.subr.mxu0 %v3093
  %3861 = vmatpush2.msra.mxu0 %v3092
  %3862 = vmatprep.subr.mxu0 %v3089
  %3863 = vmatpush2.msra.mxu0 %v3088
  %3864 = vmatprep.subr.mxu0 %v3085
  %3865 = vmatpush2.msra.mxu0 %v3084
  %3866 = vmatprep.subr.mxu0 %v3081
  %3867 = vmatpush2.msra.mxu0 %v3080
  %3868 = vmatprep.subr.mxu0 %v3077
  %3869 = vmatpush2.msra.mxu0 %v3076
  %3870 = vmatprep.subr.mxu0 %v3073
  %3871 = vmatpush2.msra.mxu0 %v3072
  %3872 = vmatprep.subr.mxu0 %v3069
  %3873 = vmatpush2.msra.mxu0 %v3068
  %3874 = vmatprep.subr.mxu0 %v3065
  %3875 = vmatpush2.msra.mxu0 %v3064
  %3876 = vmatprep.subr.mxu0 %v3061
  %3877 = vmatpush2.msra.mxu0 %v3060
  %3878 = vmatprep.subr.mxu0 %v3057
  %3879 = vmatpush2.msra.mxu0 %v3056
  %3880 = vmatprep.subr.mxu0 %v3053
  %3881 = vmatpush2.msra.mxu0 %v3052
  %3882 = vmatprep.mubr.f32.mxu0 %v2840
  %3883 = vmatmul.mubr.f32.gmra.mxu0 %v2838
  %v3884 = vpop.f32.mrf.mxu0
  %v3885 = vadd.f32 %v3796, %v3884
  %v3886 = vpop.f32.mrf.mxu0
  %v3887 = vadd.f32 %v3798, %v3886
  %3888 = vmatprep.mubr.f32.mxu0 %v2846
  %3889 = vmatmul.mubr.f32.gmra.mxu0 %v2844
  %v3890 = vpop.f32.mrf.mxu0
  %v3891 = vadd.f32 %v3802, %v3890
  %v3892 = vpop.f32.mrf.mxu0
  %v3893 = vadd.f32 %v3804, %v3892
  %3894 = vmatprep.mubr.f32.mxu0 %v2852
  %3895 = vmatmul.mubr.f32.gmra.mxu0 %v2850
  %v3896 = vpop.f32.mrf.mxu0
  %v3897 = vadd.f32 %v3808, %v3896
  %v3898 = vpop.f32.mrf.mxu0
  %v3899 = vadd.f32 %v3810, %v3898
  %3900 = vmatprep.mubr.f32.mxu0 %v2858
  %3901 = vmatmul.mubr.f32.gmra.mxu0 %v2856
  %v3902 = vpop.f32.mrf.mxu0
  %v3903 = vadd.f32 %v3814, %v3902
  %v3904 = vpop.f32.mrf.mxu0
  %v3905 = vadd.f32 %v3816, %v3904
  %3906 = vdwg.mxu0
  %3907 = vmatprep.subr.mxu0 %v2923
  %3908 = vmatpush1.msra.mxu0 %v2922
  %3909 = vmatprep.subr.mxu0 %v2919
  %3910 = vmatpush1.msra.mxu0 %v2918
  %3911 = vmatprep.subr.mxu0 %v2915
  %3912 = vmatpush1.msra.mxu0 %v2914
  %3913 = vmatprep.subr.mxu0 %v2911
  %3914 = vmatpush1.msra.mxu0 %v2910
  %3915 = vmatprep.subr.mxu0 %v2907
  %3916 = vmatpush1.msra.mxu0 %v2906
  %3917 = vmatprep.subr.mxu0 %v2903
  %3918 = vmatpush1.msra.mxu0 %v2902
  %3919 = vmatprep.subr.mxu0 %v2899
  %3920 = vmatpush1.msra.mxu0 %v2898
  %3921 = vmatprep.subr.mxu0 %v2895
  %3922 = vmatpush1.msra.mxu0 %v2894
  %3923 = vmatprep.subr.mxu0 %v2891
  %3924 = vmatpush1.msra.mxu0 %v2890
  %3925 = vmatprep.subr.mxu0 %v2887
  %3926 = vmatpush1.msra.mxu0 %v2886
  %3927 = vmatprep.subr.mxu0 %v2883
  %3928 = vmatpush1.msra.mxu0 %v2882
  %3929 = vmatprep.subr.mxu0 %v2879
  %3930 = vmatpush1.msra.mxu0 %v2878
  %3931 = vmatprep.subr.mxu0 %v2875
  %3932 = vmatpush1.msra.mxu0 %v2874
  %3933 = vmatprep.subr.mxu0 %v2871
  %3934 = vmatpush1.msra.mxu0 %v2870
  %3935 = vmatprep.subr.mxu0 %v2867
  %3936 = vmatpush1.msra.mxu0 %v2866
  %3937 = vmatprep.subr.mxu0 %v2863
  %3938 = vmatpush1.msra.mxu0 %v2862
  %3939 = vmatprep.subr.mxu0 %v2987
  %3940 = vmatpush2.msra.mxu0 %v2986
  %3941 = vmatprep.subr.mxu0 %v2983
  %3942 = vmatpush2.msra.mxu0 %v2982
  %3943 = vmatprep.subr.mxu0 %v2979
  %3944 = vmatpush2.msra.mxu0 %v2978
  %3945 = vmatprep.subr.mxu0 %v2975
  %3946 = vmatpush2.msra.mxu0 %v2974
  %3947 = vmatprep.subr.mxu0 %v2971
  %3948 = vmatpush2.msra.mxu0 %v2970
  %3949 = vmatprep.subr.mxu0 %v2967
  %3950 = vmatpush2.msra.mxu0 %v2966
  %3951 = vmatprep.subr.mxu0 %v2963
  %3952 = vmatpush2.msra.mxu0 %v2962
  %3953 = vmatprep.subr.mxu0 %v2959
  %3954 = vmatpush2.msra.mxu0 %v2958
  %3955 = vmatprep.subr.mxu0 %v2955
  %3956 = vmatpush2.msra.mxu0 %v2954
  %3957 = vmatprep.subr.mxu0 %v2951
  %3958 = vmatpush2.msra.mxu0 %v2950
  %3959 = vmatprep.subr.mxu0 %v2947
  %3960 = vmatpush2.msra.mxu0 %v2946
  %3961 = vmatprep.subr.mxu0 %v2943
  %3962 = vmatpush2.msra.mxu0 %v2942
  %3963 = vmatprep.subr.mxu0 %v2939
  %3964 = vmatpush2.msra.mxu0 %v2938
  %3965 = vmatprep.subr.mxu0 %v2935
  %3966 = vmatpush2.msra.mxu0 %v2934
  %3967 = vmatprep.subr.mxu0 %v2931
  %3968 = vmatpush2.msra.mxu0 %v2930
  %3969 = vmatprep.subr.mxu0 %v2927
  %3970 = vmatpush2.msra.mxu0 %v2926
  %3971 = vmatprep.mubr.f32.mxu0 %v2751
  %3972 = vmatmul.mubr.f32.gmra.mxu0 %v2749
  %v3973 = vpop.f32.mrf.mxu0
  %v3974 = vadd.f32 %v3707, %v3973
  %v3975 = vpop.f32.mrf.mxu0
  %v3976 = vadd.f32 %v3709, %v3975
  %3977 = vmatprep.mubr.f32.mxu0 %v2757
  %3978 = vmatmul.mubr.f32.gmra.mxu0 %v2755
  %v3979 = vpop.f32.mrf.mxu0
  %v3980 = vadd.f32 %v3713, %v3979
  %v3981 = vpop.f32.mrf.mxu0
  %v3982 = vadd.f32 %v3715, %v3981
  %3983 = vmatprep.mubr.f32.mxu0 %v2763
  %3984 = vmatmul.mubr.f32.gmra.mxu0 %v2761
  %v3985 = vpop.f32.mrf.mxu0
  %v3986 = vadd.f32 %v3719, %v3985
  %v3987 = vpop.f32.mrf.mxu0
  %v3988 = vadd.f32 %v3721, %v3987
  %3989 = vmatprep.mubr.f32.mxu0 %v2769
  %3990 = vmatmul.mubr.f32.gmra.mxu0 %v2767
  %v3991 = vpop.f32.mrf.mxu0
  %v3992 = vadd.f32 %v3725, %v3991
  %v3993 = vpop.f32.mrf.mxu0
  %v3994 = vadd.f32 %v3727, %v3993
  %3995 = vdwg.mxu0
  %3996 = vmatprep.subr.mxu0 %v3051
  %3997 = vmatpush1.msra.mxu0 %v3050
  %3998 = vmatprep.subr.mxu0 %v3047
  %3999 = vmatpush1.msra.mxu0 %v3046
  %4000 = vmatprep.subr.mxu0 %v3043
  %4001 = vmatpush1.msra.mxu0 %v3042
  %4002 = vmatprep.subr.mxu0 %v3039
  %4003 = vmatpush1.msra.mxu0 %v3038
  %4004 = vmatprep.subr.mxu0 %v3035
  %4005 = vmatpush1.msra.mxu0 %v3034
  %4006 = vmatprep.subr.mxu0 %v3031
  %4007 = vmatpush1.msra.mxu0 %v3030
  %4008 = vmatprep.subr.mxu0 %v3027
  %4009 = vmatpush1.msra.mxu0 %v3026
  %4010 = vmatprep.subr.mxu0 %v3023
  %4011 = vmatpush1.msra.mxu0 %v3022
  %4012 = vmatprep.subr.mxu0 %v3019
  %4013 = vmatpush1.msra.mxu0 %v3018
  %4014 = vmatprep.subr.mxu0 %v3015
  %4015 = vmatpush1.msra.mxu0 %v3014
  %4016 = vmatprep.subr.mxu0 %v3011
  %4017 = vmatpush1.msra.mxu0 %v3010
  %4018 = vmatprep.subr.mxu0 %v3007
  %4019 = vmatpush1.msra.mxu0 %v3006
  %4020 = vmatprep.subr.mxu0 %v3003
  %4021 = vmatpush1.msra.mxu0 %v3002
  %4022 = vmatprep.subr.mxu0 %v2999
  %4023 = vmatpush1.msra.mxu0 %v2998
  %4024 = vmatprep.subr.mxu0 %v2995
  %4025 = vmatpush1.msra.mxu0 %v2994
  %4026 = vmatprep.subr.mxu0 %v2991
  %4027 = vmatpush1.msra.mxu0 %v2990
  %4028 = vmatprep.subr.mxu0 %v3115
  %4029 = vmatpush2.msra.mxu0 %v3114
  %4030 = vmatprep.subr.mxu0 %v3111
  %4031 = vmatpush2.msra.mxu0 %v3110
  %4032 = vmatprep.subr.mxu0 %v3107
  %4033 = vmatpush2.msra.mxu0 %v3106
  %4034 = vmatprep.subr.mxu0 %v3103
  %4035 = vmatpush2.msra.mxu0 %v3102
  %4036 = vmatprep.subr.mxu0 %v3099
  %4037 = vmatpush2.msra.mxu0 %v3098
  %4038 = vmatprep.subr.mxu0 %v3095
  %4039 = vmatpush2.msra.mxu0 %v3094
  %4040 = vmatprep.subr.mxu0 %v3091
  %4041 = vmatpush2.msra.mxu0 %v3090
  %4042 = vmatprep.subr.mxu0 %v3087
  %4043 = vmatpush2.msra.mxu0 %v3086
  %4044 = vmatprep.subr.mxu0 %v3083
  %4045 = vmatpush2.msra.mxu0 %v3082
  %4046 = vmatprep.subr.mxu0 %v3079
  %4047 = vmatpush2.msra.mxu0 %v3078
  %4048 = vmatprep.subr.mxu0 %v3075
  %4049 = vmatpush2.msra.mxu0 %v3074
  %4050 = vmatprep.subr.mxu0 %v3071
  %4051 = vmatpush2.msra.mxu0 %v3070
  %4052 = vmatprep.subr.mxu0 %v3067
  %4053 = vmatpush2.msra.mxu0 %v3066
  %4054 = vmatprep.subr.mxu0 %v3063
  %4055 = vmatpush2.msra.mxu0 %v3062
  %4056 = vmatprep.subr.mxu0 %v3059
  %4057 = vmatpush2.msra.mxu0 %v3058
  %4058 = vmatprep.subr.mxu0 %v3055
  %4059 = vmatpush2.msra.mxu0 %v3054
  %4060 = vmatprep.mubr.f32.mxu0 %v2840
  %4061 = vmatmul.mubr.f32.gmra.mxu0 %v2838
  %v4062 = vpop.f32.mrf.mxu0
  %v4063 = vadd.f32 %v3974, %v4062
  %v4064 = vpop.f32.mrf.mxu0
  %v4065 = vadd.f32 %v3976, %v4064
  %4066 = vmatprep.mubr.f32.mxu0 %v2846
  %4067 = vmatmul.mubr.f32.gmra.mxu0 %v2844
  %v4068 = vpop.f32.mrf.mxu0
  %v4069 = vadd.f32 %v3980, %v4068
  %v4070 = vpop.f32.mrf.mxu0
  %v4071 = vadd.f32 %v3982, %v4070
  %4072 = vmatprep.mubr.f32.mxu0 %v2852
  %4073 = vmatmul.mubr.f32.gmra.mxu0 %v2850
  %v4074 = vpop.f32.mrf.mxu0
  %v4075 = vadd.f32 %v3986, %v4074
  %v4076 = vpop.f32.mrf.mxu0
  %v4077 = vadd.f32 %v3988, %v4076
  %4078 = vmatprep.mubr.f32.mxu0 %v2858
  %4079 = vmatmul.mubr.f32.gmra.mxu0 %v2856
  %v4080 = vpop.f32.mrf.mxu0
  %v4081 = vadd.f32 %v3992, %v4080
  %v4082 = vpop.f32.mrf.mxu0
  %v4083 = vadd.f32 %v3994, %v4082
  %4084 = vdwg.mxu0
  %v4085 = vadd.f32 %v3885, %v29
  %v4086 = vadd.f32 %v3887, %v30
  %v4087 = vadd.f32 %v4063, %v31
  %v4088 = vadd.f32 %v4065, %v32
  %v4089 = vadd.f32 %v3891, %v33
  %v4090 = vadd.f32 %v3893, %v34
  %v4091 = vadd.f32 %v4069, %v35
  %v4092 = vadd.f32 %v4071, %v36
  %v4093 = vadd.f32 %v3897, %v37
  %v4094 = vadd.f32 %v3899, %v38
  %v4095 = vadd.f32 %v4075, %v39
  %v4096 = vadd.f32 %v4077, %v40
  %v4097 = vadd.f32 %v3903, %v41
  %v4098 = vadd.f32 %v3905, %v42
  %v4099 = vadd.f32 %v4081, %v43
  %v4100 = vadd.f32 %v4083, %v44
  %v4101 = vmax.f32 %v4085, 0.0
  %v4102 = vmax.f32 %v4086, 0.0
  %v4103 = vmax.f32 %v4087, 0.0
  %v4104 = vmax.f32 %v4088, 0.0
  %v4105 = vmax.f32 %v4089, 0.0
  %v4106 = vmax.f32 %v4090, 0.0
  %v4107 = vmax.f32 %v4091, 0.0
  %v4108 = vmax.f32 %v4092, 0.0
  %v4109 = vmax.f32 %v4093, 0.0
  %v4110 = vmax.f32 %v4094, 0.0
  %v4111 = vmax.f32 %v4095, 0.0
  %v4112 = vmax.f32 %v4096, 0.0
  %v4113 = vmax.f32 %v4097, 0.0
  %v4114 = vmax.f32 %v4098, 0.0
  %v4115 = vmax.f32 %v4099, 0.0
  %v4116 = vmax.f32 %v4100, 0.0
  %4117 = vst [vmem:[%s8] sm:$0xff] %v4101
  %4118 = vst [vmem:[%s8 + $0x8] sm:$0xff] %v4102
  %4119 = vst [vmem:[%s8 + $0x10] sm:$0xff] %v4103
  %4120 = vst [vmem:[%s8 + $0x18] sm:$0xff] %v4104
  %4121 = vst [vmem:[%s8 + $0x20] sm:$0xff] %v4105
  %4122 = vst [vmem:[%s8 + $0x28] sm:$0xff] %v4106
  %4123 = vst [vmem:[%s8 + $0x30] sm:$0xff] %v4107
  %4124 = vst [vmem:[%s8 + $0x38] sm:$0xff] %v4108
  %4125 = vst [vmem:[%s8 + $0x40] sm:$0xff] %v4109
  %4126 = vst [vmem:[%s8 + $0x48] sm:$0xff] %v4110
  %4127 = vst [vmem:[%s8 + $0x50] sm:$0xff] %v4111
  %4128 = vst [vmem:[%s8 + $0x58] sm:$0xff] %v4112
  %4129 = vst [vmem:[%s8 + $0x60] sm:$0xff] %v4113
  %4130 = vst [vmem:[%s8 + $0x68] sm:$0xff] %v4114
  %4131 = vst [vmem:[%s8 + $0x70] sm:$0xff] %v4115
  %4132 = vst [vmem:[%s8 + $0x78] sm:$0xff] %v4116
  // Predicated region
  $region34: #{pixelcnn_resblock.1} parent=0 // pred_check
    _
  $region35: #{pixelcnn_resblock.1} parent=0 // pred_check_branch
    %4134 = sbr.rel (0) target = $region37
  $region36: #{pixelcnn_resblock.1} parent=0 // pred_region
    _
  $region37: #{pixelcnn_resblock.1} parent=0 // pred_fallthru
    _
  // Predicated region
  $region38: #{pixelcnn_resblock.1} parent=0 // pred_check
    _
  $region39: #{pixelcnn_resblock.1} parent=0 // pred_check_branch
    %4136 = sbr.rel (0) target = $region41
  $region40: #{pixelcnn_resblock.1} parent=0 // pred_region
    _
  $region41: #{pixelcnn_resblock.1} parent=0 // pred_fallthru
    _

</llo_original>
